<compile_context>
chip_gen: v5e
topology: v5e:2x2
jax: 0.10.0
libtpu: 0.0.40
codegen_flags: <defaults>
</compile_context>

<pallas_src>
import jax
import jax.numpy as jnp
from jax.experimental import pallas as pl
from jax.experimental.pallas import tpu as pltpu


BN_EPS = 1e-5
K_PAD = 16            # padded first-layer feature dim (14 -> 16, bf16 sublane pack)


# ---------------------------------------------------------------------------
# Fused kernel: 3 x (GCNConv + BatchNorm + ReLU) + mean-pool + fc1 + ReLU
# One grid step == one independent graph-batch (own BN statistics).
# ---------------------------------------------------------------------------
def _gcn_batch_kernel(a_ref, x_ref, p_ref,
                      w1_ref, gb1_ref,
                      w2_ref, gb2_ref,
                      w3_ref, gb3_ref,
                      wfc_ref, bfc_ref,
                      o_ref):
    a = a_ref[...]                                     # (N, N) f32, per-batch

    def gcn_bn_relu(h_in_bf16, w_ref, gb_ref):
        # Feature transform on the MXU: bf16 x bf16 -> f32 accumulate.
        xw = jnp.dot(h_in_bf16, w_ref[...],
                     preferred_element_type=jnp.float32)
        # Aggregation A_hat @ (X W) in f32 (K is small; restores f32 parity).
        # GCNConv bias omitted: cancelled exactly by BN mean subtraction.
        h = jnp.dot(a, xw, preferred_element_type=jnp.float32)

        # Fused training-mode BatchNorm (biased variance) + ReLU, all f32.
        mean = jnp.mean(h, axis=0, keepdims=True)
        var = jnp.maximum(jnp.mean(h * h, axis=0, keepdims=True) - mean * mean,
                          0.0)
        gamma = gb_ref[0:1, :]
        beta = gb_ref[1:2, :]
        scale = gamma * jax.lax.rsqrt(var + BN_EPS)
        shift = beta - mean * scale
        return jnp.maximum(h * scale + shift, 0.0)     # (N, F) f32

    h1 = gcn_bn_relu(x_ref[...], w1_ref, gb1_ref)
    h2 = gcn_bn_relu(h1.astype(jnp.bfloat16), w2_ref, gb2_ref)
    h3 = gcn_bn_relu(h2.astype(jnp.bfloat16), w3_ref, gb3_ref)

    # global_mean_pool:  pooled = P @ H3  (f32; P rows are 1/count averaging rows)
    pooled = jnp.dot(p_ref[...], h3, preferred_element_type=jnp.float32)
    # fc1 + ReLU (dropout p=0 -> identity)
    y = jnp.dot(pooled.astype(jnp.bfloat16), wfc_ref[...],
                preferred_element_type=jnp.float32) + bfc_ref[...]
    o_ref[...] = jnp.maximum(y, 0.0)


def gcn_forward(params, x, a_hat, pool_mat):
    """Fused forward over a grid of independent graph-batches.

    x:        (B, N, 14)  node features per batch
    a_hat:    (B, N, N)   normalized dense adjacency (block-diag over graphs)
    pool_mat: (B, G, N)   per-batch mean-pool matrix
    returns:  (B, G, 640)
    """
    b, n_per, fin = x.shape
    g_per = pool_mat.shape[1]
    fout = params["w_fc"].shape[1]

    # Host-side prep: pad K=14 -> 16 with zeros (exactly preserves X @ W1),
    # cast heavy matmul operands to bf16, keep A_hat / pool / BN params f32.
    x_p = (jnp.zeros((b, n_per, K_PAD), jnp.float32)
           .at[:, :, :fin].set(x).astype(jnp.bfloat16))
    w1_p = (jnp.zeros((K_PAD, params["w1"].shape[1]), jnp.float32)
            .at[:fin, :].set(params["w1"]).astype(jnp.bfloat16))

    gb = lambda l: jnp.concatenate(
        [params[f"gamma{l}"], params[f"beta{l}"]], axis=0)   # (2, F) f32

    operands = (
        a_hat.astype(jnp.float32),            # per-batch
        x_p,                                  # per-batch
        pool_mat.astype(jnp.float32),         # per-batch
        w1_p, gb(1),
        params["w2"].astype(jnp.bfloat16), gb(2),
        params["w3"].astype(jnp.bfloat16), gb(3),
        params["w_fc"].astype(jnp.bfloat16), params["b_fc"],
    )

    # Per-batch inputs: squeeze leading batch dim, indexed by grid step.
    def batch_spec(shape):
        nd = len(shape)
        return pl.BlockSpec((None,) + tuple(shape[1:]),
                            lambda i, _nd=nd: (i,) + (0,) * (_nd - 1))

    # Weights / params: constant block index -> stay resident across grid steps.
    def const_spec(shape):
        nd = len(shape)
        return pl.BlockSpec(tuple(shape), lambda i, _nd=nd: (0,) * _nd)

    in_specs = [
        batch_spec(operands[0].shape),
        batch_spec(operands[1].shape),
        batch_spec(operands[2].shape),
    ] + [const_spec(op.shape) for op in operands[3:]]

    return pl.pallas_call(
        _gcn_batch_kernel,
        out_shape=jax.ShapeDtypeStruct((b, g_per, fout), jnp.float32),
        grid=(b,),
        in_specs=in_specs,
        out_specs=pl.BlockSpec((None, g_per, fout), lambda i: (i, 0, 0)),
        compiler_params=pltpu.CompilerParams(
            dimension_semantics=("parallel",)),   # v7x: shard batches over 2 TCs
    )(*operands)


# ---------------------------------------------------------------------------
# Glue (plain JAX): dense normalized adjacency, pooling matrix, parameters
# ---------------------------------------------------------------------------
def build_normalized_adj(edge_index, num_nodes):
    src, dst = edge_index
    a = jnp.zeros((num_nodes, num_nodes), jnp.float32)
    a = a.at[dst, src].add(1.0)                       # messages flow src -> dst
    a = a + jnp.eye(num_nodes, dtype=jnp.float32)     # self loops
    deg = a.sum(axis=1)
    dinv = jnp.where(deg > 0, 1.0 / jnp.sqrt(deg), 0.0)
    return dinv[:, None] * a * dinv[None, :]


def build_pool_matrix(batch, num_graphs):
    onehot = (batch[None, :] == jnp.arange(num_graphs)[:, None]).astype(jnp.float32)
    counts = jnp.maximum(onehot.sum(axis=1, keepdims=True), 1.0)
    return onehot / counts


def init_params(key):
    NN = 2
    dims = [(14, 128 * NN), (128 * NN, 256 * NN), (256 * NN, 256 * NN)]
    params = {}
    for li, (fin, fout) in enumerate(dims, start=1):
        key, k1 = jax.random.split(key)
        params[f"w{li}"] = (jax.random.normal(k1, (fin, fout), jnp.float32)
                            * (1.0 / jnp.sqrt(fin)))
        # GCNConv bias omitted: exactly cancelled by training-mode BatchNorm.
        params[f"gamma{li}"] = jnp.ones((1, fout), jnp.float32)
        params[f"beta{li}"] = jnp.zeros((1, fout), jnp.float32)
    key, kf = jax.random.split(key)
    params["w_fc"] = (jax.random.normal(kf, (256 * NN, 640), jnp.float32)
                      * (1.0 / jnp.sqrt(256 * NN)))
    params["b_fc"] = jnp.zeros((1, 640), jnp.float32)
    return params


if __name__ == "__main__":
    key = jax.random.PRNGKey(0)

    NUM_BATCHES = 2          # grid steps; one independent forward() each
    GRAPHS_PER_BATCH = 16
    NODES_PER_GRAPH = 8
    N_PER = GRAPHS_PER_BATCH * NODES_PER_GRAPH      # 128 node rows per step
    IN_FEATS = 14                                   # fixed by GCNConv(14, ...)

    key, kx = jax.random.split(key)
    x = jax.random.normal(kx, (NUM_BATCHES, N_PER, IN_FEATS), jnp.float32)

    # Deterministic ring graph inside each 8-node graph (symmetric edges),
    # block-diagonal across the 16 graphs of a batch.
    src_list, dst_list = [], []
    for gidx in range(GRAPHS_PER_BATCH):
        base = gidx * NODES_PER_GRAPH
        for i in range(NODES_PER_GRAPH):
            u, v = base + i, base + (i + 1) % NODES_PER_GRAPH
            src_list += [u, v]
            dst_list += [v, u]
    edge_index = jnp.array([src_list, dst_list], dtype=jnp.int32)
    batch_vec = jnp.repeat(jnp.arange(GRAPHS_PER_BATCH, dtype=jnp.int32),
                           NODES_PER_GRAPH)

    a_one = build_normalized_adj(edge_index, N_PER)
    p_one = build_pool_matrix(batch_vec, GRAPHS_PER_BATCH)
    a_hat = jnp.tile(a_one[None, :, :], (NUM_BATCHES, 1, 1))
    pool_mat = jnp.tile(p_one[None, :, :], (NUM_BATCHES, 1, 1))

    params = init_params(key)

    out = gcn_forward(params, x, a_hat, pool_mat)
    out = jax.block_until_ready(out)
    assert out.shape == (NUM_BATCHES, GRAPHS_PER_BATCH, 640), out.shape
    assert bool(jnp.all(jnp.isfinite(out)))
    print("KERNEL_OK")
</pallas_src>

<mosaic_0001>
module attributes {stable_mosaic.version = 11 : i64} {
  func.func @_gcn_batch_kernel(%arg0: i32, %arg1: memref<1x128x128xf32, #tpu.memory_space<vmem>>, %arg2: memref<1x128x16xbf16, #tpu.memory_space<vmem>>, %arg3: memref<1x16x128xf32, #tpu.memory_space<vmem>>, %arg4: memref<16x256xbf16, #tpu.memory_space<vmem>>, %arg5: memref<2x256xf32, #tpu.memory_space<vmem>>, %arg6: memref<256x512xbf16, #tpu.memory_space<vmem>>, %arg7: memref<2x512xf32, #tpu.memory_space<vmem>>, %arg8: memref<512x512xbf16, #tpu.memory_space<vmem>>, %arg9: memref<2x512xf32, #tpu.memory_space<vmem>>, %arg10: memref<512x640xbf16, #tpu.memory_space<vmem>>, %arg11: memref<1x640xf32, #tpu.memory_space<vmem>>, %arg12: memref<1x16x640xf32, #tpu.memory_space<vmem>>) attributes {dimension_semantics = [#tpu.dimension_semantics<parallel>], iteration_bounds = array<i64: 2>, scalar_prefetch = 0 : i64, scratch_operands = 0 : i64, tpu.core_type = #tpu.core_type<tc>, window_params = [{transform_indices = @transform_0, window_bounds = array<i64: 1, 128, 128>}, {transform_indices = @transform_1, window_bounds = array<i64: 1, 128, 16>}, {transform_indices = @transform_2, window_bounds = array<i64: 1, 16, 128>}, {pipeline_mode = #tpu.pipeline_mode<synchronous>, transform_indices = @transform_3, window_bounds = array<i64: 16, 256>}, {pipeline_mode = #tpu.pipeline_mode<synchronous>, transform_indices = @transform_4, window_bounds = array<i64: 2, 256>}, {pipeline_mode = #tpu.pipeline_mode<synchronous>, transform_indices = @transform_5, window_bounds = array<i64: 256, 512>}, {pipeline_mode = #tpu.pipeline_mode<synchronous>, transform_indices = @transform_6, window_bounds = array<i64: 2, 512>}, {pipeline_mode = #tpu.pipeline_mode<synchronous>, transform_indices = @transform_7, window_bounds = array<i64: 512, 512>}, {pipeline_mode = #tpu.pipeline_mode<synchronous>, transform_indices = @transform_8, window_bounds = array<i64: 2, 512>}, {pipeline_mode = #tpu.pipeline_mode<synchronous>, transform_indices = @transform_9, window_bounds = array<i64: 512, 640>}, {pipeline_mode = #tpu.pipeline_mode<synchronous>, transform_indices = @transform_10, window_bounds = array<i64: 1, 640>}, {transform_indices = @transform_11, window_bounds = array<i64: 1, 16, 640>}]} {
    %c0 = arith.constant 0 : index
    %c0_0 = arith.constant 0 : index
    %c0_1 = arith.constant 0 : index
    %0 = vector.load %arg1[%c0, %c0_0, %c0_1] : memref<1x128x128xf32, #tpu.memory_space<vmem>>, vector<1x128x128xf32>
    %1 = vector.shape_cast %0 : vector<1x128x128xf32> to vector<128x128xf32>
    %c0_2 = arith.constant 0 : index
    %c0_3 = arith.constant 0 : index
    %c0_4 = arith.constant 0 : index
    %2 = vector.load %arg2[%c0_2, %c0_3, %c0_4] : memref<1x128x16xbf16, #tpu.memory_space<vmem>>, vector<1x128x16xbf16>
    %3 = vector.shape_cast %2 : vector<1x128x16xbf16> to vector<128x16xbf16>
    %c0_5 = arith.constant 0 : index
    %c0_6 = arith.constant 0 : index
    %4 = vector.load %arg4[%c0_5, %c0_6] : memref<16x256xbf16, #tpu.memory_space<vmem>>, vector<16x256xbf16>
    %cst = arith.constant dense<0.000000e+00> : vector<128x256xf32>
    %5 = tpu.matmul %3, %4, %cst {dimension_numbers = #tpu.dot_dimension_numbers<[1], [0], [0], [1], [0, 0, 1, 1], [], []>} : vector<128x16xbf16>, vector<16x256xbf16>, vector<128x256xf32> -> vector<128x256xf32>
    %cst_7 = arith.constant dense<0.000000e+00> : vector<128x256xf32>
    %6 = tpu.matmul %1, %5, %cst_7 {dimension_numbers = #tpu.dot_dimension_numbers<[1], [0], [0], [1], [0, 0, 1, 1], [], []>} : vector<128x128xf32>, vector<128x256xf32>, vector<128x256xf32> -> vector<128x256xf32>
    %cst_8 = arith.constant dense<0.000000e+00> : vector<256xf32>
    %7 = vector.multi_reduction <add>, %6, %cst_8 [0] : vector<128x256xf32> to vector<256xf32>
    %8 = vector.shape_cast %7 : vector<256xf32> to vector<1x256xf32>
    %cst_9 = arith.constant 1.280000e+02 : f32
    %9 = vector.broadcast %cst_9 : f32 to vector<1x256xf32>
    %10 = arith.divf %8, %9 : vector<1x256xf32>
    %11 = arith.mulf %6, %6 : vector<128x256xf32>
    %cst_10 = arith.constant dense<0.000000e+00> : vector<256xf32>
    %12 = vector.multi_reduction <add>, %11, %cst_10 [0] : vector<128x256xf32> to vector<256xf32>
    %13 = vector.shape_cast %12 : vector<256xf32> to vector<1x256xf32>
    %cst_11 = arith.constant 1.280000e+02 : f32
    %14 = vector.broadcast %cst_11 : f32 to vector<1x256xf32>
    %15 = arith.divf %13, %14 : vector<1x256xf32>
    %16 = arith.mulf %10, %10 : vector<1x256xf32>
    %17 = arith.subf %15, %16 : vector<1x256xf32>
    %cst_12 = arith.constant 0.000000e+00 : f32
    %18 = vector.broadcast %cst_12 : f32 to vector<1x256xf32>
    %19 = arith.maximumf %17, %18 : vector<1x256xf32>
    %c0_13 = arith.constant 0 : index
    %c0_14 = arith.constant 0 : index
    %20 = vector.load %arg5[%c0_13, %c0_14] : memref<2x256xf32, #tpu.memory_space<vmem>>, vector<1x256xf32>
    %c1 = arith.constant 1 : index
    %c0_15 = arith.constant 0 : index
    %21 = vector.load %arg5[%c1, %c0_15] : memref<2x256xf32, #tpu.memory_space<vmem>>, vector<1x256xf32>
    %cst_16 = arith.constant 9.99999974E-6 : f32
    %22 = vector.broadcast %cst_16 : f32 to vector<1x256xf32>
    %23 = arith.addf %19, %22 : vector<1x256xf32>
    %24 = math.rsqrt %23 : vector<1x256xf32>
    %25 = arith.mulf %20, %24 : vector<1x256xf32>
    %26 = arith.mulf %10, %25 : vector<1x256xf32>
    %27 = arith.subf %21, %26 : vector<1x256xf32>
    %28 = vector.broadcast %25 : vector<1x256xf32> to vector<128x256xf32>
    %29 = arith.mulf %6, %28 : vector<128x256xf32>
    %30 = vector.broadcast %27 : vector<1x256xf32> to vector<128x256xf32>
    %31 = arith.addf %29, %30 : vector<128x256xf32>
    %cst_17 = arith.constant 0.000000e+00 : f32
    %32 = vector.broadcast %cst_17 : f32 to vector<128x256xf32>
    %33 = arith.maximumf %31, %32 : vector<128x256xf32>
    %34 = arith.truncf %33 : vector<128x256xf32> to vector<128x256xbf16>
    %c0_18 = arith.constant 0 : index
    %c0_19 = arith.constant 0 : index
    %35 = vector.load %arg6[%c0_18, %c0_19] : memref<256x512xbf16, #tpu.memory_space<vmem>>, vector<256x512xbf16>
    %cst_20 = arith.constant dense<0.000000e+00> : vector<128x512xf32>
    %36 = tpu.matmul %34, %35, %cst_20 {dimension_numbers = #tpu.dot_dimension_numbers<[1], [0], [0], [1], [0, 0, 1, 1], [], []>} : vector<128x256xbf16>, vector<256x512xbf16>, vector<128x512xf32> -> vector<128x512xf32>
    %cst_21 = arith.constant dense<0.000000e+00> : vector<128x512xf32>
    %37 = tpu.matmul %1, %36, %cst_21 {dimension_numbers = #tpu.dot_dimension_numbers<[1], [0], [0], [1], [0, 0, 1, 1], [], []>} : vector<128x128xf32>, vector<128x512xf32>, vector<128x512xf32> -> vector<128x512xf32>
    %cst_22 = arith.constant dense<0.000000e+00> : vector<512xf32>
    %38 = vector.multi_reduction <add>, %37, %cst_22 [0] : vector<128x512xf32> to vector<512xf32>
    %39 = vector.shape_cast %38 : vector<512xf32> to vector<1x512xf32>
    %cst_23 = arith.constant 1.280000e+02 : f32
    %40 = vector.broadcast %cst_23 : f32 to vector<1x512xf32>
    %41 = arith.divf %39, %40 : vector<1x512xf32>
    %42 = arith.mulf %37, %37 : vector<128x512xf32>
    %cst_24 = arith.constant dense<0.000000e+00> : vector<512xf32>
    %43 = vector.multi_reduction <add>, %42, %cst_24 [0] : vector<128x512xf32> to vector<512xf32>
    %44 = vector.shape_cast %43 : vector<512xf32> to vector<1x512xf32>
    %cst_25 = arith.constant 1.280000e+02 : f32
    %45 = vector.broadcast %cst_25 : f32 to vector<1x512xf32>
    %46 = arith.divf %44, %45 : vector<1x512xf32>
    %47 = arith.mulf %41, %41 : vector<1x512xf32>
    %48 = arith.subf %46, %47 : vector<1x512xf32>
    %cst_26 = arith.constant 0.000000e+00 : f32
    %49 = vector.broadcast %cst_26 : f32 to vector<1x512xf32>
    %50 = arith.maximumf %48, %49 : vector<1x512xf32>
    %c0_27 = arith.constant 0 : index
    %c0_28 = arith.constant 0 : index
    %51 = vector.load %arg7[%c0_27, %c0_28] : memref<2x512xf32, #tpu.memory_space<vmem>>, vector<1x512xf32>
    %c1_29 = arith.constant 1 : index
    %c0_30 = arith.constant 0 : index
    %52 = vector.load %arg7[%c1_29, %c0_30] : memref<2x512xf32, #tpu.memory_space<vmem>>, vector<1x512xf32>
    %cst_31 = arith.constant 9.99999974E-6 : f32
    %53 = vector.broadcast %cst_31 : f32 to vector<1x512xf32>
    %54 = arith.addf %50, %53 : vector<1x512xf32>
    %55 = math.rsqrt %54 : vector<1x512xf32>
    %56 = arith.mulf %51, %55 : vector<1x512xf32>
    %57 = arith.mulf %41, %56 : vector<1x512xf32>
    %58 = arith.subf %52, %57 : vector<1x512xf32>
    %59 = vector.broadcast %56 : vector<1x512xf32> to vector<128x512xf32>
    %60 = arith.mulf %37, %59 : vector<128x512xf32>
    %61 = vector.broadcast %58 : vector<1x512xf32> to vector<128x512xf32>
    %62 = arith.addf %60, %61 : vector<128x512xf32>
    %cst_32 = arith.constant 0.000000e+00 : f32
    %63 = vector.broadcast %cst_32 : f32 to vector<128x512xf32>
    %64 = arith.maximumf %62, %63 : vector<128x512xf32>
    %65 = arith.truncf %64 : vector<128x512xf32> to vector<128x512xbf16>
    %c0_33 = arith.constant 0 : index
    %c0_34 = arith.constant 0 : index
    %66 = vector.load %arg8[%c0_33, %c0_34] : memref<512x512xbf16, #tpu.memory_space<vmem>>, vector<512x512xbf16>
    %cst_35 = arith.constant dense<0.000000e+00> : vector<128x512xf32>
    %67 = tpu.matmul %65, %66, %cst_35 {dimension_numbers = #tpu.dot_dimension_numbers<[1], [0], [0], [1], [0, 0, 1, 1], [], []>} : vector<128x512xbf16>, vector<512x512xbf16>, vector<128x512xf32> -> vector<128x512xf32>
    %cst_36 = arith.constant dense<0.000000e+00> : vector<128x512xf32>
    %68 = tpu.matmul %1, %67, %cst_36 {dimension_numbers = #tpu.dot_dimension_numbers<[1], [0], [0], [1], [0, 0, 1, 1], [], []>} : vector<128x128xf32>, vector<128x512xf32>, vector<128x512xf32> -> vector<128x512xf32>
    %cst_37 = arith.constant dense<0.000000e+00> : vector<512xf32>
    %69 = vector.multi_reduction <add>, %68, %cst_37 [0] : vector<128x512xf32> to vector<512xf32>
    %70 = vector.shape_cast %69 : vector<512xf32> to vector<1x512xf32>
    %cst_38 = arith.constant 1.280000e+02 : f32
    %71 = vector.broadcast %cst_38 : f32 to vector<1x512xf32>
    %72 = arith.divf %70, %71 : vector<1x512xf32>
    %73 = arith.mulf %68, %68 : vector<128x512xf32>
    %cst_39 = arith.constant dense<0.000000e+00> : vector<512xf32>
    %74 = vector.multi_reduction <add>, %73, %cst_39 [0] : vector<128x512xf32> to vector<512xf32>
    %75 = vector.shape_cast %74 : vector<512xf32> to vector<1x512xf32>
    %cst_40 = arith.constant 1.280000e+02 : f32
    %76 = vector.broadcast %cst_40 : f32 to vector<1x512xf32>
    %77 = arith.divf %75, %76 : vector<1x512xf32>
    %78 = arith.mulf %72, %72 : vector<1x512xf32>
    %79 = arith.subf %77, %78 : vector<1x512xf32>
    %cst_41 = arith.constant 0.000000e+00 : f32
    %80 = vector.broadcast %cst_41 : f32 to vector<1x512xf32>
    %81 = arith.maximumf %79, %80 : vector<1x512xf32>
    %c0_42 = arith.constant 0 : index
    %c0_43 = arith.constant 0 : index
    %82 = vector.load %arg9[%c0_42, %c0_43] : memref<2x512xf32, #tpu.memory_space<vmem>>, vector<1x512xf32>
    %c1_44 = arith.constant 1 : index
    %c0_45 = arith.constant 0 : index
    %83 = vector.load %arg9[%c1_44, %c0_45] : memref<2x512xf32, #tpu.memory_space<vmem>>, vector<1x512xf32>
    %cst_46 = arith.constant 9.99999974E-6 : f32
    %84 = vector.broadcast %cst_46 : f32 to vector<1x512xf32>
    %85 = arith.addf %81, %84 : vector<1x512xf32>
    %86 = math.rsqrt %85 : vector<1x512xf32>
    %87 = arith.mulf %82, %86 : vector<1x512xf32>
    %88 = arith.mulf %72, %87 : vector<1x512xf32>
    %89 = arith.subf %83, %88 : vector<1x512xf32>
    %90 = vector.broadcast %87 : vector<1x512xf32> to vector<128x512xf32>
    %91 = arith.mulf %68, %90 : vector<128x512xf32>
    %92 = vector.broadcast %89 : vector<1x512xf32> to vector<128x512xf32>
    %93 = arith.addf %91, %92 : vector<128x512xf32>
    %cst_47 = arith.constant 0.000000e+00 : f32
    %94 = vector.broadcast %cst_47 : f32 to vector<128x512xf32>
    %95 = arith.maximumf %93, %94 : vector<128x512xf32>
    %c0_48 = arith.constant 0 : index
    %c0_49 = arith.constant 0 : index
    %c0_50 = arith.constant 0 : index
    %96 = vector.load %arg3[%c0_48, %c0_49, %c0_50] : memref<1x16x128xf32, #tpu.memory_space<vmem>>, vector<1x16x128xf32>
    %97 = vector.shape_cast %96 : vector<1x16x128xf32> to vector<16x128xf32>
    %cst_51 = arith.constant dense<0.000000e+00> : vector<16x512xf32>
    %98 = tpu.matmul %97, %95, %cst_51 {dimension_numbers = #tpu.dot_dimension_numbers<[1], [0], [0], [1], [0, 0, 1, 1], [], []>} : vector<16x128xf32>, vector<128x512xf32>, vector<16x512xf32> -> vector<16x512xf32>
    %99 = arith.truncf %98 : vector<16x512xf32> to vector<16x512xbf16>
    %c0_52 = arith.constant 0 : index
    %c0_53 = arith.constant 0 : index
    %100 = vector.load %arg10[%c0_52, %c0_53] : memref<512x640xbf16, #tpu.memory_space<vmem>>, vector<512x640xbf16>
    %cst_54 = arith.constant dense<0.000000e+00> : vector<16x640xf32>
    %101 = tpu.matmul %99, %100, %cst_54 {dimension_numbers = #tpu.dot_dimension_numbers<[1], [0], [0], [1], [0, 0, 1, 1], [], []>} : vector<16x512xbf16>, vector<512x640xbf16>, vector<16x640xf32> -> vector<16x640xf32>
    %c0_55 = arith.constant 0 : index
    %c0_56 = arith.constant 0 : index
    %102 = vector.load %arg11[%c0_55, %c0_56] : memref<1x640xf32, #tpu.memory_space<vmem>>, vector<1x640xf32>
    %103 = vector.broadcast %102 : vector<1x640xf32> to vector<16x640xf32>
    %104 = arith.addf %101, %103 : vector<16x640xf32>
    %cst_57 = arith.constant 0.000000e+00 : f32
    %105 = vector.broadcast %cst_57 : f32 to vector<16x640xf32>
    %106 = arith.maximumf %104, %105 : vector<16x640xf32>
    %c0_58 = arith.constant 0 : index
    %c0_59 = arith.constant 0 : index
    %c0_60 = arith.constant 0 : index
    %107 = vector.load %arg12[%c0_58, %c0_59, %c0_60] : memref<1x16x640xf32, #tpu.memory_space<vmem>>, vector<1x16x640xf32>
    %108 = vector.shape_cast %107 : vector<1x16x640xf32> to vector<16x640xf32>
    %109 = vector.shape_cast %106 : vector<16x640xf32> to vector<1x16x640xf32>
    tpu.vector_store %arg12[%c0_58, %c0_59, %c0_60], %109 {strides = array<i32>} : memref<1x16x640xf32, #tpu.memory_space<vmem>>, vector<1x16x640xf32>,
    return
  }
  func.func @transform_0(%arg0: i32) -> (i32, i32, i32) {
    %c0_i32 = arith.constant 0 : i32
    %c0_i32_0 = arith.constant 0 : i32
    %c0_i32_1 = arith.constant 0 : i32
    return %arg0, %c0_i32, %c0_i32_0 : i32, i32, i32
  }
  func.func @transform_1(%arg0: i32) -> (i32, i32, i32) {
    %c0_i32 = arith.constant 0 : i32
    %c0_i32_0 = arith.constant 0 : i32
    %c0_i32_1 = arith.constant 0 : i32
    return %arg0, %c0_i32, %c0_i32_0 : i32, i32, i32
  }
  func.func @transform_2(%arg0: i32) -> (i32, i32, i32) {
    %c0_i32 = arith.constant 0 : i32
    %c0_i32_0 = arith.constant 0 : i32
    %c0_i32_1 = arith.constant 0 : i32
    return %arg0, %c0_i32, %c0_i32_0 : i32, i32, i32
  }
  func.func @transform_3(%arg0: i32) -> (i32, i32) {
    %c0_i32 = arith.constant 0 : i32
    %c0_i32_0 = arith.constant 0 : i32
    %c0_i32_1 = arith.constant 0 : i32
    return %c0_i32, %c0_i32_0 : i32, i32
  }
  func.func @transform_4(%arg0: i32) -> (i32, i32) {
    %c0_i32 = arith.constant 0 : i32
    %c0_i32_0 = arith.constant 0 : i32
    %c0_i32_1 = arith.constant 0 : i32
    return %c0_i32, %c0_i32_0 : i32, i32
  }
  func.func @transform_5(%arg0: i32) -> (i32, i32) {
    %c0_i32 = arith.constant 0 : i32
    %c0_i32_0 = arith.constant 0 : i32
    %c0_i32_1 = arith.constant 0 : i32
    return %c0_i32, %c0_i32_0 : i32, i32
  }
  func.func @transform_6(%arg0: i32) -> (i32, i32) {
    %c0_i32 = arith.constant 0 : i32
    %c0_i32_0 = arith.constant 0 : i32
    %c0_i32_1 = arith.constant 0 : i32
    return %c0_i32, %c0_i32_0 : i32, i32
  }
  func.func @transform_7(%arg0: i32) -> (i32, i32) {
    %c0_i32 = arith.constant 0 : i32
    %c0_i32_0 = arith.constant 0 : i32
    %c0_i32_1 = arith.constant 0 : i32
    return %c0_i32, %c0_i32_0 : i32, i32
  }
  func.func @transform_8(%arg0: i32) -> (i32, i32) {
    %c0_i32 = arith.constant 0 : i32
    %c0_i32_0 = arith.constant 0 : i32
    %c0_i32_1 = arith.constant 0 : i32
    return %c0_i32, %c0_i32_0 : i32, i32
  }
  func.func @transform_9(%arg0: i32) -> (i32, i32) {
    %c0_i32 = arith.constant 0 : i32
    %c0_i32_0 = arith.constant 0 : i32
    %c0_i32_1 = arith.constant 0 : i32
    return %c0_i32, %c0_i32_0 : i32, i32
  }
  func.func @transform_10(%arg0: i32) -> (i32, i32) {
    %c0_i32 = arith.constant 0 : i32
    %c0_i32_0 = arith.constant 0 : i32
    %c0_i32_1 = arith.constant 0 : i32
    return %c0_i32, %c0_i32_0 : i32, i32
  }
  func.func @transform_11(%arg0: i32) -> (i32, i32, i32) {
    %c0_i32 = arith.constant 0 : i32
    %c0_i32_0 = arith.constant 0 : i32
    %c0_i32_1 = arith.constant 0 : i32
    return %arg0, %c0_i32, %c0_i32_0 : i32, i32, i32
  }
}

</mosaic_0001>

<llo_original>
// kernel: tpu_custom_call.1
$region0: #{tpu_custom_call.1}
  #allocation0 [shape = 'u32[]', space=smem, size = 0x4, offset = 0x4, fixed_abs, tag = 'smem constant byte address 0x4 - core index']
  #allocation1 [shape = 'u32[72,128]{1,0:T(1,128)}', space=vmem, size = 0x9000, scoped, tag = 'internal scratch']
  %s0 = inlined_call_operand.hbm [shape: f32[2,128,128], index: 0, kind: input, shape index: {}]
  %s1 = inlined_call_operand.vmem [shape: bf16[2,128,16], index: 1, kind: input, shape index: {}]
  %s2 = inlined_call_operand.vmem [shape: f32[2,16,128], index: 2, kind: input, shape index: {}]
  %s3 = inlined_call_operand.vmem [shape: bf16[16,256], index: 3, kind: input, shape index: {}]
  %s4 = inlined_call_operand.vmem [shape: f32[2,256], index: 4, kind: input, shape index: {}]
  %s5 = inlined_call_operand.hbm [shape: bf16[256,512], index: 5, kind: input, shape index: {}]
  %s6 = inlined_call_operand.vmem [shape: f32[2,512], index: 6, kind: input, shape index: {}]
  %s7 = inlined_call_operand.hbm [shape: bf16[512,512], index: 7, kind: input, shape index: {}]
  %s8 = inlined_call_operand.vmem [shape: f32[2,512], index: 8, kind: input, shape index: {}]
  %s9 = inlined_call_operand.hbm [shape: bf16[512,640], index: 9, kind: input, shape index: {}]
  %s10 = inlined_call_operand.vmem [shape: f32[1,640], index: 10, kind: input, shape index: {}]
  %s11 = inlined_call_operand.hbm [shape: f32[2,16,640], index: 11, kind: output, shape index: {}]
  %s12 = sld [smem:[#allocation0]]
  $region93: #{tpu_custom_call.1} parent=0
    _
  %s14 = ssub.s32 1, %s12
  %s15 = scalar_select 0, %s14, %s12
  $region1: #{tpu_custom_call.1} parent=0
    #allocation2 [shape = 'u8[131072]{0}', space=vmem, size = 0x20000, scoped, tag = 'input window, operand 0']
    #allocation3 [shape = 's32[2]{0}', space=sflag, size = 0x8, scoped, tag = 'scoped memory for tpu_custom_call.1']
    #allocation4 [shape = 's32[2]{0}', space=sflag, size = 0x8, scoped, tag = 'scoped memory for tpu_custom_call.1']
    #allocation5 [shape = 'u8[262144]{0}', space=vmem, size = 0x40000, scoped, tag = 'input window, operand 5, single buffered']
    #allocation6 [shape = 's32[1]{0}', space=sflag, size = 0x4, scoped, tag = 'scoped memory for tpu_custom_call.1']
    #allocation7 [shape = 'u8[524288]{0}', space=vmem, size = 0x80000, scoped, tag = 'input window, operand 7, single buffered']
    #allocation8 [shape = 'u8[655360]{0}', space=vmem, size = 0xa0000, scoped, tag = 'input window, operand 9, single buffered']
    #allocation9 [shape = 's32[1]{0}', space=sflag, size = 0x4, scoped, tag = 'scoped memory for tpu_custom_call.1']
    #allocation10 [shape = 'u8[81920]{0}', space=vmem, size = 0x14000, scoped, tag = 'output window, operand 0']
    %16 = vsyncpa [#allocation3], 0
    %s17 = scalar_lea.sflag [#allocation3], 1
    %18 = vsyncpa %s17, 0
    %19 = vsyncpa [#allocation6], 0
    %20 = vsyncpa [#allocation9], 0
    %21 = vsyncpa [#allocation4], 0
    %s22 = scalar_lea.sflag [#allocation4], 1
    %23 = vsyncpa %s22, 0
    loop: start=0, step=1, limit=4
    $region2: #{tpu_custom_call.1} parent=1 // loop_pre_header
      _
    $region3: #{tpu_custom_call.1} parent=1 // loop_header
      %s25 = sphi 0, %s29
      %p26 = scmp.ge.s32.totalorder %s25, 4
      %s35 = sphi 0, %s37
      %s38 = sphi 0, %s35
      %s39 = sphi 0, %s38
      %s55 = sphi 0, %s39
      %s61 = sphi 0, %s63
      %s64 = sphi 0, %s61
      %s65 = sphi 0, %s64
      %s81 = sphi 0, %s65
      %s87 = sphi 0, %s89
      %s90 = sphi 0, %s87
      %s91 = sphi 0, %s90
      %s107 = sphi 0, %s91
      %s111 = sphi 0, %s111
      %s113 = sphi 0, %s111
      %s114 = sphi 0, %s113
      %s128 = sphi 0, %s114
      %s132 = sphi 0, %s132
      %s134 = sphi 0, %s132
      %s135 = sphi 0, %s134
      %s149 = sphi 0, %s135
      %s153 = sphi 0, %s153
      %s155 = sphi 0, %s153
      %s156 = sphi 0, %s155
      %s170 = sphi 0, %s156
      %s174 = sphi 0, %s174
      %s176 = sphi 0, %s174
      %s177 = sphi 0, %s176
      %s191 = sphi 0, %s177
      %s195 = sphi 0, %s195
      %s197 = sphi 0, %s195
      %s198 = sphi 0, %s197
      %s212 = sphi 0, %s198
      %s216 = sphi 0, %s216
      %s218 = sphi 0, %s216
      %s219 = sphi 0, %s218
      %s233 = sphi 0, %s219
      %s237 = sphi 0, %s237
      %s239 = sphi 0, %s237
      %s240 = sphi 0, %s239
      %s254 = sphi 0, %s240
      %s258 = sphi 0, %s258
      %s260 = sphi 0, %s258
      %s261 = sphi 0, %s260
      %s275 = sphi 0, %s261
      %s281 = sphi 0, %s283
      %s284 = sphi 0, %s281
      %s285 = sphi 0, %s284
      %s301 = sphi 0, %s285
    $region4: #{tpu_custom_call.1} parent=1 // loop_header_branch
      %28 = sbr.rel (%p26) target = $region8
    $region5: #{tpu_custom_call.1} parent=1 // loop_body
      %s30 = ssub.s32 %s25, 1
      %s31 = ssub.s32 %s25, 2
      %s32 = sadd.s32 %s25, 1
      %s33 = ssub.s32 %s25, %s32
      %p34 = scmp.eq.s32.totalorder %s33, 0
      %s36 = sadd.s32 %s35, 1
      %s37 = scalar_select %p34, %s35, %s36
      %p40 = pneg %p34
      %p41 = scmp.eq.s32.totalorder %s25, 1
      %p42 = por %p40, %p41
      %p43 = scmp.ne.s32.totalorder %s35, %s38
      %p44 = scmp.eq.s32.totalorder %s25, 0
      %p45 = por %p43, %p44
      %p46 = scmp.ne.s32.totalorder %s35, %s38
      %p47 = scmp.eq.s32.totalorder %s30, 1
      %p48 = por %p46, %p47
      %p49 = scmp.ne.s32.totalorder %s38, %s39
      %p50 = scmp.eq.s32.totalorder %s30, 0
      %p51 = por %p49, %p50
      %p52 = scmp.ne.s32.totalorder %s38, %s39
      %p53 = scmp.eq.s32.totalorder %s31, 1
      %p54 = por %p52, %p53
      %p56 = scmp.ne.s32.totalorder %s39, %s55
      %p57 = scmp.eq.s32.totalorder %s31, 0
      %p58 = por %p56, %p57
      %s59 = ssub.s32 %s25, %s32
      %p60 = scmp.eq.s32.totalorder %s59, 0
      %s62 = sadd.s32 %s61, 1
      %s63 = scalar_select %p60, %s61, %s62
      %p66 = pneg %p60
      %p67 = scmp.eq.s32.totalorder %s25, 1
      %p68 = por %p66, %p67
      %p69 = scmp.ne.s32.totalorder %s61, %s64
      %p70 = scmp.eq.s32.totalorder %s25, 0
      %p71 = por %p69, %p70
      %p72 = scmp.ne.s32.totalorder %s61, %s64
      %p73 = scmp.eq.s32.totalorder %s30, 1
      %p74 = por %p72, %p73
      %p75 = scmp.ne.s32.totalorder %s64, %s65
      %p76 = scmp.eq.s32.totalorder %s30, 0
      %p77 = por %p75, %p76
      %p78 = scmp.ne.s32.totalorder %s64, %s65
      %p79 = scmp.eq.s32.totalorder %s31, 1
      %p80 = por %p78, %p79
      %p82 = scmp.ne.s32.totalorder %s65, %s81
      %p83 = scmp.eq.s32.totalorder %s31, 0
      %p84 = por %p82, %p83
      %s85 = ssub.s32 %s25, %s32
      %p86 = scmp.eq.s32.totalorder %s85, 0
      %s88 = sadd.s32 %s87, 1
      %s89 = scalar_select %p86, %s87, %s88
      %p92 = pneg %p86
      %p93 = scmp.eq.s32.totalorder %s25, 1
      %p94 = por %p92, %p93
      %p95 = scmp.ne.s32.totalorder %s87, %s90
      %p96 = scmp.eq.s32.totalorder %s25, 0
      %p97 = por %p95, %p96
      %p98 = scmp.ne.s32.totalorder %s87, %s90
      %p99 = scmp.eq.s32.totalorder %s30, 1
      %p100 = por %p98, %p99
      %p101 = scmp.ne.s32.totalorder %s90, %s91
      %p102 = scmp.eq.s32.totalorder %s30, 0
      %p103 = por %p101, %p102
      %p104 = scmp.ne.s32.totalorder %s90, %s91
      %p105 = scmp.eq.s32.totalorder %s31, 1
      %p106 = por %p104, %p105
      %p108 = scmp.ne.s32.totalorder %s91, %s107
      %p109 = scmp.eq.s32.totalorder %s31, 0
      %p110 = por %p108, %p109
      %s112 = sadd.s32 %s111, 1
      %p115 = scmp.eq.s32.totalorder %s25, 1
      %p116 = scmp.ne.s32.totalorder %s111, %s113
      %p117 = scmp.eq.s32.totalorder %s25, 0
      %p118 = por %p116, %p117
      %p119 = scmp.ne.s32.totalorder %s111, %s113
      %p120 = scmp.eq.s32.totalorder %s30, 1
      %p121 = por %p119, %p120
      %p122 = scmp.ne.s32.totalorder %s113, %s114
      %p123 = scmp.eq.s32.totalorder %s30, 0
      %p124 = por %p122, %p123
      %p125 = scmp.ne.s32.totalorder %s113, %s114
      %p126 = scmp.eq.s32.totalorder %s31, 1
      %p127 = por %p125, %p126
      %p129 = scmp.ne.s32.totalorder %s114, %s128
      %p130 = scmp.eq.s32.totalorder %s31, 0
      %p131 = por %p129, %p130
      %s133 = sadd.s32 %s132, 1
      %p136 = scmp.eq.s32.totalorder %s25, 1
      %p137 = scmp.ne.s32.totalorder %s132, %s134
      %p138 = scmp.eq.s32.totalorder %s25, 0
      %p139 = por %p137, %p138
      %p140 = scmp.ne.s32.totalorder %s132, %s134
      %p141 = scmp.eq.s32.totalorder %s30, 1
      %p142 = por %p140, %p141
      %p143 = scmp.ne.s32.totalorder %s134, %s135
      %p144 = scmp.eq.s32.totalorder %s30, 0
      %p145 = por %p143, %p144
      %p146 = scmp.ne.s32.totalorder %s134, %s135
      %p147 = scmp.eq.s32.totalorder %s31, 1
      %p148 = por %p146, %p147
      %p150 = scmp.ne.s32.totalorder %s135, %s149
      %p151 = scmp.eq.s32.totalorder %s31, 0
      %p152 = por %p150, %p151
      %s154 = sadd.s32 %s153, 1
      %p157 = scmp.eq.s32.totalorder %s25, 1
      %p158 = scmp.ne.s32.totalorder %s153, %s155
      %p159 = scmp.eq.s32.totalorder %s25, 0
      %p160 = por %p158, %p159
      %p161 = scmp.ne.s32.totalorder %s153, %s155
      %p162 = scmp.eq.s32.totalorder %s30, 1
      %p163 = por %p161, %p162
      %p164 = scmp.ne.s32.totalorder %s155, %s156
      %p165 = scmp.eq.s32.totalorder %s30, 0
      %p166 = por %p164, %p165
      %p167 = scmp.ne.s32.totalorder %s155, %s156
      %p168 = scmp.eq.s32.totalorder %s31, 1
      %p169 = por %p167, %p168
      %p171 = scmp.ne.s32.totalorder %s156, %s170
      %p172 = scmp.eq.s32.totalorder %s31, 0
      %p173 = por %p171, %p172
      %s175 = sadd.s32 %s174, 1
      %p178 = scmp.eq.s32.totalorder %s25, 1
      %p179 = scmp.ne.s32.totalorder %s174, %s176
      %p180 = scmp.eq.s32.totalorder %s25, 0
      %p181 = por %p179, %p180
      %p182 = scmp.ne.s32.totalorder %s174, %s176
      %p183 = scmp.eq.s32.totalorder %s30, 1
      %p184 = por %p182, %p183
      %p185 = scmp.ne.s32.totalorder %s176, %s177
      %p186 = scmp.eq.s32.totalorder %s30, 0
      %p187 = por %p185, %p186
      %p188 = scmp.ne.s32.totalorder %s176, %s177
      %p189 = scmp.eq.s32.totalorder %s31, 1
      %p190 = por %p188, %p189
      %p192 = scmp.ne.s32.totalorder %s177, %s191
      %p193 = scmp.eq.s32.totalorder %s31, 0
      %p194 = por %p192, %p193
      %s196 = sadd.s32 %s195, 1
      %p199 = scmp.eq.s32.totalorder %s25, 1
      %p200 = scmp.ne.s32.totalorder %s195, %s197
      %p201 = scmp.eq.s32.totalorder %s25, 0
      %p202 = por %p200, %p201
      %p203 = scmp.ne.s32.totalorder %s195, %s197
      %p204 = scmp.eq.s32.totalorder %s30, 1
      %p205 = por %p203, %p204
      %p206 = scmp.ne.s32.totalorder %s197, %s198
      %p207 = scmp.eq.s32.totalorder %s30, 0
      %p208 = por %p206, %p207
      %p209 = scmp.ne.s32.totalorder %s197, %s198
      %p210 = scmp.eq.s32.totalorder %s31, 1
      %p211 = por %p209, %p210
      %p213 = scmp.ne.s32.totalorder %s198, %s212
      %p214 = scmp.eq.s32.totalorder %s31, 0
      %p215 = por %p213, %p214
      %s217 = sadd.s32 %s216, 1
      %p220 = scmp.eq.s32.totalorder %s25, 1
      %p221 = scmp.ne.s32.totalorder %s216, %s218
      %p222 = scmp.eq.s32.totalorder %s25, 0
      %p223 = por %p221, %p222
      %p224 = scmp.ne.s32.totalorder %s216, %s218
      %p225 = scmp.eq.s32.totalorder %s30, 1
      %p226 = por %p224, %p225
      %p227 = scmp.ne.s32.totalorder %s218, %s219
      %p228 = scmp.eq.s32.totalorder %s30, 0
      %p229 = por %p227, %p228
      %p230 = scmp.ne.s32.totalorder %s218, %s219
      %p231 = scmp.eq.s32.totalorder %s31, 1
      %p232 = por %p230, %p231
      %p234 = scmp.ne.s32.totalorder %s219, %s233
      %p235 = scmp.eq.s32.totalorder %s31, 0
      %p236 = por %p234, %p235
      %s238 = sadd.s32 %s237, 1
      %p241 = scmp.eq.s32.totalorder %s25, 1
      %p242 = scmp.ne.s32.totalorder %s237, %s239
      %p243 = scmp.eq.s32.totalorder %s25, 0
      %p244 = por %p242, %p243
      %p245 = scmp.ne.s32.totalorder %s237, %s239
      %p246 = scmp.eq.s32.totalorder %s30, 1
      %p247 = por %p245, %p246
      %p248 = scmp.ne.s32.totalorder %s239, %s240
      %p249 = scmp.eq.s32.totalorder %s30, 0
      %p250 = por %p248, %p249
      %p251 = scmp.ne.s32.totalorder %s239, %s240
      %p252 = scmp.eq.s32.totalorder %s31, 1
      %p253 = por %p251, %p252
      %p255 = scmp.ne.s32.totalorder %s240, %s254
      %p256 = scmp.eq.s32.totalorder %s31, 0
      %p257 = por %p255, %p256
      %s259 = sadd.s32 %s258, 1
      %p262 = scmp.eq.s32.totalorder %s25, 1
      %p263 = scmp.ne.s32.totalorder %s258, %s260
      %p264 = scmp.eq.s32.totalorder %s25, 0
      %p265 = por %p263, %p264
      %p266 = scmp.ne.s32.totalorder %s258, %s260
      %p267 = scmp.eq.s32.totalorder %s30, 1
      %p268 = por %p266, %p267
      %p269 = scmp.ne.s32.totalorder %s260, %s261
      %p270 = scmp.eq.s32.totalorder %s30, 0
      %p271 = por %p269, %p270
      %p272 = scmp.ne.s32.totalorder %s260, %s261
      %p273 = scmp.eq.s32.totalorder %s31, 1
      %p274 = por %p272, %p273
      %p276 = scmp.ne.s32.totalorder %s261, %s275
      %p277 = scmp.eq.s32.totalorder %s31, 0
      %p278 = por %p276, %p277
      %s279 = ssub.s32 %s25, %s32
      %p280 = scmp.eq.s32.totalorder %s279, 0
      %s282 = sadd.s32 %s281, 1
      %s283 = scalar_select %p280, %s281, %s282
      %p286 = pneg %p280
      %p287 = scmp.eq.s32.totalorder %s25, 1
      %p288 = por %p286, %p287
      %p289 = scmp.ne.s32.totalorder %s281, %s284
      %p290 = scmp.eq.s32.totalorder %s25, 0
      %p291 = por %p289, %p290
      %p292 = scmp.ne.s32.totalorder %s281, %s284
      %p293 = scmp.eq.s32.totalorder %s30, 1
      %p294 = por %p292, %p293
      %p295 = scmp.ne.s32.totalorder %s284, %s285
      %p296 = scmp.eq.s32.totalorder %s30, 0
      %p297 = por %p295, %p296
      %p298 = scmp.ne.s32.totalorder %s284, %s285
      %p299 = scmp.eq.s32.totalorder %s31, 1
      %p300 = por %p298, %p299
      %p302 = scmp.ne.s32.totalorder %s285, %s301
      %p303 = scmp.eq.s32.totalorder %s31, 0
      %p304 = por %p302, %p303
      %p305 = scmp.le.s32.totalorder 1, %s25
      %p306 = scmp.lt.s32.totalorder %s25, 3
      %p307 = pnand %p305, %p306
      %p308 = pneg %p307
      // Predicated region
      $region9: #{tpu_custom_call.1} parent=5 // pred_check
        _
      $region10: #{tpu_custom_call.1} parent=5 // pred_check_branch
        %310 = sbr.rel (%p307) target = $region12
      $region11: #{tpu_custom_call.1} parent=5 // pred_region
        %s311 = ssub.s32 %s25, 1
        // Predicated region
        $region13: #{tpu_custom_call.1} parent=11 // pred_check
          %p312 = pneg %p124
        $region14: #{tpu_custom_call.1} parent=11 // pred_check_branch
          %314 = sbr.rel (%p312) target = $region16
        $region15: #{tpu_custom_call.1} parent=11 // pred_region
          _
        $region16: #{tpu_custom_call.1} parent=11 // pred_fallthru
          _
        // Predicated region
        $region17: #{tpu_custom_call.1} parent=11 // pred_check
          %p315 = pneg %p145
        $region18: #{tpu_custom_call.1} parent=11 // pred_check_branch
          %317 = sbr.rel (%p315) target = $region20
        $region19: #{tpu_custom_call.1} parent=11 // pred_region
          _
        $region20: #{tpu_custom_call.1} parent=11 // pred_fallthru
          _
        // Predicated region
        $region21: #{tpu_custom_call.1} parent=11 // pred_check
          %p318 = pneg %p166
        $region22: #{tpu_custom_call.1} parent=11 // pred_check_branch
          %320 = sbr.rel (%p318) target = $region24
        $region23: #{tpu_custom_call.1} parent=11 // pred_region
          %322 = vsyncadd [#allocation6], 0
          %s323 = sshll.u32 %s5, 4
          %s324 = int_to_ptr.hbm [resolvable:$true] %s323
          %s325 = sshll.u32 [#allocation5], 4
          %s326 = int_to_ptr.vmem [resolvable:$true] %s325
          %331 = dma.hbm_to_vmem [thread:$0]  %s324, 8192, %s326, [#allocation6], 256, 256, 16
        $region24: #{tpu_custom_call.1} parent=11 // pred_fallthru
          _
        // Predicated region
        $region25: #{tpu_custom_call.1} parent=11 // pred_check
          %p332 = pneg %p187
        $region26: #{tpu_custom_call.1} parent=11 // pred_check_branch
          %334 = sbr.rel (%p332) target = $region28
        $region27: #{tpu_custom_call.1} parent=11 // pred_region
          _
        $region28: #{tpu_custom_call.1} parent=11 // pred_fallthru
          _
        // Predicated region
        $region29: #{tpu_custom_call.1} parent=11 // pred_check
          %p335 = pneg %p208
        $region30: #{tpu_custom_call.1} parent=11 // pred_check_branch
          %337 = sbr.rel (%p335) target = $region32
        $region31: #{tpu_custom_call.1} parent=11 // pred_region
          %339 = vsyncadd [#allocation6], 0
          %s340 = sshll.u32 %s7, 4
          %s341 = int_to_ptr.hbm [resolvable:$true] %s340
          %s342 = sshll.u32 [#allocation7], 4
          %s343 = int_to_ptr.vmem [resolvable:$true] %s342
          %348 = dma.hbm_to_vmem [thread:$0]  %s341, 16384, %s343, [#allocation6], 256, 256, 16
        $region32: #{tpu_custom_call.1} parent=11 // pred_fallthru
          _
        // Predicated region
        $region33: #{tpu_custom_call.1} parent=11 // pred_check
          %p349 = pneg %p229
        $region34: #{tpu_custom_call.1} parent=11 // pred_check_branch
          %351 = sbr.rel (%p349) target = $region36
        $region35: #{tpu_custom_call.1} parent=11 // pred_region
          _
        $region36: #{tpu_custom_call.1} parent=11 // pred_fallthru
          _
        // Predicated region
        $region37: #{tpu_custom_call.1} parent=11 // pred_check
          %p352 = pneg %p250
        $region38: #{tpu_custom_call.1} parent=11 // pred_check_branch
          %354 = sbr.rel (%p352) target = $region40
        $region39: #{tpu_custom_call.1} parent=11 // pred_region
          %356 = vsyncadd [#allocation9], 0
          %s357 = sshll.u32 %s9, 4
          %s358 = int_to_ptr.hbm [resolvable:$true] %s357
          %s359 = sshll.u32 [#allocation8], 4
          %s360 = int_to_ptr.vmem [resolvable:$true] %s359
          %365 = dma.hbm_to_vmem [thread:$0]  %s358, 20480, %s360, [#allocation9], 320, 320, 20
        $region40: #{tpu_custom_call.1} parent=11 // pred_fallthru
          _
        // Predicated region
        $region41: #{tpu_custom_call.1} parent=11 // pred_check
          %p366 = pneg %p271
        $region42: #{tpu_custom_call.1} parent=11 // pred_check_branch
          %368 = sbr.rel (%p366) target = $region44
        $region43: #{tpu_custom_call.1} parent=11 // pred_region
          _
        $region44: #{tpu_custom_call.1} parent=11 // pred_fallthru
          _
      $region12: #{tpu_custom_call.1} parent=5 // pred_fallthru
        _
      %p369 = scmp.lt.s32.totalorder %s25, 2
      // Predicated region
      $region45: #{tpu_custom_call.1} parent=5 // pred_check
        %p370 = pneg %p369
      $region46: #{tpu_custom_call.1} parent=5 // pred_check_branch
        %372 = sbr.rel (%p370) target = $region48
      $region47: #{tpu_custom_call.1} parent=5 // pred_region
        // Predicated region
        $region49: #{tpu_custom_call.1} parent=47 // pred_check
          %p373 = pneg %p45
        $region50: #{tpu_custom_call.1} parent=47 // pred_check_branch
          %375 = sbr.rel (%p373) target = $region52
        $region51: #{tpu_custom_call.1} parent=47 // pred_region
          %s376 = sand.u32 %s35, 1
          %s377 = scalar_lea.sflag [#allocation3], %s376
          %s378 = sand.u32 %s35, 1
          %s379 = smul.addr %s378, 128
          %s380 = scalar_lea.vmem [#allocation2], %s379
          %382 = vsyncadd %s377, 0
          %s383 = smul.addr %s25, 16
          %s384 = smul.addr %s383, 8
          %s385 = scalar_lea.hbm %s0, %s384
          %s386 = sshll.u32 %s385, 4
          %s387 = int_to_ptr.hbm [resolvable:$true] %s386
          %s388 = sshll.u32 %s380, 4
          %s389 = int_to_ptr.vmem [resolvable:$true] %s388
          %394 = dma.hbm_to_vmem [thread:$0]  %s387, 2048, %s389, %s377, 128, 128, 8
        $region52: #{tpu_custom_call.1} parent=47 // pred_fallthru
          _
        // Predicated region
        $region53: #{tpu_custom_call.1} parent=47 // pred_check
          %p395 = pneg %p71
        $region54: #{tpu_custom_call.1} parent=47 // pred_check_branch
          %397 = sbr.rel (%p395) target = $region56
        $region55: #{tpu_custom_call.1} parent=47 // pred_region
          %p398 = scmp.lt.s32.totalorder %s25, 1
          %s399 = scalar_select %p398, %s25, 1
          %s400 = smul.addr %s399, 16
          %s401 = smul.addr %s400, 4
          %s402 = scalar_lea.vmem %s1, %s401
        $region56: #{tpu_custom_call.1} parent=47 // pred_fallthru
          _
        // Predicated region
        $region57: #{tpu_custom_call.1} parent=47 // pred_check
          %p403 = pneg %p97
        $region58: #{tpu_custom_call.1} parent=47 // pred_check_branch
          %405 = sbr.rel (%p403) target = $region60
        $region59: #{tpu_custom_call.1} parent=47 // pred_region
          %p406 = scmp.lt.s32.totalorder %s25, 1
          %s407 = scalar_select %p406, %s25, 1
          %s408 = smul.addr %s407, 2
          %s409 = smul.addr %s408, 8
          %s410 = scalar_lea.vmem %s2, %s409
        $region60: #{tpu_custom_call.1} parent=47 // pred_fallthru
          _
      $region48: #{tpu_custom_call.1} parent=5 // pred_fallthru
        _
      %p411 = scmp.le.s32.totalorder 1, %s25
      %p412 = scmp.lt.s32.totalorder %s25, 3
      %p413 = pnand %p411, %p412
      %p414 = pneg %p413
      // Predicated region
      $region61: #{tpu_custom_call.1} parent=5 // pred_check
        _
      $region62: #{tpu_custom_call.1} parent=5 // pred_check_branch
        %416 = sbr.rel (%p413) target = $region64
      $region63: #{tpu_custom_call.1} parent=5 // pred_region
        %s417 = ssub.s32 %s25, 1
        %s418 = sand.u32 %s38, 1
        %s419 = scalar_lea.sflag [#allocation3], %s418
        %s420 = sand.u32 %s38, 1
        %s421 = smul.addr %s420, 128
        %s422 = scalar_lea.vmem [#allocation2], %s421
        // Predicated region
        $region65: #{tpu_custom_call.1} parent=63 // pred_check
          %p423 = pneg %p51
        $region66: #{tpu_custom_call.1} parent=63 // pred_check_branch
          %425 = sbr.rel (%p423) target = $region68
        $region67: #{tpu_custom_call.1} parent=63 // pred_region
          %427 = dma.done %s419, 2048
        $region68: #{tpu_custom_call.1} parent=63 // pred_fallthru
          _
        // Predicated region
        $region69: #{tpu_custom_call.1} parent=63 // pred_check
          %p428 = pneg %p166
        $region70: #{tpu_custom_call.1} parent=63 // pred_check_branch
          %430 = sbr.rel (%p428) target = $region72
        $region71: #{tpu_custom_call.1} parent=63 // pred_region
          %432 = dma.done [#allocation6], 8192
        $region72: #{tpu_custom_call.1} parent=63 // pred_fallthru
          _
        // Predicated region
        $region73: #{tpu_custom_call.1} parent=63 // pred_check
          %p433 = pneg %p208
        $region74: #{tpu_custom_call.1} parent=63 // pred_check_branch
          %435 = sbr.rel (%p433) target = $region76
        $region75: #{tpu_custom_call.1} parent=63 // pred_region
          %437 = dma.done [#allocation6], 16384
        $region76: #{tpu_custom_call.1} parent=63 // pred_fallthru
          _
        // Predicated region
        $region77: #{tpu_custom_call.1} parent=63 // pred_check
          %p438 = pneg %p250
        $region78: #{tpu_custom_call.1} parent=63 // pred_check_branch
          %440 = sbr.rel (%p438) target = $region80
        $region79: #{tpu_custom_call.1} parent=63 // pred_region
          %442 = dma.done [#allocation9], 20480
        $region80: #{tpu_custom_call.1} parent=63 // pred_fallthru
          _
        %s443 = sand.u32 %s38, 1
        %s444 = scalar_lea.sflag [#allocation3], %s443
        %s445 = sand.u32 %s38, 1
        %s446 = smul.addr %s445, 128
        %s447 = scalar_lea.vmem [#allocation2], %s446
        %p448 = pneg %p51
        %p449 = pneg %p48
        %p450 = scmp.lt.s32.totalorder %s30, 1
        %s451 = scalar_select %p450, %s30, 1
        %s452 = smul.addr %s451, 16
        %s453 = smul.addr %s452, 4
        %s454 = scalar_lea.vmem %s1, %s453
        %p455 = pneg %p77
        %p456 = pneg %p74
        %p457 = scmp.lt.s32.totalorder %s30, 1
        %s458 = scalar_select %p457, %s30, 1
        %s459 = smul.addr %s458, 2
        %s460 = smul.addr %s459, 8
        %s461 = scalar_lea.vmem %s2, %s460
        %p462 = pneg %p103
        %p463 = pneg %p100
        %p464 = pneg %p124
        %p465 = pneg %p121
        %p466 = pneg %p145
        %p467 = pneg %p142
        %p468 = pneg %p166
        %p469 = pneg %p163
        %p470 = pneg %p187
        %p471 = pneg %p184
        %p472 = pneg %p208
        %p473 = pneg %p205
        %p474 = pneg %p229
        %p475 = pneg %p226
        %p476 = pneg %p250
        %p477 = pneg %p247
        %p478 = pneg %p271
        %p479 = pneg %p268
        %p480 = pneg %p297
        %p481 = pneg %p294
        %s482 = sand.u32 %s284, 1
        %s483 = scalar_lea.sflag [#allocation4], %s482
        %s484 = sand.u32 %s284, 1
        %s485 = smul.addr %s484, 80
        %s486 = scalar_lea.vmem [#allocation10], %s485
        %p487 = scmp.lt.s32.totalorder %s30, 1
        %s488 = scalar_select %p487, %s30, 1
        %s489 = smul.addr %s488, 16
        %s490 = smul.addr %s489, 4
        %s491 = scalar_lea.vmem %s1, %s490
        %p492 = scmp.lt.s32.totalorder %s30, 1
        %s493 = scalar_select %p492, %s30, 1
        %s494 = smul.addr %s493, 2
        %s495 = smul.addr %s494, 8
        %s496 = scalar_lea.vmem %s2, %s495
        %v498 = vld [vmem:[%s422] sm:$0xff]
        %v499 = vld [vmem:[%s422 + $0x8] sm:$0xff]
        %v500 = vld [vmem:[%s422 + $0x10] sm:$0xff]
        %v501 = vld [vmem:[%s422 + $0x18] sm:$0xff]
        %v502 = vld [vmem:[%s422 + $0x20] sm:$0xff]
        %v503 = vld [vmem:[%s422 + $0x28] sm:$0xff]
        %v504 = vld [vmem:[%s422 + $0x30] sm:$0xff]
        %v505 = vld [vmem:[%s422 + $0x38] sm:$0xff]
        %v506 = vld [vmem:[%s422 + $0x40] sm:$0xff]
        %v507 = vld [vmem:[%s422 + $0x48] sm:$0xff]
        %v508 = vld [vmem:[%s422 + $0x50] sm:$0xff]
        %v509 = vld [vmem:[%s422 + $0x58] sm:$0xff]
        %v510 = vld [vmem:[%s422 + $0x60] sm:$0xff]
        %v511 = vld [vmem:[%s422 + $0x68] sm:$0xff]
        %v512 = vld [vmem:[%s422 + $0x70] sm:$0xff]
        %v513 = vld [vmem:[%s422 + $0x78] sm:$0xff]
        %v514 = vld [vmem:[%s491] sm:$0xf]
        %v515 = vld [vmem:[%s491 + $0x4] sm:$0xf]
        %v516 = vld [vmem:[%s491 + $0x8] sm:$0xf]
        %v517 = vld [vmem:[%s491 + $0xc] sm:$0xf]
        %v518 = vld [vmem:[%s491 + $0x10] sm:$0xf]
        %v519 = vld [vmem:[%s491 + $0x14] sm:$0xf]
        %v520 = vld [vmem:[%s491 + $0x18] sm:$0xf]
        %v521 = vld [vmem:[%s491 + $0x1c] sm:$0xf]
        %v522 = vld [vmem:[%s491 + $0x20] sm:$0xf]
        %v523 = vld [vmem:[%s491 + $0x24] sm:$0xf]
        %v524 = vld [vmem:[%s491 + $0x28] sm:$0xf]
        %v525 = vld [vmem:[%s491 + $0x2c] sm:$0xf]
        %v526 = vld [vmem:[%s491 + $0x30] sm:$0xf]
        %v527 = vld [vmem:[%s491 + $0x34] sm:$0xf]
        %v528 = vld [vmem:[%s491 + $0x38] sm:$0xf]
        %v529 = vld [vmem:[%s491 + $0x3c] sm:$0xf]
        %v530 = vld [vmem:[%s3] sm:$0xff]
        %v531 = vld [vmem:[%s3 + $0x8] sm:$0xff]
        %v548 = vunpack.c.l.b16 %v514
        %v549 = vunpack.c.l.b16 %v515
        %v550 = vunpack.c.l.b16 %v516
        %v551 = vunpack.c.l.b16 %v517
        %v552 = vunpack.c.l.b16 %v518
        %v553 = vunpack.c.l.b16 %v519
        %v554 = vunpack.c.l.b16 %v520
        %v555 = vunpack.c.l.b16 %v521
        %v556 = vunpack.c.l.b16 %v522
        %v557 = vunpack.c.l.b16 %v523
        %v558 = vunpack.c.l.b16 %v524
        %v559 = vunpack.c.l.b16 %v525
        %v560 = vunpack.c.l.b16 %v526
        %v561 = vunpack.c.l.b16 %v527
        %v562 = vunpack.c.l.b16 %v528
        %v563 = vunpack.c.l.b16 %v529
        %v564 = vpack.c.b16 %v549, %v548
        %v565 = vpack.c.b16 %v551, %v550
        %v566 = vpack.c.b16 %v553, %v552
        %v567 = vpack.c.b16 %v555, %v554
        %v568 = vpack.c.b16 %v557, %v556
        %v569 = vpack.c.b16 %v559, %v558
        %v570 = vpack.c.b16 %v561, %v560
        %v571 = vpack.c.b16 %v563, %v562
        %v574 = vunpack.c.l.b16 %v530
        %v575 = vunpack.c.h.b16 %v530
        %v576 = vunpack.c.l.b16 %v531
        %v577 = vunpack.c.h.b16 %v531
        %v578 = vpack.c.b16 %v576, %v574
        %v579 = vpack.c.b16 %v577, %v575
        %vm582 = vcmask 130048
        %v584 = vsel %vm582, %v564, 0
        %v587 = vsel %vm582, %v565, 0
        %v590 = vsel %vm582, %v566, 0
        %v593 = vsel %vm582, %v567, 0
        %v596 = vsel %vm582, %v568, 0
        %v599 = vsel %vm582, %v569, 0
        %v602 = vsel %vm582, %v570, 0
        %v605 = vsel %vm582, %v571, 0
        %607 = vmatpush.bf16.msra.mxu0 0
        %608 = vmatpush.bf16.msra.mxu0 0
        %609 = vmatpush.bf16.msra.mxu0 0
        %610 = vmatpush.bf16.msra.mxu0 0
        %611 = vmatpush.bf16.msra.mxu0 0
        %612 = vmatpush.bf16.msra.mxu0 0
        %613 = vmatpush.bf16.msra.mxu0 0
        %614 = vmatpush.bf16.msra.mxu0 %v578
        %615 = vmatmul.bf16.gmra.mxu0 %v584
        %v616 = vpop.f32.mrf.mxu0
        %v617 = vadd.f32 0.0, %v616
        %v618 = vpop.f32.mrf.mxu0
        %v619 = vadd.f32 0.0, %v618
        %620 = vmatmul.bf16.gmra.mxu0 %v587
        %v621 = vpop.f32.mrf.mxu0
        %v622 = vadd.f32 0.0, %v621
        %v623 = vpop.f32.mrf.mxu0
        %v624 = vadd.f32 0.0, %v623
        %625 = vmatmul.bf16.gmra.mxu0 %v590
        %v626 = vpop.f32.mrf.mxu0
        %v627 = vadd.f32 0.0, %v626
        %v628 = vpop.f32.mrf.mxu0
        %v629 = vadd.f32 0.0, %v628
        %630 = vmatmul.bf16.gmra.mxu0 %v593
        %v631 = vpop.f32.mrf.mxu0
        %v632 = vadd.f32 0.0, %v631
        %v633 = vpop.f32.mrf.mxu0
        %v634 = vadd.f32 0.0, %v633
        %635 = vmatmul.bf16.gmra.mxu0 %v596
        %v636 = vpop.f32.mrf.mxu0
        %v637 = vadd.f32 0.0, %v636
        %v638 = vpop.f32.mrf.mxu0
        %v639 = vadd.f32 0.0, %v638
        %640 = vmatmul.bf16.gmra.mxu0 %v599
        %v641 = vpop.f32.mrf.mxu0
        %v642 = vadd.f32 0.0, %v641
        %v643 = vpop.f32.mrf.mxu0
        %v644 = vadd.f32 0.0, %v643
        %645 = vmatmul.bf16.gmra.mxu0 %v602
        %v646 = vpop.f32.mrf.mxu0
        %v647 = vadd.f32 0.0, %v646
        %v648 = vpop.f32.mrf.mxu0
        %v649 = vadd.f32 0.0, %v648
        %650 = vmatmul.bf16.gmra.mxu0 %v605
        %v651 = vpop.f32.mrf.mxu0
        %v652 = vadd.f32 0.0, %v651
        %v653 = vpop.f32.mrf.mxu0
        %v654 = vadd.f32 0.0, %v653
        %655 = vdwg.mxu0
        %656 = vmatpush.bf16.msra.mxu0 0
        %657 = vmatpush.bf16.msra.mxu0 0
        %658 = vmatpush.bf16.msra.mxu0 0
        %659 = vmatpush.bf16.msra.mxu0 0
        %660 = vmatpush.bf16.msra.mxu0 0
        %661 = vmatpush.bf16.msra.mxu0 0
        %662 = vmatpush.bf16.msra.mxu0 0
        %663 = vmatpush.bf16.msra.mxu0 %v579
        %664 = vmatmul.bf16.gmra.mxu0 %v584
        %v665 = vpop.f32.mrf.mxu0
        %v666 = vadd.f32 0.0, %v665
        %v667 = vpop.f32.mrf.mxu0
        %v668 = vadd.f32 0.0, %v667
        %669 = vmatmul.bf16.gmra.mxu0 %v587
        %v670 = vpop.f32.mrf.mxu0
        %v671 = vadd.f32 0.0, %v670
        %v672 = vpop.f32.mrf.mxu0
        %v673 = vadd.f32 0.0, %v672
        %674 = vmatmul.bf16.gmra.mxu0 %v590
        %v675 = vpop.f32.mrf.mxu0
        %v676 = vadd.f32 0.0, %v675
        %v677 = vpop.f32.mrf.mxu0
        %v678 = vadd.f32 0.0, %v677
        %679 = vmatmul.bf16.gmra.mxu0 %v593
        %v680 = vpop.f32.mrf.mxu0
        %v681 = vadd.f32 0.0, %v680
        %v682 = vpop.f32.mrf.mxu0
        %v683 = vadd.f32 0.0, %v682
        %684 = vmatmul.bf16.gmra.mxu0 %v596
        %v685 = vpop.f32.mrf.mxu0
        %v686 = vadd.f32 0.0, %v685
        %v687 = vpop.f32.mrf.mxu0
        %v688 = vadd.f32 0.0, %v687
        %689 = vmatmul.bf16.gmra.mxu0 %v599
        %v690 = vpop.f32.mrf.mxu0
        %v691 = vadd.f32 0.0, %v690
        %v692 = vpop.f32.mrf.mxu0
        %v693 = vadd.f32 0.0, %v692
        %694 = vmatmul.bf16.gmra.mxu0 %v602
        %v695 = vpop.f32.mrf.mxu0
        %v696 = vadd.f32 0.0, %v695
        %v697 = vpop.f32.mrf.mxu0
        %v698 = vadd.f32 0.0, %v697
        %699 = vmatmul.bf16.gmra.mxu0 %v605
        %v700 = vpop.f32.mrf.mxu0
        %v701 = vadd.f32 0.0, %v700
        %v702 = vpop.f32.mrf.mxu0
        %v703 = vadd.f32 0.0, %v702
        %704 = vdwg.mxu0
        %705 = vmatpush.msra.mxu0 %v654
        %706 = vmatpush.msra.mxu0 %v652
        %707 = vmatpush.msra.mxu0 %v649
        %708 = vmatpush.msra.mxu0 %v647
        %709 = vmatpush.msra.mxu0 %v644
        %710 = vmatpush.msra.mxu0 %v642
        %711 = vmatpush.msra.mxu0 %v639
        %712 = vmatpush.msra.mxu0 %v637
        %713 = vmatpush.msra.mxu0 %v634
        %714 = vmatpush.msra.mxu0 %v632
        %715 = vmatpush.msra.mxu0 %v629
        %716 = vmatpush.msra.mxu0 %v627
        %717 = vmatpush.msra.mxu0 %v624
        %718 = vmatpush.msra.mxu0 %v622
        %719 = vmatpush.msra.mxu0 %v619
        %720 = vmatpush.msra.mxu0 %v617
        %721 = vmatmul.f32.gmra.mxu0 %v498
        %v722 = vpop.f32.mrf.mxu0
        %v723 = vadd.f32 0.0, %v722
        %724 = vmatmul.f32.gmra.mxu0 %v499
        %v725 = vpop.f32.mrf.mxu0
        %v726 = vadd.f32 0.0, %v725
        %727 = vmatmul.f32.gmra.mxu0 %v500
        %v728 = vpop.f32.mrf.mxu0
        %v729 = vadd.f32 0.0, %v728
        %730 = vmatmul.f32.gmra.mxu0 %v501
        %v731 = vpop.f32.mrf.mxu0
        %v732 = vadd.f32 0.0, %v731
        %733 = vmatmul.f32.gmra.mxu0 %v502
        %v734 = vpop.f32.mrf.mxu0
        %v735 = vadd.f32 0.0, %v734
        %736 = vmatmul.f32.gmra.mxu0 %v503
        %v737 = vpop.f32.mrf.mxu0
        %v738 = vadd.f32 0.0, %v737
        %739 = vmatmul.f32.gmra.mxu0 %v504
        %v740 = vpop.f32.mrf.mxu0
        %v741 = vadd.f32 0.0, %v740
        %742 = vmatmul.f32.gmra.mxu0 %v505
        %v743 = vpop.f32.mrf.mxu0
        %v744 = vadd.f32 0.0, %v743
        %745 = vmatmul.f32.gmra.mxu0 %v506
        %v746 = vpop.f32.mrf.mxu0
        %v747 = vadd.f32 0.0, %v746
        %748 = vmatmul.f32.gmra.mxu0 %v507
        %v749 = vpop.f32.mrf.mxu0
        %v750 = vadd.f32 0.0, %v749
        %751 = vmatmul.f32.gmra.mxu0 %v508
        %v752 = vpop.f32.mrf.mxu0
        %v753 = vadd.f32 0.0, %v752
        %754 = vmatmul.f32.gmra.mxu0 %v509
        %v755 = vpop.f32.mrf.mxu0
        %v756 = vadd.f32 0.0, %v755
        %757 = vmatmul.f32.gmra.mxu0 %v510
        %v758 = vpop.f32.mrf.mxu0
        %v759 = vadd.f32 0.0, %v758
        %760 = vmatmul.f32.gmra.mxu0 %v511
        %v761 = vpop.f32.mrf.mxu0
        %v762 = vadd.f32 0.0, %v761
        %763 = vmatmul.f32.gmra.mxu0 %v512
        %v764 = vpop.f32.mrf.mxu0
        %v765 = vadd.f32 0.0, %v764
        %766 = vmatmul.f32.gmra.mxu0 %v513
        %v767 = vpop.f32.mrf.mxu0
        %v768 = vadd.f32 0.0, %v767
        %769 = vdwg.mxu0
        %770 = vmatpush.msra.mxu0 %v703
        %771 = vmatpush.msra.mxu0 %v701
        %772 = vmatpush.msra.mxu0 %v698
        %773 = vmatpush.msra.mxu0 %v696
        %774 = vmatpush.msra.mxu0 %v693
        %775 = vmatpush.msra.mxu0 %v691
        %776 = vmatpush.msra.mxu0 %v688
        %777 = vmatpush.msra.mxu0 %v686
        %778 = vmatpush.msra.mxu0 %v683
        %779 = vmatpush.msra.mxu0 %v681
        %780 = vmatpush.msra.mxu0 %v678
        %781 = vmatpush.msra.mxu0 %v676
        %782 = vmatpush.msra.mxu0 %v673
        %783 = vmatpush.msra.mxu0 %v671
        %784 = vmatpush.msra.mxu0 %v668
        %785 = vmatpush.msra.mxu0 %v666
        %786 = vmatmul.f32.gmra.mxu0 %v498
        %v787 = vpop.f32.mrf.mxu0
        %v788 = vadd.f32 0.0, %v787
        %789 = vmatmul.f32.gmra.mxu0 %v499
        %v790 = vpop.f32.mrf.mxu0
        %v791 = vadd.f32 0.0, %v790
        %792 = vmatmul.f32.gmra.mxu0 %v500
        %v793 = vpop.f32.mrf.mxu0
        %v794 = vadd.f32 0.0, %v793
        %795 = vmatmul.f32.gmra.mxu0 %v501
        %v796 = vpop.f32.mrf.mxu0
        %v797 = vadd.f32 0.0, %v796
        %798 = vmatmul.f32.gmra.mxu0 %v502
        %v799 = vpop.f32.mrf.mxu0
        %v800 = vadd.f32 0.0, %v799
        %801 = vmatmul.f32.gmra.mxu0 %v503
        %v802 = vpop.f32.mrf.mxu0
        %v803 = vadd.f32 0.0, %v802
        %804 = vmatmul.f32.gmra.mxu0 %v504
        %v805 = vpop.f32.mrf.mxu0
        %v806 = vadd.f32 0.0, %v805
        %807 = vmatmul.f32.gmra.mxu0 %v505
        %v808 = vpop.f32.mrf.mxu0
        %v809 = vadd.f32 0.0, %v808
        %810 = vmatmul.f32.gmra.mxu0 %v506
        %v811 = vpop.f32.mrf.mxu0
        %v812 = vadd.f32 0.0, %v811
        %813 = vmatmul.f32.gmra.mxu0 %v507
        %v814 = vpop.f32.mrf.mxu0
        %v815 = vadd.f32 0.0, %v814
        %816 = vmatmul.f32.gmra.mxu0 %v508
        %v817 = vpop.f32.mrf.mxu0
        %v818 = vadd.f32 0.0, %v817
        %819 = vmatmul.f32.gmra.mxu0 %v509
        %v820 = vpop.f32.mrf.mxu0
        %v821 = vadd.f32 0.0, %v820
        %822 = vmatmul.f32.gmra.mxu0 %v510
        %v823 = vpop.f32.mrf.mxu0
        %v824 = vadd.f32 0.0, %v823
        %825 = vmatmul.f32.gmra.mxu0 %v511
        %v826 = vpop.f32.mrf.mxu0
        %v827 = vadd.f32 0.0, %v826
        %828 = vmatmul.f32.gmra.mxu0 %v512
        %v829 = vpop.f32.mrf.mxu0
        %v830 = vadd.f32 0.0, %v829
        %831 = vmatmul.f32.gmra.mxu0 %v513
        %v832 = vpop.f32.mrf.mxu0
        %v833 = vadd.f32 0.0, %v832
        %834 = vdwg.mxu0
        %v835 = vadd.f32 %v723, %v726
        %v836 = vadd.f32 %v835, %v729
        %v837 = vadd.f32 %v836, %v732
        %v838 = vadd.f32 %v837, %v735
        %v839 = vadd.f32 %v838, %v738
        %v840 = vadd.f32 %v839, %v741
        %v841 = vadd.f32 %v840, %v744
        %v842 = vadd.f32 %v841, %v747
        %v843 = vadd.f32 %v842, %v750
        %v844 = vadd.f32 %v843, %v753
        %v845 = vadd.f32 %v844, %v756
        %v846 = vadd.f32 %v845, %v759
        %v847 = vadd.f32 %v846, %v762
        %v848 = vadd.f32 %v847, %v765
        %v849 = vadd.f32 %v848, %v768
        %v850 = vrot.slane %v849, 4
        %v851 = vadd.f32 %v849, %v850
        %v852 = vrot.slane %v851, 2
        %v853 = vadd.f32 %v851, %v852
        %v854 = vrot.slane %v853, 1
        %v855 = vadd.f32 %v853, %v854
        %v856 = vadd.f32 %v788, %v791
        %v857 = vadd.f32 %v856, %v794
        %v858 = vadd.f32 %v857, %v797
        %v859 = vadd.f32 %v858, %v800
        %v860 = vadd.f32 %v859, %v803
        %v861 = vadd.f32 %v860, %v806
        %v862 = vadd.f32 %v861, %v809
        %v863 = vadd.f32 %v862, %v812
        %v864 = vadd.f32 %v863, %v815
        %v865 = vadd.f32 %v864, %v818
        %v866 = vadd.f32 %v865, %v821
        %v867 = vadd.f32 %v866, %v824
        %v868 = vadd.f32 %v867, %v827
        %v869 = vadd.f32 %v868, %v830
        %v870 = vadd.f32 %v869, %v833
        %v871 = vrot.slane %v870, 4
        %v872 = vadd.f32 %v870, %v871
        %v873 = vrot.slane %v872, 2
        %v874 = vadd.f32 %v872, %v873
        %v875 = vrot.slane %v874, 1
        %v876 = vadd.f32 %v874, %v875
        %v877 = vrcp.pop 128.0
        %v878 = vmul.f32 128.0, %v877
        %v879 = vsub.f32 1.0, %v878
        %v880 = vmul.f32 %v877, %v879
        %v881 = vadd.f32 %v877, %v880
        %vm882 = vweird.f32 %v877
        %v883 = vsel %vm882, %v877, %v881
        %v884 = vmul.f32 %v855, %v883
        %v885 = vmul.f32 %v876, %v883
        %v886 = vmul.f32 %v723, %v723
        %v887 = vmul.f32 %v788, %v788
        %v888 = vmul.f32 %v726, %v726
        %v889 = vmul.f32 %v791, %v791
        %v890 = vmul.f32 %v729, %v729
        %v891 = vmul.f32 %v794, %v794
        %v892 = vmul.f32 %v732, %v732
        %v893 = vmul.f32 %v797, %v797
        %v894 = vmul.f32 %v735, %v735
        %v895 = vmul.f32 %v800, %v800
        %v896 = vmul.f32 %v738, %v738
        %v897 = vmul.f32 %v803, %v803
        %v898 = vmul.f32 %v741, %v741
        %v899 = vmul.f32 %v806, %v806
        %v900 = vmul.f32 %v744, %v744
        %v901 = vmul.f32 %v809, %v809
        %v902 = vmul.f32 %v747, %v747
        %v903 = vmul.f32 %v812, %v812
        %v904 = vmul.f32 %v750, %v750
        %v905 = vmul.f32 %v815, %v815
        %v906 = vmul.f32 %v753, %v753
        %v907 = vmul.f32 %v818, %v818
        %v908 = vmul.f32 %v756, %v756
        %v909 = vmul.f32 %v821, %v821
        %v910 = vmul.f32 %v759, %v759
        %v911 = vmul.f32 %v824, %v824
        %v912 = vmul.f32 %v762, %v762
        %v913 = vmul.f32 %v827, %v827
        %v914 = vmul.f32 %v765, %v765
        %v915 = vmul.f32 %v830, %v830
        %v916 = vmul.f32 %v768, %v768
        %v917 = vmul.f32 %v833, %v833
        %v918 = vadd.f32 %v886, %v888
        %v919 = vadd.f32 %v918, %v890
        %v920 = vadd.f32 %v919, %v892
        %v921 = vadd.f32 %v920, %v894
        %v922 = vadd.f32 %v921, %v896
        %v923 = vadd.f32 %v922, %v898
        %v924 = vadd.f32 %v923, %v900
        %v925 = vadd.f32 %v924, %v902
        %v926 = vadd.f32 %v925, %v904
        %v927 = vadd.f32 %v926, %v906
        %v928 = vadd.f32 %v927, %v908
        %v929 = vadd.f32 %v928, %v910
        %v930 = vadd.f32 %v929, %v912
        %v931 = vadd.f32 %v930, %v914
        %v932 = vadd.f32 %v931, %v916
        %v933 = vrot.slane %v932, 4
        %v934 = vadd.f32 %v932, %v933
        %v935 = vrot.slane %v934, 2
        %v936 = vadd.f32 %v934, %v935
        %v937 = vrot.slane %v936, 1
        %v938 = vadd.f32 %v936, %v937
        %v939 = vadd.f32 %v887, %v889
        %v940 = vadd.f32 %v939, %v891
        %v941 = vadd.f32 %v940, %v893
        %v942 = vadd.f32 %v941, %v895
        %v943 = vadd.f32 %v942, %v897
        %v944 = vadd.f32 %v943, %v899
        %v945 = vadd.f32 %v944, %v901
        %v946 = vadd.f32 %v945, %v903
        %v947 = vadd.f32 %v946, %v905
        %v948 = vadd.f32 %v947, %v907
        %v949 = vadd.f32 %v948, %v909
        %v950 = vadd.f32 %v949, %v911
        %v951 = vadd.f32 %v950, %v913
        %v952 = vadd.f32 %v951, %v915
        %v953 = vadd.f32 %v952, %v917
        %v954 = vrot.slane %v953, 4
        %v955 = vadd.f32 %v953, %v954
        %v956 = vrot.slane %v955, 2
        %v957 = vadd.f32 %v955, %v956
        %v958 = vrot.slane %v957, 1
        %v959 = vadd.f32 %v957, %v958
        %v960 = vmul.f32 %v938, %v883
        %v961 = vmul.f32 %v959, %v883
        %v962 = vmul.f32 %v884, %v884
        %v963 = vmul.f32 %v885, %v885
        %v964 = vsub.f32 %v960, %v962
        %v965 = vsub.f32 %v961, %v963
        %v966 = vmax.f32 %v964, 0.0
        %v967 = vmax.f32 %v965, 0.0
        %v968 = vld [vmem:[%s4] ss:$2 sm:$0x3]
        %s969 = scalar_lea.vmem %s4, 1
        %v970 = vld [vmem:[%s969] ss:$2 sm:$0x3]
        %v971 = vadd.f32 %v966, 1e-05
        %v972 = vadd.f32 %v967, 1e-05
        %v973 = vrsqrt.pop %v971
        %v974 = vmul.f32 %v973, %v971
        %v975 = vmul.f32 %v974, %v973
        %v976 = vmul.f32 0.5, %v975
        %v977 = vsub.f32 1.5, %v976
        %v978 = vmul.f32 %v973, %v977
        %vm979 = vweird.f32 %v971
        %vm980 = vweird.f32 %v973
        %vm981 = vmor %vm979, %vm980
        %v982 = vsel %vm981, %v973, %v978
        %v983 = vrsqrt.pop %v972
        %v984 = vmul.f32 %v983, %v972
        %v985 = vmul.f32 %v984, %v983
        %v986 = vmul.f32 0.5, %v985
        %v987 = vsub.f32 1.5, %v986
        %v988 = vmul.f32 %v983, %v987
        %vm989 = vweird.f32 %v972
        %vm990 = vweird.f32 %v983
        %vm991 = vmor %vm989, %vm990
        %v992 = vsel %vm991, %v983, %v988
        %v995 = vrot.slane %v992, 7
        %vm996 = vcmask 1040384
        %v997 = vsel %vm996, %v982, %v995
        %v999 = vmul.f32 %v968, %v997
        %v1001 = vperm.slane %v999, 0
        %v1002 = vperm.slane %v999, 1
        %v1005 = vmul.f32 %v884, %v1001
        %v1006 = vmul.f32 %v885, %v1002
        %v1009 = vrot.slane %v1006, 7
        %v1010 = vsel %vm996, %v1005, %v1009
        %v1012 = vsub.f32 %v970, %v1010
        %v1013 = vmul.f32 %v723, %v1001
        %v1014 = vmul.f32 %v788, %v1002
        %v1015 = vmul.f32 %v726, %v1001
        %v1016 = vmul.f32 %v791, %v1002
        %v1017 = vmul.f32 %v729, %v1001
        %v1018 = vmul.f32 %v794, %v1002
        %v1019 = vmul.f32 %v732, %v1001
        %v1020 = vmul.f32 %v797, %v1002
        %v1021 = vmul.f32 %v735, %v1001
        %v1022 = vmul.f32 %v800, %v1002
        %v1023 = vmul.f32 %v738, %v1001
        %v1024 = vmul.f32 %v803, %v1002
        %v1025 = vmul.f32 %v741, %v1001
        %v1026 = vmul.f32 %v806, %v1002
        %v1027 = vmul.f32 %v744, %v1001
        %v1028 = vmul.f32 %v809, %v1002
        %v1029 = vmul.f32 %v747, %v1001
        %v1030 = vmul.f32 %v812, %v1002
        %v1031 = vmul.f32 %v750, %v1001
        %v1032 = vmul.f32 %v815, %v1002
        %v1033 = vmul.f32 %v753, %v1001
        %v1034 = vmul.f32 %v818, %v1002
        %v1035 = vmul.f32 %v756, %v1001
        %v1036 = vmul.f32 %v821, %v1002
        %v1037 = vmul.f32 %v759, %v1001
        %v1038 = vmul.f32 %v824, %v1002
        %v1039 = vmul.f32 %v762, %v1001
        %v1040 = vmul.f32 %v827, %v1002
        %v1041 = vmul.f32 %v765, %v1001
        %v1042 = vmul.f32 %v830, %v1002
        %v1043 = vmul.f32 %v768, %v1001
        %v1044 = vmul.f32 %v833, %v1002
        %v1046 = vperm.slane %v1012, 0
        %v1047 = vperm.slane %v1012, 1
        %v1050 = vadd.f32 %v1013, %v1046
        %v1051 = vadd.f32 %v1014, %v1047
        %v1052 = vadd.f32 %v1015, %v1046
        %v1053 = vadd.f32 %v1016, %v1047
        %v1054 = vadd.f32 %v1017, %v1046
        %v1055 = vadd.f32 %v1018, %v1047
        %v1056 = vadd.f32 %v1019, %v1046
        %v1057 = vadd.f32 %v1020, %v1047
        %v1058 = vadd.f32 %v1021, %v1046
        %v1059 = vadd.f32 %v1022, %v1047
        %v1060 = vadd.f32 %v1023, %v1046
        %v1061 = vadd.f32 %v1024, %v1047
        %v1062 = vadd.f32 %v1025, %v1046
        %v1063 = vadd.f32 %v1026, %v1047
        %v1064 = vadd.f32 %v1027, %v1046
        %v1065 = vadd.f32 %v1028, %v1047
        %v1066 = vadd.f32 %v1029, %v1046
        %v1067 = vadd.f32 %v1030, %v1047
        %v1068 = vadd.f32 %v1031, %v1046
        %v1069 = vadd.f32 %v1032, %v1047
        %v1070 = vadd.f32 %v1033, %v1046
        %v1071 = vadd.f32 %v1034, %v1047
        %v1072 = vadd.f32 %v1035, %v1046
        %v1073 = vadd.f32 %v1036, %v1047
        %v1074 = vadd.f32 %v1037, %v1046
        %v1075 = vadd.f32 %v1038, %v1047
        %v1076 = vadd.f32 %v1039, %v1046
        %v1077 = vadd.f32 %v1040, %v1047
        %v1078 = vadd.f32 %v1041, %v1046
        %v1079 = vadd.f32 %v1042, %v1047
        %v1080 = vadd.f32 %v1043, %v1046
        %v1081 = vadd.f32 %v1044, %v1047
        %v1082 = vmax.f32 %v1050, 0.0
        %v1083 = vmax.f32 %v1051, 0.0
        %v1084 = vmax.f32 %v1052, 0.0
        %v1085 = vmax.f32 %v1053, 0.0
        %v1086 = vmax.f32 %v1054, 0.0
        %v1087 = vmax.f32 %v1055, 0.0
        %v1088 = vmax.f32 %v1056, 0.0
        %v1089 = vmax.f32 %v1057, 0.0
        %v1090 = vmax.f32 %v1058, 0.0
        %v1091 = vmax.f32 %v1059, 0.0
        %v1092 = vmax.f32 %v1060, 0.0
        %v1093 = vmax.f32 %v1061, 0.0
        %v1094 = vmax.f32 %v1062, 0.0
        %v1095 = vmax.f32 %v1063, 0.0
        %v1096 = vmax.f32 %v1064, 0.0
        %v1097 = vmax.f32 %v1065, 0.0
        %v1098 = vmax.f32 %v1066, 0.0
        %v1099 = vmax.f32 %v1067, 0.0
        %v1100 = vmax.f32 %v1068, 0.0
        %v1101 = vmax.f32 %v1069, 0.0
        %v1102 = vmax.f32 %v1070, 0.0
        %v1103 = vmax.f32 %v1071, 0.0
        %v1104 = vmax.f32 %v1072, 0.0
        %v1105 = vmax.f32 %v1073, 0.0
        %v1106 = vmax.f32 %v1074, 0.0
        %v1107 = vmax.f32 %v1075, 0.0
        %v1108 = vmax.f32 %v1076, 0.0
        %v1109 = vmax.f32 %v1077, 0.0
        %v1110 = vmax.f32 %v1078, 0.0
        %v1111 = vmax.f32 %v1079, 0.0
        %v1112 = vmax.f32 %v1080, 0.0
        %v1113 = vmax.f32 %v1081, 0.0
        %v1114 = vpack.c.bf16 %v1084, %v1082
        %v1115 = vpack.c.bf16 %v1085, %v1083
        %v1116 = vpack.c.bf16 %v1088, %v1086
        %v1117 = vpack.c.bf16 %v1089, %v1087
        %v1118 = vpack.c.bf16 %v1092, %v1090
        %v1119 = vpack.c.bf16 %v1093, %v1091
        %v1120 = vpack.c.bf16 %v1096, %v1094
        %v1121 = vpack.c.bf16 %v1097, %v1095
        %v1122 = vpack.c.bf16 %v1100, %v1098
        %v1123 = vpack.c.bf16 %v1101, %v1099
        %v1124 = vpack.c.bf16 %v1104, %v1102
        %v1125 = vpack.c.bf16 %v1105, %v1103
        %v1126 = vpack.c.bf16 %v1108, %v1106
        %v1127 = vpack.c.bf16 %v1109, %v1107
        %v1128 = vpack.c.bf16 %v1112, %v1110
        %v1129 = vpack.c.bf16 %v1113, %v1111
        %v1130 = vld [vmem:[#allocation5] sm:$0xff]
        %v1131 = vld [vmem:[#allocation5 + $0x8] sm:$0xff]
        %v1132 = vld [vmem:[#allocation5 + $0x10] sm:$0xff]
        %v1133 = vld [vmem:[#allocation5 + $0x18] sm:$0xff]
        %v1134 = vld [vmem:[#allocation5 + $0x20] sm:$0xff]
        %v1135 = vld [vmem:[#allocation5 + $0x28] sm:$0xff]
        %v1136 = vld [vmem:[#allocation5 + $0x30] sm:$0xff]
        %v1137 = vld [vmem:[#allocation5 + $0x38] sm:$0xff]
        %v1138 = vld [vmem:[#allocation5 + $0x40] sm:$0xff]
        %v1139 = vld [vmem:[#allocation5 + $0x48] sm:$0xff]
        %v1140 = vld [vmem:[#allocation5 + $0x50] sm:$0xff]
        %v1141 = vld [vmem:[#allocation5 + $0x58] sm:$0xff]
        %v1142 = vld [vmem:[#allocation5 + $0x60] sm:$0xff]
        %v1143 = vld [vmem:[#allocation5 + $0x68] sm:$0xff]
        %v1144 = vld [vmem:[#allocation5 + $0x70] sm:$0xff]
        %v1145 = vld [vmem:[#allocation5 + $0x78] sm:$0xff]
        %v1146 = vld [vmem:[#allocation5 + $0x80] sm:$0xff]
        %v1147 = vld [vmem:[#allocation5 + $0x88] sm:$0xff]
        %v1148 = vld [vmem:[#allocation5 + $0x90] sm:$0xff]
        %v1149 = vld [vmem:[#allocation5 + $0x98] sm:$0xff]
        %v1150 = vld [vmem:[#allocation5 + $0xa0] sm:$0xff]
        %v1151 = vld [vmem:[#allocation5 + $0xa8] sm:$0xff]
        %v1152 = vld [vmem:[#allocation5 + $0xb0] sm:$0xff]
        %v1153 = vld [vmem:[#allocation5 + $0xb8] sm:$0xff]
        %v1154 = vld [vmem:[#allocation5 + $0xc0] sm:$0xff]
        %v1155 = vld [vmem:[#allocation5 + $0xc8] sm:$0xff]
        %v1156 = vld [vmem:[#allocation5 + $0xd0] sm:$0xff]
        %v1157 = vld [vmem:[#allocation5 + $0xd8] sm:$0xff]
        %v1158 = vld [vmem:[#allocation5 + $0xe0] sm:$0xff]
        %v1159 = vld [vmem:[#allocation5 + $0xe8] sm:$0xff]
        %v1160 = vld [vmem:[#allocation5 + $0xf0] sm:$0xff]
        %v1161 = vld [vmem:[#allocation5 + $0xf8] sm:$0xff]
        %v1162 = vld [vmem:[#allocation5 + $0x100] sm:$0xff]
        %v1163 = vld [vmem:[#allocation5 + $0x108] sm:$0xff]
        %v1164 = vld [vmem:[#allocation5 + $0x110] sm:$0xff]
        %v1165 = vld [vmem:[#allocation5 + $0x118] sm:$0xff]
        %v1166 = vld [vmem:[#allocation5 + $0x120] sm:$0xff]
        %v1167 = vld [vmem:[#allocation5 + $0x128] sm:$0xff]
        %v1168 = vld [vmem:[#allocation5 + $0x130] sm:$0xff]
        %v1169 = vld [vmem:[#allocation5 + $0x138] sm:$0xff]
        %v1170 = vld [vmem:[#allocation5 + $0x140] sm:$0xff]
        %v1171 = vld [vmem:[#allocation5 + $0x148] sm:$0xff]
        %v1172 = vld [vmem:[#allocation5 + $0x150] sm:$0xff]
        %v1173 = vld [vmem:[#allocation5 + $0x158] sm:$0xff]
        %v1174 = vld [vmem:[#allocation5 + $0x160] sm:$0xff]
        %v1175 = vld [vmem:[#allocation5 + $0x168] sm:$0xff]
        %v1176 = vld [vmem:[#allocation5 + $0x170] sm:$0xff]
        %v1177 = vld [vmem:[#allocation5 + $0x178] sm:$0xff]
        %v1178 = vld [vmem:[#allocation5 + $0x180] sm:$0xff]
        %v1179 = vld [vmem:[#allocation5 + $0x188] sm:$0xff]
        %v1180 = vld [vmem:[#allocation5 + $0x190] sm:$0xff]
        %v1181 = vld [vmem:[#allocation5 + $0x198] sm:$0xff]
        %v1182 = vld [vmem:[#allocation5 + $0x1a0] sm:$0xff]
        %v1183 = vld [vmem:[#allocation5 + $0x1a8] sm:$0xff]
        %v1184 = vld [vmem:[#allocation5 + $0x1b0] sm:$0xff]
        %v1185 = vld [vmem:[#allocation5 + $0x1b8] sm:$0xff]
        %v1186 = vld [vmem:[#allocation5 + $0x1c0] sm:$0xff]
        %v1187 = vld [vmem:[#allocation5 + $0x1c8] sm:$0xff]
        %v1188 = vld [vmem:[#allocation5 + $0x1d0] sm:$0xff]
        %v1189 = vld [vmem:[#allocation5 + $0x1d8] sm:$0xff]
        %v1190 = vld [vmem:[#allocation5 + $0x1e0] sm:$0xff]
        %v1191 = vld [vmem:[#allocation5 + $0x1e8] sm:$0xff]
        %v1192 = vld [vmem:[#allocation5 + $0x1f0] sm:$0xff]
        %v1193 = vld [vmem:[#allocation5 + $0x1f8] sm:$0xff]
        %v1258 = vunpack.c.l.b16 %v1130
        %v1259 = vunpack.c.h.b16 %v1130
        %v1260 = vunpack.c.l.b16 %v1131
        %v1261 = vunpack.c.h.b16 %v1131
        %v1262 = vunpack.c.l.b16 %v1132
        %v1263 = vunpack.c.h.b16 %v1132
        %v1264 = vunpack.c.l.b16 %v1133
        %v1265 = vunpack.c.h.b16 %v1133
        %v1266 = vunpack.c.l.b16 %v1134
        %v1267 = vunpack.c.h.b16 %v1134
        %v1268 = vunpack.c.l.b16 %v1135
        %v1269 = vunpack.c.h.b16 %v1135
        %v1270 = vunpack.c.l.b16 %v1136
        %v1271 = vunpack.c.h.b16 %v1136
        %v1272 = vunpack.c.l.b16 %v1137
        %v1273 = vunpack.c.h.b16 %v1137
        %v1274 = vunpack.c.l.b16 %v1138
        %v1275 = vunpack.c.h.b16 %v1138
        %v1276 = vunpack.c.l.b16 %v1139
        %v1277 = vunpack.c.h.b16 %v1139
        %v1278 = vunpack.c.l.b16 %v1140
        %v1279 = vunpack.c.h.b16 %v1140
        %v1280 = vunpack.c.l.b16 %v1141
        %v1281 = vunpack.c.h.b16 %v1141
        %v1282 = vunpack.c.l.b16 %v1142
        %v1283 = vunpack.c.h.b16 %v1142
        %v1284 = vunpack.c.l.b16 %v1143
        %v1285 = vunpack.c.h.b16 %v1143
        %v1286 = vunpack.c.l.b16 %v1144
        %v1287 = vunpack.c.h.b16 %v1144
        %v1288 = vunpack.c.l.b16 %v1145
        %v1289 = vunpack.c.h.b16 %v1145
        %v1290 = vunpack.c.l.b16 %v1146
        %v1291 = vunpack.c.h.b16 %v1146
        %v1292 = vunpack.c.l.b16 %v1147
        %v1293 = vunpack.c.h.b16 %v1147
        %v1294 = vunpack.c.l.b16 %v1148
        %v1295 = vunpack.c.h.b16 %v1148
        %v1296 = vunpack.c.l.b16 %v1149
        %v1297 = vunpack.c.h.b16 %v1149
        %v1298 = vunpack.c.l.b16 %v1150
        %v1299 = vunpack.c.h.b16 %v1150
        %v1300 = vunpack.c.l.b16 %v1151
        %v1301 = vunpack.c.h.b16 %v1151
        %v1302 = vunpack.c.l.b16 %v1152
        %v1303 = vunpack.c.h.b16 %v1152
        %v1304 = vunpack.c.l.b16 %v1153
        %v1305 = vunpack.c.h.b16 %v1153
        %v1306 = vunpack.c.l.b16 %v1154
        %v1307 = vunpack.c.h.b16 %v1154
        %v1308 = vunpack.c.l.b16 %v1155
        %v1309 = vunpack.c.h.b16 %v1155
        %v1310 = vunpack.c.l.b16 %v1156
        %v1311 = vunpack.c.h.b16 %v1156
        %v1312 = vunpack.c.l.b16 %v1157
        %v1313 = vunpack.c.h.b16 %v1157
        %v1314 = vunpack.c.l.b16 %v1158
        %v1315 = vunpack.c.h.b16 %v1158
        %v1316 = vunpack.c.l.b16 %v1159
        %v1317 = vunpack.c.h.b16 %v1159
        %v1318 = vunpack.c.l.b16 %v1160
        %v1319 = vunpack.c.h.b16 %v1160
        %v1320 = vunpack.c.l.b16 %v1161
        %v1321 = vunpack.c.h.b16 %v1161
        %v1322 = vunpack.c.l.b16 %v1162
        %v1323 = vunpack.c.h.b16 %v1162
        %v1324 = vunpack.c.l.b16 %v1163
        %v1325 = vunpack.c.h.b16 %v1163
        %v1326 = vunpack.c.l.b16 %v1164
        %v1327 = vunpack.c.h.b16 %v1164
        %v1328 = vunpack.c.l.b16 %v1165
        %v1329 = vunpack.c.h.b16 %v1165
        %v1330 = vunpack.c.l.b16 %v1166
        %v1331 = vunpack.c.h.b16 %v1166
        %v1332 = vunpack.c.l.b16 %v1167
        %v1333 = vunpack.c.h.b16 %v1167
        %v1334 = vunpack.c.l.b16 %v1168
        %v1335 = vunpack.c.h.b16 %v1168
        %v1336 = vunpack.c.l.b16 %v1169
        %v1337 = vunpack.c.h.b16 %v1169
        %v1338 = vunpack.c.l.b16 %v1170
        %v1339 = vunpack.c.h.b16 %v1170
        %v1340 = vunpack.c.l.b16 %v1171
        %v1341 = vunpack.c.h.b16 %v1171
        %v1342 = vunpack.c.l.b16 %v1172
        %v1343 = vunpack.c.h.b16 %v1172
        %v1344 = vunpack.c.l.b16 %v1173
        %v1345 = vunpack.c.h.b16 %v1173
        %v1346 = vunpack.c.l.b16 %v1174
        %v1347 = vunpack.c.h.b16 %v1174
        %v1348 = vunpack.c.l.b16 %v1175
        %v1349 = vunpack.c.h.b16 %v1175
        %v1350 = vunpack.c.l.b16 %v1176
        %v1351 = vunpack.c.h.b16 %v1176
        %v1352 = vunpack.c.l.b16 %v1177
        %v1353 = vunpack.c.h.b16 %v1177
        %v1354 = vunpack.c.l.b16 %v1178
        %v1355 = vunpack.c.h.b16 %v1178
        %v1356 = vunpack.c.l.b16 %v1179
        %v1357 = vunpack.c.h.b16 %v1179
        %v1358 = vunpack.c.l.b16 %v1180
        %v1359 = vunpack.c.h.b16 %v1180
        %v1360 = vunpack.c.l.b16 %v1181
        %v1361 = vunpack.c.h.b16 %v1181
        %v1362 = vunpack.c.l.b16 %v1182
        %v1363 = vunpack.c.h.b16 %v1182
        %v1364 = vunpack.c.l.b16 %v1183
        %v1365 = vunpack.c.h.b16 %v1183
        %v1366 = vunpack.c.l.b16 %v1184
        %v1367 = vunpack.c.h.b16 %v1184
        %v1368 = vunpack.c.l.b16 %v1185
        %v1369 = vunpack.c.h.b16 %v1185
        %v1370 = vunpack.c.l.b16 %v1186
        %v1371 = vunpack.c.h.b16 %v1186
        %v1372 = vunpack.c.l.b16 %v1187
        %v1373 = vunpack.c.h.b16 %v1187
        %v1374 = vunpack.c.l.b16 %v1188
        %v1375 = vunpack.c.h.b16 %v1188
        %v1376 = vunpack.c.l.b16 %v1189
        %v1377 = vunpack.c.h.b16 %v1189
        %v1378 = vunpack.c.l.b16 %v1190
        %v1379 = vunpack.c.h.b16 %v1190
        %v1380 = vunpack.c.l.b16 %v1191
        %v1381 = vunpack.c.h.b16 %v1191
        %v1382 = vunpack.c.l.b16 %v1192
        %v1383 = vunpack.c.h.b16 %v1192
        %v1384 = vunpack.c.l.b16 %v1193
        %v1385 = vunpack.c.h.b16 %v1193
        %v1386 = vpack.c.b16 %v1262, %v1258
        %v1387 = vpack.c.b16 %v1263, %v1259
        %v1388 = vpack.c.b16 %v1264, %v1260
        %v1389 = vpack.c.b16 %v1265, %v1261
        %v1390 = vpack.c.b16 %v1270, %v1266
        %v1391 = vpack.c.b16 %v1271, %v1267
        %v1392 = vpack.c.b16 %v1272, %v1268
        %v1393 = vpack.c.b16 %v1273, %v1269
        %v1394 = vpack.c.b16 %v1278, %v1274
        %v1395 = vpack.c.b16 %v1279, %v1275
        %v1396 = vpack.c.b16 %v1280, %v1276
        %v1397 = vpack.c.b16 %v1281, %v1277
        %v1398 = vpack.c.b16 %v1286, %v1282
        %v1399 = vpack.c.b16 %v1287, %v1283
        %v1400 = vpack.c.b16 %v1288, %v1284
        %v1401 = vpack.c.b16 %v1289, %v1285
        %v1402 = vpack.c.b16 %v1294, %v1290
        %v1403 = vpack.c.b16 %v1295, %v1291
        %v1404 = vpack.c.b16 %v1296, %v1292
        %v1405 = vpack.c.b16 %v1297, %v1293
        %v1406 = vpack.c.b16 %v1302, %v1298
        %v1407 = vpack.c.b16 %v1303, %v1299
        %v1408 = vpack.c.b16 %v1304, %v1300
        %v1409 = vpack.c.b16 %v1305, %v1301
        %v1410 = vpack.c.b16 %v1310, %v1306
        %v1411 = vpack.c.b16 %v1311, %v1307
        %v1412 = vpack.c.b16 %v1312, %v1308
        %v1413 = vpack.c.b16 %v1313, %v1309
        %v1414 = vpack.c.b16 %v1318, %v1314
        %v1415 = vpack.c.b16 %v1319, %v1315
        %v1416 = vpack.c.b16 %v1320, %v1316
        %v1417 = vpack.c.b16 %v1321, %v1317
        %v1418 = vpack.c.b16 %v1326, %v1322
        %v1419 = vpack.c.b16 %v1327, %v1323
        %v1420 = vpack.c.b16 %v1328, %v1324
        %v1421 = vpack.c.b16 %v1329, %v1325
        %v1422 = vpack.c.b16 %v1334, %v1330
        %v1423 = vpack.c.b16 %v1335, %v1331
        %v1424 = vpack.c.b16 %v1336, %v1332
        %v1425 = vpack.c.b16 %v1337, %v1333
        %v1426 = vpack.c.b16 %v1342, %v1338
        %v1427 = vpack.c.b16 %v1343, %v1339
        %v1428 = vpack.c.b16 %v1344, %v1340
        %v1429 = vpack.c.b16 %v1345, %v1341
        %v1430 = vpack.c.b16 %v1350, %v1346
        %v1431 = vpack.c.b16 %v1351, %v1347
        %v1432 = vpack.c.b16 %v1352, %v1348
        %v1433 = vpack.c.b16 %v1353, %v1349
        %v1434 = vpack.c.b16 %v1358, %v1354
        %v1435 = vpack.c.b16 %v1359, %v1355
        %v1436 = vpack.c.b16 %v1360, %v1356
        %v1437 = vpack.c.b16 %v1361, %v1357
        %v1438 = vpack.c.b16 %v1366, %v1362
        %v1439 = vpack.c.b16 %v1367, %v1363
        %v1440 = vpack.c.b16 %v1368, %v1364
        %v1441 = vpack.c.b16 %v1369, %v1365
        %v1442 = vpack.c.b16 %v1374, %v1370
        %v1443 = vpack.c.b16 %v1375, %v1371
        %v1444 = vpack.c.b16 %v1376, %v1372
        %v1445 = vpack.c.b16 %v1377, %v1373
        %v1446 = vpack.c.b16 %v1382, %v1378
        %v1447 = vpack.c.b16 %v1383, %v1379
        %v1448 = vpack.c.b16 %v1384, %v1380
        %v1449 = vpack.c.b16 %v1385, %v1381
        %1514 = vmatpush.bf16.msra.mxu0 %v1414
        %1515 = vmatpush.bf16.msra.mxu0 %v1410
        %1516 = vmatpush.bf16.msra.mxu0 %v1406
        %1517 = vmatpush.bf16.msra.mxu0 %v1402
        %1518 = vmatpush.bf16.msra.mxu0 %v1398
        %1519 = vmatpush.bf16.msra.mxu0 %v1394
        %1520 = vmatpush.bf16.msra.mxu0 %v1390
        %1521 = vmatpush.bf16.msra.mxu0 %v1386
        %1522 = vmatmul.bf16.gmra.mxu0 %v1114
        %v1523 = vpop.f32.mrf.mxu0
        %v1524 = vadd.f32 0.0, %v1523
        %v1525 = vpop.f32.mrf.mxu0
        %v1526 = vadd.f32 0.0, %v1525
        %1527 = vmatmul.bf16.gmra.mxu0 %v1116
        %v1528 = vpop.f32.mrf.mxu0
        %v1529 = vadd.f32 0.0, %v1528
        %v1530 = vpop.f32.mrf.mxu0
        %v1531 = vadd.f32 0.0, %v1530
        %1532 = vmatmul.bf16.gmra.mxu0 %v1118
        %v1533 = vpop.f32.mrf.mxu0
        %v1534 = vadd.f32 0.0, %v1533
        %v1535 = vpop.f32.mrf.mxu0
        %v1536 = vadd.f32 0.0, %v1535
        %1537 = vmatmul.bf16.gmra.mxu0 %v1120
        %v1538 = vpop.f32.mrf.mxu0
        %v1539 = vadd.f32 0.0, %v1538
        %v1540 = vpop.f32.mrf.mxu0
        %v1541 = vadd.f32 0.0, %v1540
        %1542 = vmatmul.bf16.gmra.mxu0 %v1122
        %v1543 = vpop.f32.mrf.mxu0
        %v1544 = vadd.f32 0.0, %v1543
        %v1545 = vpop.f32.mrf.mxu0
        %v1546 = vadd.f32 0.0, %v1545
        %1547 = vmatmul.bf16.gmra.mxu0 %v1124
        %v1548 = vpop.f32.mrf.mxu0
        %v1549 = vadd.f32 0.0, %v1548
        %v1550 = vpop.f32.mrf.mxu0
        %v1551 = vadd.f32 0.0, %v1550
        %1552 = vmatmul.bf16.gmra.mxu0 %v1126
        %v1553 = vpop.f32.mrf.mxu0
        %v1554 = vadd.f32 0.0, %v1553
        %v1555 = vpop.f32.mrf.mxu0
        %v1556 = vadd.f32 0.0, %v1555
        %1557 = vmatmul.bf16.gmra.mxu0 %v1128
        %v1558 = vpop.f32.mrf.mxu0
        %v1559 = vadd.f32 0.0, %v1558
        %v1560 = vpop.f32.mrf.mxu0
        %v1561 = vadd.f32 0.0, %v1560
        %1562 = vdwg.mxu0
        %1563 = vmatpush.bf16.msra.mxu0 %v1446
        %1564 = vmatpush.bf16.msra.mxu0 %v1442
        %1565 = vmatpush.bf16.msra.mxu0 %v1438
        %1566 = vmatpush.bf16.msra.mxu0 %v1434
        %1567 = vmatpush.bf16.msra.mxu0 %v1430
        %1568 = vmatpush.bf16.msra.mxu0 %v1426
        %1569 = vmatpush.bf16.msra.mxu0 %v1422
        %1570 = vmatpush.bf16.msra.mxu0 %v1418
        %1571 = vmatmul.bf16.gmra.mxu0 %v1115
        %v1572 = vpop.f32.mrf.mxu0
        %v1573 = vadd.f32 %v1524, %v1572
        %v1574 = vpop.f32.mrf.mxu0
        %v1575 = vadd.f32 %v1526, %v1574
        %1576 = vmatmul.bf16.gmra.mxu0 %v1117
        %v1577 = vpop.f32.mrf.mxu0
        %v1578 = vadd.f32 %v1529, %v1577
        %v1579 = vpop.f32.mrf.mxu0
        %v1580 = vadd.f32 %v1531, %v1579
        %1581 = vmatmul.bf16.gmra.mxu0 %v1119
        %v1582 = vpop.f32.mrf.mxu0
        %v1583 = vadd.f32 %v1534, %v1582
        %v1584 = vpop.f32.mrf.mxu0
        %v1585 = vadd.f32 %v1536, %v1584
        %1586 = vmatmul.bf16.gmra.mxu0 %v1121
        %v1587 = vpop.f32.mrf.mxu0
        %v1588 = vadd.f32 %v1539, %v1587
        %v1589 = vpop.f32.mrf.mxu0
        %v1590 = vadd.f32 %v1541, %v1589
        %1591 = vmatmul.bf16.gmra.mxu0 %v1123
        %v1592 = vpop.f32.mrf.mxu0
        %v1593 = vadd.f32 %v1544, %v1592
        %v1594 = vpop.f32.mrf.mxu0
        %v1595 = vadd.f32 %v1546, %v1594
        %1596 = vmatmul.bf16.gmra.mxu0 %v1125
        %v1597 = vpop.f32.mrf.mxu0
        %v1598 = vadd.f32 %v1549, %v1597
        %v1599 = vpop.f32.mrf.mxu0
        %v1600 = vadd.f32 %v1551, %v1599
        %1601 = vmatmul.bf16.gmra.mxu0 %v1127
        %v1602 = vpop.f32.mrf.mxu0
        %v1603 = vadd.f32 %v1554, %v1602
        %v1604 = vpop.f32.mrf.mxu0
        %v1605 = vadd.f32 %v1556, %v1604
        %1606 = vmatmul.bf16.gmra.mxu0 %v1129
        %v1607 = vpop.f32.mrf.mxu0
        %v1608 = vadd.f32 %v1559, %v1607
        %v1609 = vpop.f32.mrf.mxu0
        %v1610 = vadd.f32 %v1561, %v1609
        %1611 = vdwg.mxu0
        %1612 = vmatpush.bf16.msra.mxu0 %v1415
        %1613 = vmatpush.bf16.msra.mxu0 %v1411
        %1614 = vmatpush.bf16.msra.mxu0 %v1407
        %1615 = vmatpush.bf16.msra.mxu0 %v1403
        %1616 = vmatpush.bf16.msra.mxu0 %v1399
        %1617 = vmatpush.bf16.msra.mxu0 %v1395
        %1618 = vmatpush.bf16.msra.mxu0 %v1391
        %1619 = vmatpush.bf16.msra.mxu0 %v1387
        %1620 = vmatmul.bf16.gmra.mxu0 %v1114
        %v1621 = vpop.f32.mrf.mxu0
        %v1622 = vadd.f32 0.0, %v1621
        %v1623 = vpop.f32.mrf.mxu0
        %v1624 = vadd.f32 0.0, %v1623
        %1625 = vmatmul.bf16.gmra.mxu0 %v1116
        %v1626 = vpop.f32.mrf.mxu0
        %v1627 = vadd.f32 0.0, %v1626
        %v1628 = vpop.f32.mrf.mxu0
        %v1629 = vadd.f32 0.0, %v1628
        %1630 = vmatmul.bf16.gmra.mxu0 %v1118
        %v1631 = vpop.f32.mrf.mxu0
        %v1632 = vadd.f32 0.0, %v1631
        %v1633 = vpop.f32.mrf.mxu0
        %v1634 = vadd.f32 0.0, %v1633
        %1635 = vmatmul.bf16.gmra.mxu0 %v1120
        %v1636 = vpop.f32.mrf.mxu0
        %v1637 = vadd.f32 0.0, %v1636
        %v1638 = vpop.f32.mrf.mxu0
        %v1639 = vadd.f32 0.0, %v1638
        %1640 = vmatmul.bf16.gmra.mxu0 %v1122
        %v1641 = vpop.f32.mrf.mxu0
        %v1642 = vadd.f32 0.0, %v1641
        %v1643 = vpop.f32.mrf.mxu0
        %v1644 = vadd.f32 0.0, %v1643
        %1645 = vmatmul.bf16.gmra.mxu0 %v1124
        %v1646 = vpop.f32.mrf.mxu0
        %v1647 = vadd.f32 0.0, %v1646
        %v1648 = vpop.f32.mrf.mxu0
        %v1649 = vadd.f32 0.0, %v1648
        %1650 = vmatmul.bf16.gmra.mxu0 %v1126
        %v1651 = vpop.f32.mrf.mxu0
        %v1652 = vadd.f32 0.0, %v1651
        %v1653 = vpop.f32.mrf.mxu0
        %v1654 = vadd.f32 0.0, %v1653
        %1655 = vmatmul.bf16.gmra.mxu0 %v1128
        %v1656 = vpop.f32.mrf.mxu0
        %v1657 = vadd.f32 0.0, %v1656
        %v1658 = vpop.f32.mrf.mxu0
        %v1659 = vadd.f32 0.0, %v1658
        %1660 = vdwg.mxu0
        %1661 = vmatpush.bf16.msra.mxu0 %v1447
        %1662 = vmatpush.bf16.msra.mxu0 %v1443
        %1663 = vmatpush.bf16.msra.mxu0 %v1439
        %1664 = vmatpush.bf16.msra.mxu0 %v1435
        %1665 = vmatpush.bf16.msra.mxu0 %v1431
        %1666 = vmatpush.bf16.msra.mxu0 %v1427
        %1667 = vmatpush.bf16.msra.mxu0 %v1423
        %1668 = vmatpush.bf16.msra.mxu0 %v1419
        %1669 = vmatmul.bf16.gmra.mxu0 %v1115
        %v1670 = vpop.f32.mrf.mxu0
        %v1671 = vadd.f32 %v1622, %v1670
        %v1672 = vpop.f32.mrf.mxu0
        %v1673 = vadd.f32 %v1624, %v1672
        %1674 = vmatmul.bf16.gmra.mxu0 %v1117
        %v1675 = vpop.f32.mrf.mxu0
        %v1676 = vadd.f32 %v1627, %v1675
        %v1677 = vpop.f32.mrf.mxu0
        %v1678 = vadd.f32 %v1629, %v1677
        %1679 = vmatmul.bf16.gmra.mxu0 %v1119
        %v1680 = vpop.f32.mrf.mxu0
        %v1681 = vadd.f32 %v1632, %v1680
        %v1682 = vpop.f32.mrf.mxu0
        %v1683 = vadd.f32 %v1634, %v1682
        %1684 = vmatmul.bf16.gmra.mxu0 %v1121
        %v1685 = vpop.f32.mrf.mxu0
        %v1686 = vadd.f32 %v1637, %v1685
        %v1687 = vpop.f32.mrf.mxu0
        %v1688 = vadd.f32 %v1639, %v1687
        %1689 = vmatmul.bf16.gmra.mxu0 %v1123
        %v1690 = vpop.f32.mrf.mxu0
        %v1691 = vadd.f32 %v1642, %v1690
        %v1692 = vpop.f32.mrf.mxu0
        %v1693 = vadd.f32 %v1644, %v1692
        %1694 = vmatmul.bf16.gmra.mxu0 %v1125
        %v1695 = vpop.f32.mrf.mxu0
        %v1696 = vadd.f32 %v1647, %v1695
        %v1697 = vpop.f32.mrf.mxu0
        %v1698 = vadd.f32 %v1649, %v1697
        %1699 = vmatmul.bf16.gmra.mxu0 %v1127
        %v1700 = vpop.f32.mrf.mxu0
        %v1701 = vadd.f32 %v1652, %v1700
        %v1702 = vpop.f32.mrf.mxu0
        %v1703 = vadd.f32 %v1654, %v1702
        %1704 = vmatmul.bf16.gmra.mxu0 %v1129
        %v1705 = vpop.f32.mrf.mxu0
        %v1706 = vadd.f32 %v1657, %v1705
        %v1707 = vpop.f32.mrf.mxu0
        %v1708 = vadd.f32 %v1659, %v1707
        %1709 = vdwg.mxu0
        %1710 = vmatpush.bf16.msra.mxu0 %v1416
        %1711 = vmatpush.bf16.msra.mxu0 %v1412
        %1712 = vmatpush.bf16.msra.mxu0 %v1408
        %1713 = vmatpush.bf16.msra.mxu0 %v1404
        %1714 = vmatpush.bf16.msra.mxu0 %v1400
        %1715 = vmatpush.bf16.msra.mxu0 %v1396
        %1716 = vmatpush.bf16.msra.mxu0 %v1392
        %1717 = vmatpush.bf16.msra.mxu0 %v1388
        %1718 = vmatmul.bf16.gmra.mxu0 %v1114
        %v1719 = vpop.f32.mrf.mxu0
        %v1720 = vadd.f32 0.0, %v1719
        %v1721 = vpop.f32.mrf.mxu0
        %v1722 = vadd.f32 0.0, %v1721
        %1723 = vmatmul.bf16.gmra.mxu0 %v1116
        %v1724 = vpop.f32.mrf.mxu0
        %v1725 = vadd.f32 0.0, %v1724
        %v1726 = vpop.f32.mrf.mxu0
        %v1727 = vadd.f32 0.0, %v1726
        %1728 = vmatmul.bf16.gmra.mxu0 %v1118
        %v1729 = vpop.f32.mrf.mxu0
        %v1730 = vadd.f32 0.0, %v1729
        %v1731 = vpop.f32.mrf.mxu0
        %v1732 = vadd.f32 0.0, %v1731
        %1733 = vmatmul.bf16.gmra.mxu0 %v1120
        %v1734 = vpop.f32.mrf.mxu0
        %v1735 = vadd.f32 0.0, %v1734
        %v1736 = vpop.f32.mrf.mxu0
        %v1737 = vadd.f32 0.0, %v1736
        %1738 = vmatmul.bf16.gmra.mxu0 %v1122
        %v1739 = vpop.f32.mrf.mxu0
        %v1740 = vadd.f32 0.0, %v1739
        %v1741 = vpop.f32.mrf.mxu0
        %v1742 = vadd.f32 0.0, %v1741
        %1743 = vmatmul.bf16.gmra.mxu0 %v1124
        %v1744 = vpop.f32.mrf.mxu0
        %v1745 = vadd.f32 0.0, %v1744
        %v1746 = vpop.f32.mrf.mxu0
        %v1747 = vadd.f32 0.0, %v1746
        %1748 = vmatmul.bf16.gmra.mxu0 %v1126
        %v1749 = vpop.f32.mrf.mxu0
        %v1750 = vadd.f32 0.0, %v1749
        %v1751 = vpop.f32.mrf.mxu0
        %v1752 = vadd.f32 0.0, %v1751
        %1753 = vmatmul.bf16.gmra.mxu0 %v1128
        %v1754 = vpop.f32.mrf.mxu0
        %v1755 = vadd.f32 0.0, %v1754
        %v1756 = vpop.f32.mrf.mxu0
        %v1757 = vadd.f32 0.0, %v1756
        %1758 = vdwg.mxu0
        %1759 = vmatpush.bf16.msra.mxu0 %v1448
        %1760 = vmatpush.bf16.msra.mxu0 %v1444
        %1761 = vmatpush.bf16.msra.mxu0 %v1440
        %1762 = vmatpush.bf16.msra.mxu0 %v1436
        %1763 = vmatpush.bf16.msra.mxu0 %v1432
        %1764 = vmatpush.bf16.msra.mxu0 %v1428
        %1765 = vmatpush.bf16.msra.mxu0 %v1424
        %1766 = vmatpush.bf16.msra.mxu0 %v1420
        %1767 = vmatmul.bf16.gmra.mxu0 %v1115
        %v1768 = vpop.f32.mrf.mxu0
        %v1769 = vadd.f32 %v1720, %v1768
        %v1770 = vpop.f32.mrf.mxu0
        %v1771 = vadd.f32 %v1722, %v1770
        %1772 = vmatmul.bf16.gmra.mxu0 %v1117
        %v1773 = vpop.f32.mrf.mxu0
        %v1774 = vadd.f32 %v1725, %v1773
        %v1775 = vpop.f32.mrf.mxu0
        %v1776 = vadd.f32 %v1727, %v1775
        %1777 = vmatmul.bf16.gmra.mxu0 %v1119
        %v1778 = vpop.f32.mrf.mxu0
        %v1779 = vadd.f32 %v1730, %v1778
        %v1780 = vpop.f32.mrf.mxu0
        %v1781 = vadd.f32 %v1732, %v1780
        %1782 = vmatmul.bf16.gmra.mxu0 %v1121
        %v1783 = vpop.f32.mrf.mxu0
        %v1784 = vadd.f32 %v1735, %v1783
        %v1785 = vpop.f32.mrf.mxu0
        %v1786 = vadd.f32 %v1737, %v1785
        %1787 = vmatmul.bf16.gmra.mxu0 %v1123
        %v1788 = vpop.f32.mrf.mxu0
        %v1789 = vadd.f32 %v1740, %v1788
        %v1790 = vpop.f32.mrf.mxu0
        %v1791 = vadd.f32 %v1742, %v1790
        %1792 = vmatmul.bf16.gmra.mxu0 %v1125
        %v1793 = vpop.f32.mrf.mxu0
        %v1794 = vadd.f32 %v1745, %v1793
        %v1795 = vpop.f32.mrf.mxu0
        %v1796 = vadd.f32 %v1747, %v1795
        %1797 = vmatmul.bf16.gmra.mxu0 %v1127
        %v1798 = vpop.f32.mrf.mxu0
        %v1799 = vadd.f32 %v1750, %v1798
        %v1800 = vpop.f32.mrf.mxu0
        %v1801 = vadd.f32 %v1752, %v1800
        %1802 = vmatmul.bf16.gmra.mxu0 %v1129
        %v1803 = vpop.f32.mrf.mxu0
        %v1804 = vadd.f32 %v1755, %v1803
        %v1805 = vpop.f32.mrf.mxu0
        %v1806 = vadd.f32 %v1757, %v1805
        %1807 = vdwg.mxu0
        %1808 = vmatpush.bf16.msra.mxu0 %v1417
        %1809 = vmatpush.bf16.msra.mxu0 %v1413
        %1810 = vmatpush.bf16.msra.mxu0 %v1409
        %1811 = vmatpush.bf16.msra.mxu0 %v1405
        %1812 = vmatpush.bf16.msra.mxu0 %v1401
        %1813 = vmatpush.bf16.msra.mxu0 %v1397
        %1814 = vmatpush.bf16.msra.mxu0 %v1393
        %1815 = vmatpush.bf16.msra.mxu0 %v1389
        %1816 = vmatmul.bf16.gmra.mxu0 %v1114
        %v1817 = vpop.f32.mrf.mxu0
        %v1818 = vadd.f32 0.0, %v1817
        %v1819 = vpop.f32.mrf.mxu0
        %v1820 = vadd.f32 0.0, %v1819
        %1821 = vmatmul.bf16.gmra.mxu0 %v1116
        %v1822 = vpop.f32.mrf.mxu0
        %v1823 = vadd.f32 0.0, %v1822
        %v1824 = vpop.f32.mrf.mxu0
        %v1825 = vadd.f32 0.0, %v1824
        %1826 = vmatmul.bf16.gmra.mxu0 %v1118
        %v1827 = vpop.f32.mrf.mxu0
        %v1828 = vadd.f32 0.0, %v1827
        %v1829 = vpop.f32.mrf.mxu0
        %v1830 = vadd.f32 0.0, %v1829
        %1831 = vmatmul.bf16.gmra.mxu0 %v1120
        %v1832 = vpop.f32.mrf.mxu0
        %v1833 = vadd.f32 0.0, %v1832
        %v1834 = vpop.f32.mrf.mxu0
        %v1835 = vadd.f32 0.0, %v1834
        %1836 = vmatmul.bf16.gmra.mxu0 %v1122
        %v1837 = vpop.f32.mrf.mxu0
        %v1838 = vadd.f32 0.0, %v1837
        %v1839 = vpop.f32.mrf.mxu0
        %v1840 = vadd.f32 0.0, %v1839
        %1841 = vmatmul.bf16.gmra.mxu0 %v1124
        %v1842 = vpop.f32.mrf.mxu0
        %v1843 = vadd.f32 0.0, %v1842
        %v1844 = vpop.f32.mrf.mxu0
        %v1845 = vadd.f32 0.0, %v1844
        %1846 = vmatmul.bf16.gmra.mxu0 %v1126
        %v1847 = vpop.f32.mrf.mxu0
        %v1848 = vadd.f32 0.0, %v1847
        %v1849 = vpop.f32.mrf.mxu0
        %v1850 = vadd.f32 0.0, %v1849
        %1851 = vmatmul.bf16.gmra.mxu0 %v1128
        %v1852 = vpop.f32.mrf.mxu0
        %v1853 = vadd.f32 0.0, %v1852
        %v1854 = vpop.f32.mrf.mxu0
        %v1855 = vadd.f32 0.0, %v1854
        %1856 = vdwg.mxu0
        %1857 = vmatpush.bf16.msra.mxu0 %v1449
        %1858 = vmatpush.bf16.msra.mxu0 %v1445
        %1859 = vmatpush.bf16.msra.mxu0 %v1441
        %1860 = vmatpush.bf16.msra.mxu0 %v1437
        %1861 = vmatpush.bf16.msra.mxu0 %v1433
        %1862 = vmatpush.bf16.msra.mxu0 %v1429
        %1863 = vmatpush.bf16.msra.mxu0 %v1425
        %1864 = vmatpush.bf16.msra.mxu0 %v1421
        %1865 = vmatmul.bf16.gmra.mxu0 %v1115
        %v1866 = vpop.f32.mrf.mxu0
        %v1867 = vadd.f32 %v1818, %v1866
        %v1868 = vpop.f32.mrf.mxu0
        %v1869 = vadd.f32 %v1820, %v1868
        %1870 = vmatmul.bf16.gmra.mxu0 %v1117
        %v1871 = vpop.f32.mrf.mxu0
        %v1872 = vadd.f32 %v1823, %v1871
        %v1873 = vpop.f32.mrf.mxu0
        %v1874 = vadd.f32 %v1825, %v1873
        %1875 = vmatmul.bf16.gmra.mxu0 %v1119
        %v1876 = vpop.f32.mrf.mxu0
        %v1877 = vadd.f32 %v1828, %v1876
        %v1878 = vpop.f32.mrf.mxu0
        %v1879 = vadd.f32 %v1830, %v1878
        %1880 = vmatmul.bf16.gmra.mxu0 %v1121
        %v1881 = vpop.f32.mrf.mxu0
        %v1882 = vadd.f32 %v1833, %v1881
        %v1883 = vpop.f32.mrf.mxu0
        %v1884 = vadd.f32 %v1835, %v1883
        %1885 = vmatmul.bf16.gmra.mxu0 %v1123
        %v1886 = vpop.f32.mrf.mxu0
        %v1887 = vadd.f32 %v1838, %v1886
        %v1888 = vpop.f32.mrf.mxu0
        %v1889 = vadd.f32 %v1840, %v1888
        %1890 = vmatmul.bf16.gmra.mxu0 %v1125
        %v1891 = vpop.f32.mrf.mxu0
        %v1892 = vadd.f32 %v1843, %v1891
        %v1893 = vpop.f32.mrf.mxu0
        %v1894 = vadd.f32 %v1845, %v1893
        %1895 = vmatmul.bf16.gmra.mxu0 %v1127
        %v1896 = vpop.f32.mrf.mxu0
        %v1897 = vadd.f32 %v1848, %v1896
        %v1898 = vpop.f32.mrf.mxu0
        %v1899 = vadd.f32 %v1850, %v1898
        %1900 = vmatmul.bf16.gmra.mxu0 %v1129
        %v1901 = vpop.f32.mrf.mxu0
        %v1902 = vadd.f32 %v1853, %v1901
        %v1903 = vpop.f32.mrf.mxu0
        %v1904 = vadd.f32 %v1855, %v1903
        %1905 = vdwg.mxu0
        %1906 = vmatpush.msra.mxu0 %v1610
        %1907 = vmatpush.msra.mxu0 %v1608
        %1908 = vmatpush.msra.mxu0 %v1605
        %1909 = vmatpush.msra.mxu0 %v1603
        %1910 = vmatpush.msra.mxu0 %v1600
        %1911 = vmatpush.msra.mxu0 %v1598
        %1912 = vmatpush.msra.mxu0 %v1595
        %1913 = vmatpush.msra.mxu0 %v1593
        %1914 = vmatpush.msra.mxu0 %v1590
        %1915 = vmatpush.msra.mxu0 %v1588
        %1916 = vmatpush.msra.mxu0 %v1585
        %1917 = vmatpush.msra.mxu0 %v1583
        %1918 = vmatpush.msra.mxu0 %v1580
        %1919 = vmatpush.msra.mxu0 %v1578
        %1920 = vmatpush.msra.mxu0 %v1575
        %1921 = vmatpush.msra.mxu0 %v1573
        %1922 = vmatmul.f32.gmra.mxu0 %v498
        %v1923 = vpop.f32.mrf.mxu0
        %v1924 = vadd.f32 0.0, %v1923
        %1925 = vmatmul.f32.gmra.mxu0 %v499
        %v1926 = vpop.f32.mrf.mxu0
        %v1927 = vadd.f32 0.0, %v1926
        %1928 = vmatmul.f32.gmra.mxu0 %v500
        %v1929 = vpop.f32.mrf.mxu0
        %v1930 = vadd.f32 0.0, %v1929
        %1931 = vmatmul.f32.gmra.mxu0 %v501
        %v1932 = vpop.f32.mrf.mxu0
        %v1933 = vadd.f32 0.0, %v1932
        %1934 = vmatmul.f32.gmra.mxu0 %v502
        %v1935 = vpop.f32.mrf.mxu0
        %v1936 = vadd.f32 0.0, %v1935
        %1937 = vmatmul.f32.gmra.mxu0 %v503
        %v1938 = vpop.f32.mrf.mxu0
        %v1939 = vadd.f32 0.0, %v1938
        %1940 = vmatmul.f32.gmra.mxu0 %v504
        %v1941 = vpop.f32.mrf.mxu0
        %v1942 = vadd.f32 0.0, %v1941
        %1943 = vmatmul.f32.gmra.mxu0 %v505
        %v1944 = vpop.f32.mrf.mxu0
        %v1945 = vadd.f32 0.0, %v1944
        %1946 = vmatmul.f32.gmra.mxu0 %v506
        %v1947 = vpop.f32.mrf.mxu0
        %v1948 = vadd.f32 0.0, %v1947
        %1949 = vmatmul.f32.gmra.mxu0 %v507
        %v1950 = vpop.f32.mrf.mxu0
        %v1951 = vadd.f32 0.0, %v1950
        %1952 = vmatmul.f32.gmra.mxu0 %v508
        %v1953 = vpop.f32.mrf.mxu0
        %v1954 = vadd.f32 0.0, %v1953
        %1955 = vmatmul.f32.gmra.mxu0 %v509
        %v1956 = vpop.f32.mrf.mxu0
        %v1957 = vadd.f32 0.0, %v1956
        %1958 = vmatmul.f32.gmra.mxu0 %v510
        %v1959 = vpop.f32.mrf.mxu0
        %v1960 = vadd.f32 0.0, %v1959
        %1961 = vmatmul.f32.gmra.mxu0 %v511
        %v1962 = vpop.f32.mrf.mxu0
        %v1963 = vadd.f32 0.0, %v1962
        %1964 = vmatmul.f32.gmra.mxu0 %v512
        %v1965 = vpop.f32.mrf.mxu0
        %v1966 = vadd.f32 0.0, %v1965
        %1967 = vmatmul.f32.gmra.mxu0 %v513
        %v1968 = vpop.f32.mrf.mxu0
        %v1969 = vadd.f32 0.0, %v1968
        %1970 = vdwg.mxu0
        %1971 = vmatpush.msra.mxu0 %v1708
        %1972 = vmatpush.msra.mxu0 %v1706
        %1973 = vmatpush.msra.mxu0 %v1703
        %1974 = vmatpush.msra.mxu0 %v1701
        %1975 = vmatpush.msra.mxu0 %v1698
        %1976 = vmatpush.msra.mxu0 %v1696
        %1977 = vmatpush.msra.mxu0 %v1693
        %1978 = vmatpush.msra.mxu0 %v1691
        %1979 = vmatpush.msra.mxu0 %v1688
        %1980 = vmatpush.msra.mxu0 %v1686
        %1981 = vmatpush.msra.mxu0 %v1683
        %1982 = vmatpush.msra.mxu0 %v1681
        %1983 = vmatpush.msra.mxu0 %v1678
        %1984 = vmatpush.msra.mxu0 %v1676
        %1985 = vmatpush.msra.mxu0 %v1673
        %1986 = vmatpush.msra.mxu0 %v1671
        %1987 = vmatmul.f32.gmra.mxu0 %v498
        %v1988 = vpop.f32.mrf.mxu0
        %v1989 = vadd.f32 0.0, %v1988
        %1990 = vmatmul.f32.gmra.mxu0 %v499
        %v1991 = vpop.f32.mrf.mxu0
        %v1992 = vadd.f32 0.0, %v1991
        %1993 = vmatmul.f32.gmra.mxu0 %v500
        %v1994 = vpop.f32.mrf.mxu0
        %v1995 = vadd.f32 0.0, %v1994
        %1996 = vmatmul.f32.gmra.mxu0 %v501
        %v1997 = vpop.f32.mrf.mxu0
        %v1998 = vadd.f32 0.0, %v1997
        %1999 = vmatmul.f32.gmra.mxu0 %v502
        %v2000 = vpop.f32.mrf.mxu0
        %v2001 = vadd.f32 0.0, %v2000
        %2002 = vmatmul.f32.gmra.mxu0 %v503
        %v2003 = vpop.f32.mrf.mxu0
        %v2004 = vadd.f32 0.0, %v2003
        %2005 = vmatmul.f32.gmra.mxu0 %v504
        %v2006 = vpop.f32.mrf.mxu0
        %v2007 = vadd.f32 0.0, %v2006
        %2008 = vmatmul.f32.gmra.mxu0 %v505
        %v2009 = vpop.f32.mrf.mxu0
        %v2010 = vadd.f32 0.0, %v2009
        %2011 = vmatmul.f32.gmra.mxu0 %v506
        %v2012 = vpop.f32.mrf.mxu0
        %v2013 = vadd.f32 0.0, %v2012
        %2014 = vmatmul.f32.gmra.mxu0 %v507
        %v2015 = vpop.f32.mrf.mxu0
        %v2016 = vadd.f32 0.0, %v2015
        %2017 = vmatmul.f32.gmra.mxu0 %v508
        %v2018 = vpop.f32.mrf.mxu0
        %v2019 = vadd.f32 0.0, %v2018
        %2020 = vmatmul.f32.gmra.mxu0 %v509
        %v2021 = vpop.f32.mrf.mxu0
        %v2022 = vadd.f32 0.0, %v2021
        %2023 = vmatmul.f32.gmra.mxu0 %v510
        %v2024 = vpop.f32.mrf.mxu0
        %v2025 = vadd.f32 0.0, %v2024
        %2026 = vmatmul.f32.gmra.mxu0 %v511
        %v2027 = vpop.f32.mrf.mxu0
        %v2028 = vadd.f32 0.0, %v2027
        %2029 = vmatmul.f32.gmra.mxu0 %v512
        %v2030 = vpop.f32.mrf.mxu0
        %v2031 = vadd.f32 0.0, %v2030
        %2032 = vmatmul.f32.gmra.mxu0 %v513
        %v2033 = vpop.f32.mrf.mxu0
        %v2034 = vadd.f32 0.0, %v2033
        %2035 = vdwg.mxu0
        %2036 = vmatpush.msra.mxu0 %v1806
        %2037 = vmatpush.msra.mxu0 %v1804
        %2038 = vmatpush.msra.mxu0 %v1801
        %2039 = vmatpush.msra.mxu0 %v1799
        %2040 = vmatpush.msra.mxu0 %v1796
        %2041 = vmatpush.msra.mxu0 %v1794
        %2042 = vmatpush.msra.mxu0 %v1791
        %2043 = vmatpush.msra.mxu0 %v1789
        %2044 = vmatpush.msra.mxu0 %v1786
        %2045 = vmatpush.msra.mxu0 %v1784
        %2046 = vmatpush.msra.mxu0 %v1781
        %2047 = vmatpush.msra.mxu0 %v1779
        %2048 = vmatpush.msra.mxu0 %v1776
        %2049 = vmatpush.msra.mxu0 %v1774
        %2050 = vmatpush.msra.mxu0 %v1771
        %2051 = vmatpush.msra.mxu0 %v1769
        %2052 = vmatmul.f32.gmra.mxu0 %v498
        %v2053 = vpop.f32.mrf.mxu0
        %v2054 = vadd.f32 0.0, %v2053
        %2055 = vmatmul.f32.gmra.mxu0 %v499
        %v2056 = vpop.f32.mrf.mxu0
        %v2057 = vadd.f32 0.0, %v2056
        %2058 = vmatmul.f32.gmra.mxu0 %v500
        %v2059 = vpop.f32.mrf.mxu0
        %v2060 = vadd.f32 0.0, %v2059
        %2061 = vmatmul.f32.gmra.mxu0 %v501
        %v2062 = vpop.f32.mrf.mxu0
        %v2063 = vadd.f32 0.0, %v2062
        %2064 = vmatmul.f32.gmra.mxu0 %v502
        %v2065 = vpop.f32.mrf.mxu0
        %v2066 = vadd.f32 0.0, %v2065
        %2067 = vmatmul.f32.gmra.mxu0 %v503
        %v2068 = vpop.f32.mrf.mxu0
        %v2069 = vadd.f32 0.0, %v2068
        %2070 = vmatmul.f32.gmra.mxu0 %v504
        %v2071 = vpop.f32.mrf.mxu0
        %v2072 = vadd.f32 0.0, %v2071
        %2073 = vmatmul.f32.gmra.mxu0 %v505
        %v2074 = vpop.f32.mrf.mxu0
        %v2075 = vadd.f32 0.0, %v2074
        %2076 = vmatmul.f32.gmra.mxu0 %v506
        %v2077 = vpop.f32.mrf.mxu0
        %v2078 = vadd.f32 0.0, %v2077
        %2079 = vmatmul.f32.gmra.mxu0 %v507
        %v2080 = vpop.f32.mrf.mxu0
        %v2081 = vadd.f32 0.0, %v2080
        %2082 = vmatmul.f32.gmra.mxu0 %v508
        %v2083 = vpop.f32.mrf.mxu0
        %v2084 = vadd.f32 0.0, %v2083
        %2085 = vmatmul.f32.gmra.mxu0 %v509
        %v2086 = vpop.f32.mrf.mxu0
        %v2087 = vadd.f32 0.0, %v2086
        %2088 = vmatmul.f32.gmra.mxu0 %v510
        %v2089 = vpop.f32.mrf.mxu0
        %v2090 = vadd.f32 0.0, %v2089
        %2091 = vmatmul.f32.gmra.mxu0 %v511
        %v2092 = vpop.f32.mrf.mxu0
        %v2093 = vadd.f32 0.0, %v2092
        %2094 = vmatmul.f32.gmra.mxu0 %v512
        %v2095 = vpop.f32.mrf.mxu0
        %v2096 = vadd.f32 0.0, %v2095
        %2097 = vmatmul.f32.gmra.mxu0 %v513
        %v2098 = vpop.f32.mrf.mxu0
        %v2099 = vadd.f32 0.0, %v2098
        %2100 = vdwg.mxu0
        %2101 = vmatpush.msra.mxu0 %v1904
        %2102 = vmatpush.msra.mxu0 %v1902
        %2103 = vmatpush.msra.mxu0 %v1899
        %2104 = vmatpush.msra.mxu0 %v1897
        %2105 = vmatpush.msra.mxu0 %v1894
        %2106 = vmatpush.msra.mxu0 %v1892
        %2107 = vmatpush.msra.mxu0 %v1889
        %2108 = vmatpush.msra.mxu0 %v1887
        %2109 = vmatpush.msra.mxu0 %v1884
        %2110 = vmatpush.msra.mxu0 %v1882
        %2111 = vmatpush.msra.mxu0 %v1879
        %2112 = vmatpush.msra.mxu0 %v1877
        %2113 = vmatpush.msra.mxu0 %v1874
        %2114 = vmatpush.msra.mxu0 %v1872
        %2115 = vmatpush.msra.mxu0 %v1869
        %2116 = vmatpush.msra.mxu0 %v1867
        %2117 = vmatmul.f32.gmra.mxu0 %v498
        %v2118 = vpop.f32.mrf.mxu0
        %v2119 = vadd.f32 0.0, %v2118
        %2120 = vmatmul.f32.gmra.mxu0 %v499
        %v2121 = vpop.f32.mrf.mxu0
        %v2122 = vadd.f32 0.0, %v2121
        %2123 = vmatmul.f32.gmra.mxu0 %v500
        %v2124 = vpop.f32.mrf.mxu0
        %v2125 = vadd.f32 0.0, %v2124
        %2126 = vmatmul.f32.gmra.mxu0 %v501
        %v2127 = vpop.f32.mrf.mxu0
        %v2128 = vadd.f32 0.0, %v2127
        %2129 = vmatmul.f32.gmra.mxu0 %v502
        %v2130 = vpop.f32.mrf.mxu0
        %v2131 = vadd.f32 0.0, %v2130
        %2132 = vmatmul.f32.gmra.mxu0 %v503
        %v2133 = vpop.f32.mrf.mxu0
        %v2134 = vadd.f32 0.0, %v2133
        %2135 = vmatmul.f32.gmra.mxu0 %v504
        %v2136 = vpop.f32.mrf.mxu0
        %v2137 = vadd.f32 0.0, %v2136
        %2138 = vmatmul.f32.gmra.mxu0 %v505
        %v2139 = vpop.f32.mrf.mxu0
        %v2140 = vadd.f32 0.0, %v2139
        %2141 = vmatmul.f32.gmra.mxu0 %v506
        %v2142 = vpop.f32.mrf.mxu0
        %v2143 = vadd.f32 0.0, %v2142
        %2144 = vmatmul.f32.gmra.mxu0 %v507
        %v2145 = vpop.f32.mrf.mxu0
        %v2146 = vadd.f32 0.0, %v2145
        %2147 = vmatmul.f32.gmra.mxu0 %v508
        %v2148 = vpop.f32.mrf.mxu0
        %v2149 = vadd.f32 0.0, %v2148
        %2150 = vmatmul.f32.gmra.mxu0 %v509
        %v2151 = vpop.f32.mrf.mxu0
        %v2152 = vadd.f32 0.0, %v2151
        %2153 = vmatmul.f32.gmra.mxu0 %v510
        %v2154 = vpop.f32.mrf.mxu0
        %v2155 = vadd.f32 0.0, %v2154
        %2156 = vmatmul.f32.gmra.mxu0 %v511
        %v2157 = vpop.f32.mrf.mxu0
        %v2158 = vadd.f32 0.0, %v2157
        %2159 = vmatmul.f32.gmra.mxu0 %v512
        %v2160 = vpop.f32.mrf.mxu0
        %v2161 = vadd.f32 0.0, %v2160
        %2162 = vmatmul.f32.gmra.mxu0 %v513
        %v2163 = vpop.f32.mrf.mxu0
        %v2164 = vadd.f32 0.0, %v2163
        %2165 = vdwg.mxu0
        %v2166 = vadd.f32 %v1924, %v1927
        %v2167 = vadd.f32 %v2166, %v1930
        %v2168 = vadd.f32 %v2167, %v1933
        %v2169 = vadd.f32 %v2168, %v1936
        %v2170 = vadd.f32 %v2169, %v1939
        %v2171 = vadd.f32 %v2170, %v1942
        %v2172 = vadd.f32 %v2171, %v1945
        %v2173 = vadd.f32 %v2172, %v1948
        %v2174 = vadd.f32 %v2173, %v1951
        %v2175 = vadd.f32 %v2174, %v1954
        %v2176 = vadd.f32 %v2175, %v1957
        %v2177 = vadd.f32 %v2176, %v1960
        %v2178 = vadd.f32 %v2177, %v1963
        %v2179 = vadd.f32 %v2178, %v1966
        %v2180 = vadd.f32 %v2179, %v1969
        %v2181 = vrot.slane %v2180, 4
        %v2182 = vadd.f32 %v2180, %v2181
        %v2183 = vrot.slane %v2182, 2
        %v2184 = vadd.f32 %v2182, %v2183
        %v2185 = vrot.slane %v2184, 1
        %v2186 = vadd.f32 %v2184, %v2185
        %v2187 = vadd.f32 %v1989, %v1992
        %v2188 = vadd.f32 %v2187, %v1995
        %v2189 = vadd.f32 %v2188, %v1998
        %v2190 = vadd.f32 %v2189, %v2001
        %v2191 = vadd.f32 %v2190, %v2004
        %v2192 = vadd.f32 %v2191, %v2007
        %v2193 = vadd.f32 %v2192, %v2010
        %v2194 = vadd.f32 %v2193, %v2013
        %v2195 = vadd.f32 %v2194, %v2016
        %v2196 = vadd.f32 %v2195, %v2019
        %v2197 = vadd.f32 %v2196, %v2022
        %v2198 = vadd.f32 %v2197, %v2025
        %v2199 = vadd.f32 %v2198, %v2028
        %v2200 = vadd.f32 %v2199, %v2031
        %v2201 = vadd.f32 %v2200, %v2034
        %v2202 = vrot.slane %v2201, 4
        %v2203 = vadd.f32 %v2201, %v2202
        %v2204 = vrot.slane %v2203, 2
        %v2205 = vadd.f32 %v2203, %v2204
        %v2206 = vrot.slane %v2205, 1
        %v2207 = vadd.f32 %v2205, %v2206
        %v2208 = vadd.f32 %v2054, %v2057
        %v2209 = vadd.f32 %v2208, %v2060
        %v2210 = vadd.f32 %v2209, %v2063
        %v2211 = vadd.f32 %v2210, %v2066
        %v2212 = vadd.f32 %v2211, %v2069
        %v2213 = vadd.f32 %v2212, %v2072
        %v2214 = vadd.f32 %v2213, %v2075
        %v2215 = vadd.f32 %v2214, %v2078
        %v2216 = vadd.f32 %v2215, %v2081
        %v2217 = vadd.f32 %v2216, %v2084
        %v2218 = vadd.f32 %v2217, %v2087
        %v2219 = vadd.f32 %v2218, %v2090
        %v2220 = vadd.f32 %v2219, %v2093
        %v2221 = vadd.f32 %v2220, %v2096
        %v2222 = vadd.f32 %v2221, %v2099
        %v2223 = vrot.slane %v2222, 4
        %v2224 = vadd.f32 %v2222, %v2223
        %v2225 = vrot.slane %v2224, 2
        %v2226 = vadd.f32 %v2224, %v2225
        %v2227 = vrot.slane %v2226, 1
        %v2228 = vadd.f32 %v2226, %v2227
        %v2229 = vadd.f32 %v2119, %v2122
        %v2230 = vadd.f32 %v2229, %v2125
        %v2231 = vadd.f32 %v2230, %v2128
        %v2232 = vadd.f32 %v2231, %v2131
        %v2233 = vadd.f32 %v2232, %v2134
        %v2234 = vadd.f32 %v2233, %v2137
        %v2235 = vadd.f32 %v2234, %v2140
        %v2236 = vadd.f32 %v2235, %v2143
        %v2237 = vadd.f32 %v2236, %v2146
        %v2238 = vadd.f32 %v2237, %v2149
        %v2239 = vadd.f32 %v2238, %v2152
        %v2240 = vadd.f32 %v2239, %v2155
        %v2241 = vadd.f32 %v2240, %v2158
        %v2242 = vadd.f32 %v2241, %v2161
        %v2243 = vadd.f32 %v2242, %v2164
        %v2244 = vrot.slane %v2243, 4
        %v2245 = vadd.f32 %v2243, %v2244
        %v2246 = vrot.slane %v2245, 2
        %v2247 = vadd.f32 %v2245, %v2246
        %v2248 = vrot.slane %v2247, 1
        %v2249 = vadd.f32 %v2247, %v2248
        %v2250 = vmul.f32 %v2186, %v883
        %v2251 = vmul.f32 %v2207, %v883
        %v2252 = vmul.f32 %v2228, %v883
        %v2253 = vmul.f32 %v2249, %v883
        %v2254 = vmul.f32 %v1924, %v1924
        %v2255 = vmul.f32 %v1989, %v1989
        %v2256 = vmul.f32 %v2054, %v2054
        %v2257 = vmul.f32 %v2119, %v2119
        %v2258 = vmul.f32 %v1927, %v1927
        %v2259 = vmul.f32 %v1992, %v1992
        %v2260 = vmul.f32 %v2057, %v2057
        %v2261 = vmul.f32 %v2122, %v2122
        %v2262 = vmul.f32 %v1930, %v1930
        %v2263 = vmul.f32 %v1995, %v1995
        %v2264 = vmul.f32 %v2060, %v2060
        %v2265 = vmul.f32 %v2125, %v2125
        %v2266 = vmul.f32 %v1933, %v1933
        %v2267 = vmul.f32 %v1998, %v1998
        %v2268 = vmul.f32 %v2063, %v2063
        %v2269 = vmul.f32 %v2128, %v2128
        %v2270 = vmul.f32 %v1936, %v1936
        %v2271 = vmul.f32 %v2001, %v2001
        %v2272 = vmul.f32 %v2066, %v2066
        %v2273 = vmul.f32 %v2131, %v2131
        %v2274 = vmul.f32 %v1939, %v1939
        %v2275 = vmul.f32 %v2004, %v2004
        %v2276 = vmul.f32 %v2069, %v2069
        %v2277 = vmul.f32 %v2134, %v2134
        %v2278 = vmul.f32 %v1942, %v1942
        %v2279 = vmul.f32 %v2007, %v2007
        %v2280 = vmul.f32 %v2072, %v2072
        %v2281 = vmul.f32 %v2137, %v2137
        %v2282 = vmul.f32 %v1945, %v1945
        %v2283 = vmul.f32 %v2010, %v2010
        %v2284 = vmul.f32 %v2075, %v2075
        %v2285 = vmul.f32 %v2140, %v2140
        %v2286 = vmul.f32 %v1948, %v1948
        %v2287 = vmul.f32 %v2013, %v2013
        %v2288 = vmul.f32 %v2078, %v2078
        %v2289 = vmul.f32 %v2143, %v2143
        %v2290 = vmul.f32 %v1951, %v1951
        %v2291 = vmul.f32 %v2016, %v2016
        %v2292 = vmul.f32 %v2081, %v2081
        %v2293 = vmul.f32 %v2146, %v2146
        %v2294 = vmul.f32 %v1954, %v1954
        %v2295 = vmul.f32 %v2019, %v2019
        %v2296 = vmul.f32 %v2084, %v2084
        %v2297 = vmul.f32 %v2149, %v2149
        %v2298 = vmul.f32 %v1957, %v1957
        %v2299 = vmul.f32 %v2022, %v2022
        %v2300 = vmul.f32 %v2087, %v2087
        %v2301 = vmul.f32 %v2152, %v2152
        %v2302 = vmul.f32 %v1960, %v1960
        %v2303 = vmul.f32 %v2025, %v2025
        %v2304 = vmul.f32 %v2090, %v2090
        %v2305 = vmul.f32 %v2155, %v2155
        %v2306 = vmul.f32 %v1963, %v1963
        %v2307 = vmul.f32 %v2028, %v2028
        %v2308 = vmul.f32 %v2093, %v2093
        %v2309 = vmul.f32 %v2158, %v2158
        %v2310 = vmul.f32 %v1966, %v1966
        %v2311 = vmul.f32 %v2031, %v2031
        %v2312 = vmul.f32 %v2096, %v2096
        %v2313 = vmul.f32 %v2161, %v2161
        %v2314 = vmul.f32 %v1969, %v1969
        %v2315 = vmul.f32 %v2034, %v2034
        %v2316 = vmul.f32 %v2099, %v2099
        %v2317 = vmul.f32 %v2164, %v2164
        %v2318 = vadd.f32 %v2254, %v2258
        %v2319 = vadd.f32 %v2318, %v2262
        %v2320 = vadd.f32 %v2319, %v2266
        %v2321 = vadd.f32 %v2320, %v2270
        %v2322 = vadd.f32 %v2321, %v2274
        %v2323 = vadd.f32 %v2322, %v2278
        %v2324 = vadd.f32 %v2323, %v2282
        %v2325 = vadd.f32 %v2324, %v2286
        %v2326 = vadd.f32 %v2325, %v2290
        %v2327 = vadd.f32 %v2326, %v2294
        %v2328 = vadd.f32 %v2327, %v2298
        %v2329 = vadd.f32 %v2328, %v2302
        %v2330 = vadd.f32 %v2329, %v2306
        %v2331 = vadd.f32 %v2330, %v2310
        %v2332 = vadd.f32 %v2331, %v2314
        %v2333 = vrot.slane %v2332, 4
        %v2334 = vadd.f32 %v2332, %v2333
        %v2335 = vrot.slane %v2334, 2
        %v2336 = vadd.f32 %v2334, %v2335
        %v2337 = vrot.slane %v2336, 1
        %v2338 = vadd.f32 %v2336, %v2337
        %v2339 = vadd.f32 %v2255, %v2259
        %v2340 = vadd.f32 %v2339, %v2263
        %v2341 = vadd.f32 %v2340, %v2267
        %v2342 = vadd.f32 %v2341, %v2271
        %v2343 = vadd.f32 %v2342, %v2275
        %v2344 = vadd.f32 %v2343, %v2279
        %v2345 = vadd.f32 %v2344, %v2283
        %v2346 = vadd.f32 %v2345, %v2287
        %v2347 = vadd.f32 %v2346, %v2291
        %v2348 = vadd.f32 %v2347, %v2295
        %v2349 = vadd.f32 %v2348, %v2299
        %v2350 = vadd.f32 %v2349, %v2303
        %v2351 = vadd.f32 %v2350, %v2307
        %v2352 = vadd.f32 %v2351, %v2311
        %v2353 = vadd.f32 %v2352, %v2315
        %v2354 = vrot.slane %v2353, 4
        %v2355 = vadd.f32 %v2353, %v2354
        %v2356 = vrot.slane %v2355, 2
        %v2357 = vadd.f32 %v2355, %v2356
        %v2358 = vrot.slane %v2357, 1
        %v2359 = vadd.f32 %v2357, %v2358
        %v2360 = vadd.f32 %v2256, %v2260
        %v2361 = vadd.f32 %v2360, %v2264
        %v2362 = vadd.f32 %v2361, %v2268
        %v2363 = vadd.f32 %v2362, %v2272
        %v2364 = vadd.f32 %v2363, %v2276
        %v2365 = vadd.f32 %v2364, %v2280
        %v2366 = vadd.f32 %v2365, %v2284
        %v2367 = vadd.f32 %v2366, %v2288
        %v2368 = vadd.f32 %v2367, %v2292
        %v2369 = vadd.f32 %v2368, %v2296
        %v2370 = vadd.f32 %v2369, %v2300
        %v2371 = vadd.f32 %v2370, %v2304
        %v2372 = vadd.f32 %v2371, %v2308
        %v2373 = vadd.f32 %v2372, %v2312
        %v2374 = vadd.f32 %v2373, %v2316
        %v2375 = vrot.slane %v2374, 4
        %v2376 = vadd.f32 %v2374, %v2375
        %v2377 = vrot.slane %v2376, 2
        %v2378 = vadd.f32 %v2376, %v2377
        %v2379 = vrot.slane %v2378, 1
        %v2380 = vadd.f32 %v2378, %v2379
        %v2381 = vadd.f32 %v2257, %v2261
        %v2382 = vadd.f32 %v2381, %v2265
        %v2383 = vadd.f32 %v2382, %v2269
        %v2384 = vadd.f32 %v2383, %v2273
        %v2385 = vadd.f32 %v2384, %v2277
        %v2386 = vadd.f32 %v2385, %v2281
        %v2387 = vadd.f32 %v2386, %v2285
        %v2388 = vadd.f32 %v2387, %v2289
        %v2389 = vadd.f32 %v2388, %v2293
        %v2390 = vadd.f32 %v2389, %v2297
        %v2391 = vadd.f32 %v2390, %v2301
        %v2392 = vadd.f32 %v2391, %v2305
        %v2393 = vadd.f32 %v2392, %v2309
        %v2394 = vadd.f32 %v2393, %v2313
        %v2395 = vadd.f32 %v2394, %v2317
        %v2396 = vrot.slane %v2395, 4
        %v2397 = vadd.f32 %v2395, %v2396
        %v2398 = vrot.slane %v2397, 2
        %v2399 = vadd.f32 %v2397, %v2398
        %v2400 = vrot.slane %v2399, 1
        %v2401 = vadd.f32 %v2399, %v2400
        %v2402 = vmul.f32 %v2338, %v883
        %v2403 = vmul.f32 %v2359, %v883
        %v2404 = vmul.f32 %v2380, %v883
        %v2405 = vmul.f32 %v2401, %v883
        %v2406 = vmul.f32 %v2250, %v2250
        %v2407 = vmul.f32 %v2251, %v2251
        %v2408 = vmul.f32 %v2252, %v2252
        %v2409 = vmul.f32 %v2253, %v2253
        %v2410 = vsub.f32 %v2402, %v2406
        %v2411 = vsub.f32 %v2403, %v2407
        %v2412 = vsub.f32 %v2404, %v2408
        %v2413 = vsub.f32 %v2405, %v2409
        %v2414 = vmax.f32 %v2410, 0.0
        %v2415 = vmax.f32 %v2411, 0.0
        %v2416 = vmax.f32 %v2412, 0.0
        %v2417 = vmax.f32 %v2413, 0.0
        %v2418 = vld [vmem:[%s6] ss:$2 sm:$0xf]
        %s2419 = scalar_lea.vmem %s6, 1
        %v2420 = vld [vmem:[%s2419] ss:$2 sm:$0xf]
        %v2421 = vadd.f32 %v2414, 1e-05
        %v2422 = vadd.f32 %v2415, 1e-05
        %v2423 = vadd.f32 %v2416, 1e-05
        %v2424 = vadd.f32 %v2417, 1e-05
        %v2425 = vrsqrt.pop %v2421
        %v2426 = vmul.f32 %v2425, %v2421
        %v2427 = vmul.f32 %v2426, %v2425
        %v2428 = vmul.f32 0.5, %v2427
        %v2429 = vsub.f32 1.5, %v2428
        %v2430 = vmul.f32 %v2425, %v2429
        %vm2431 = vweird.f32 %v2421
        %vm2432 = vweird.f32 %v2425
        %vm2433 = vmor %vm2431, %vm2432
        %v2434 = vsel %vm2433, %v2425, %v2430
        %v2435 = vrsqrt.pop %v2422
        %v2436 = vmul.f32 %v2435, %v2422
        %v2437 = vmul.f32 %v2436, %v2435
        %v2438 = vmul.f32 0.5, %v2437
        %v2439 = vsub.f32 1.5, %v2438
        %v2440 = vmul.f32 %v2435, %v2439
        %vm2441 = vweird.f32 %v2422
        %vm2442 = vweird.f32 %v2435
        %vm2443 = vmor %vm2441, %vm2442
        %v2444 = vsel %vm2443, %v2435, %v2440
        %v2445 = vrsqrt.pop %v2423
        %v2446 = vmul.f32 %v2445, %v2423
        %v2447 = vmul.f32 %v2446, %v2445
        %v2448 = vmul.f32 0.5, %v2447
        %v2449 = vsub.f32 1.5, %v2448
        %v2450 = vmul.f32 %v2445, %v2449
        %vm2451 = vweird.f32 %v2423
        %vm2452 = vweird.f32 %v2445
        %vm2453 = vmor %vm2451, %vm2452
        %v2454 = vsel %vm2453, %v2445, %v2450
        %v2455 = vrsqrt.pop %v2424
        %v2456 = vmul.f32 %v2455, %v2424
        %v2457 = vmul.f32 %v2456, %v2455
        %v2458 = vmul.f32 0.5, %v2457
        %v2459 = vsub.f32 1.5, %v2458
        %v2460 = vmul.f32 %v2455, %v2459
        %vm2461 = vweird.f32 %v2424
        %vm2462 = vweird.f32 %v2455
        %vm2463 = vmor %vm2461, %vm2462
        %v2464 = vsel %vm2463, %v2455, %v2460
        %v2469 = vrot.slane %v2444, 7
        %v2470 = vrot.slane %v2454, 6
        %v2471 = vrot.slane %v2464, 5
        %v2472 = vsel %vm996, %v2434, %v2469
        %vm2473 = vcmask 1042434
        %v2474 = vsel %vm2473, %v2470, %v2471
        %vm2475 = vcmask 1041408
        %v2476 = vsel %vm2475, %v2472, %v2474
        %v2478 = vmul.f32 %v2418, %v2476
        %v2480 = vperm.slane %v2478, 0
        %v2481 = vperm.slane %v2478, 1
        %v2482 = vperm.slane %v2478, 2
        %v2483 = vperm.slane %v2478, 3
        %v2488 = vmul.f32 %v2250, %v2480
        %v2489 = vmul.f32 %v2251, %v2481
        %v2490 = vmul.f32 %v2252, %v2482
        %v2491 = vmul.f32 %v2253, %v2483
        %v2496 = vrot.slane %v2489, 7
        %v2497 = vrot.slane %v2490, 6
        %v2498 = vrot.slane %v2491, 5
        %v2499 = vsel %vm996, %v2488, %v2496
        %v2500 = vsel %vm2473, %v2497, %v2498
        %v2501 = vsel %vm2475, %v2499, %v2500
        %v2503 = vsub.f32 %v2420, %v2501
        %v2504 = vmul.f32 %v1924, %v2480
        %v2505 = vmul.f32 %v1989, %v2481
        %v2506 = vmul.f32 %v2054, %v2482
        %v2507 = vmul.f32 %v2119, %v2483
        %v2508 = vmul.f32 %v1927, %v2480
        %v2509 = vmul.f32 %v1992, %v2481
        %v2510 = vmul.f32 %v2057, %v2482
        %v2511 = vmul.f32 %v2122, %v2483
        %v2512 = vmul.f32 %v1930, %v2480
        %v2513 = vmul.f32 %v1995, %v2481
        %v2514 = vmul.f32 %v2060, %v2482
        %v2515 = vmul.f32 %v2125, %v2483
        %v2516 = vmul.f32 %v1933, %v2480
        %v2517 = vmul.f32 %v1998, %v2481
        %v2518 = vmul.f32 %v2063, %v2482
        %v2519 = vmul.f32 %v2128, %v2483
        %v2520 = vmul.f32 %v1936, %v2480
        %v2521 = vmul.f32 %v2001, %v2481
        %v2522 = vmul.f32 %v2066, %v2482
        %v2523 = vmul.f32 %v2131, %v2483
        %v2524 = vmul.f32 %v1939, %v2480
        %v2525 = vmul.f32 %v2004, %v2481
        %v2526 = vmul.f32 %v2069, %v2482
        %v2527 = vmul.f32 %v2134, %v2483
        %v2528 = vmul.f32 %v1942, %v2480
        %v2529 = vmul.f32 %v2007, %v2481
        %v2530 = vmul.f32 %v2072, %v2482
        %v2531 = vmul.f32 %v2137, %v2483
        %v2532 = vmul.f32 %v1945, %v2480
        %v2533 = vmul.f32 %v2010, %v2481
        %v2534 = vmul.f32 %v2075, %v2482
        %v2535 = vmul.f32 %v2140, %v2483
        %v2536 = vmul.f32 %v1948, %v2480
        %v2537 = vmul.f32 %v2013, %v2481
        %v2538 = vmul.f32 %v2078, %v2482
        %v2539 = vmul.f32 %v2143, %v2483
        %v2540 = vmul.f32 %v1951, %v2480
        %v2541 = vmul.f32 %v2016, %v2481
        %v2542 = vmul.f32 %v2081, %v2482
        %v2543 = vmul.f32 %v2146, %v2483
        %v2544 = vmul.f32 %v1954, %v2480
        %v2545 = vmul.f32 %v2019, %v2481
        %v2546 = vmul.f32 %v2084, %v2482
        %v2547 = vmul.f32 %v2149, %v2483
        %v2548 = vmul.f32 %v1957, %v2480
        %v2549 = vmul.f32 %v2022, %v2481
        %v2550 = vmul.f32 %v2087, %v2482
        %v2551 = vmul.f32 %v2152, %v2483
        %v2552 = vmul.f32 %v1960, %v2480
        %v2553 = vmul.f32 %v2025, %v2481
        %v2554 = vmul.f32 %v2090, %v2482
        %v2555 = vmul.f32 %v2155, %v2483
        %v2556 = vmul.f32 %v1963, %v2480
        %v2557 = vmul.f32 %v2028, %v2481
        %v2558 = vmul.f32 %v2093, %v2482
        %v2559 = vmul.f32 %v2158, %v2483
        %v2560 = vmul.f32 %v1966, %v2480
        %v2561 = vmul.f32 %v2031, %v2481
        %v2562 = vmul.f32 %v2096, %v2482
        %v2563 = vmul.f32 %v2161, %v2483
        %v2564 = vmul.f32 %v1969, %v2480
        %v2565 = vmul.f32 %v2034, %v2481
        %v2566 = vmul.f32 %v2099, %v2482
        %v2567 = vmul.f32 %v2164, %v2483
        %v2569 = vperm.slane %v2503, 0
        %v2570 = vperm.slane %v2503, 1
        %v2571 = vperm.slane %v2503, 2
        %v2572 = vperm.slane %v2503, 3
        %v2577 = vadd.f32 %v2504, %v2569
        %v2578 = vadd.f32 %v2505, %v2570
        %v2579 = vadd.f32 %v2506, %v2571
        %v2580 = vadd.f32 %v2507, %v2572
        %v2581 = vadd.f32 %v2508, %v2569
        %v2582 = vadd.f32 %v2509, %v2570
        %v2583 = vadd.f32 %v2510, %v2571
        %v2584 = vadd.f32 %v2511, %v2572
        %v2585 = vadd.f32 %v2512, %v2569
        %v2586 = vadd.f32 %v2513, %v2570
        %v2587 = vadd.f32 %v2514, %v2571
        %v2588 = vadd.f32 %v2515, %v2572
        %v2589 = vadd.f32 %v2516, %v2569
        %v2590 = vadd.f32 %v2517, %v2570
        %v2591 = vadd.f32 %v2518, %v2571
        %v2592 = vadd.f32 %v2519, %v2572
        %v2593 = vadd.f32 %v2520, %v2569
        %v2594 = vadd.f32 %v2521, %v2570
        %v2595 = vadd.f32 %v2522, %v2571
        %v2596 = vadd.f32 %v2523, %v2572
        %v2597 = vadd.f32 %v2524, %v2569
        %v2598 = vadd.f32 %v2525, %v2570
        %v2599 = vadd.f32 %v2526, %v2571
        %v2600 = vadd.f32 %v2527, %v2572
        %v2601 = vadd.f32 %v2528, %v2569
        %v2602 = vadd.f32 %v2529, %v2570
        %v2603 = vadd.f32 %v2530, %v2571
        %v2604 = vadd.f32 %v2531, %v2572
        %v2605 = vadd.f32 %v2532, %v2569
        %v2606 = vadd.f32 %v2533, %v2570
        %v2607 = vadd.f32 %v2534, %v2571
        %v2608 = vadd.f32 %v2535, %v2572
        %v2609 = vadd.f32 %v2536, %v2569
        %v2610 = vadd.f32 %v2537, %v2570
        %v2611 = vadd.f32 %v2538, %v2571
        %v2612 = vadd.f32 %v2539, %v2572
        %v2613 = vadd.f32 %v2540, %v2569
        %v2614 = vadd.f32 %v2541, %v2570
        %v2615 = vadd.f32 %v2542, %v2571
        %v2616 = vadd.f32 %v2543, %v2572
        %v2617 = vadd.f32 %v2544, %v2569
        %v2618 = vadd.f32 %v2545, %v2570
        %v2619 = vadd.f32 %v2546, %v2571
        %v2620 = vadd.f32 %v2547, %v2572
        %v2621 = vadd.f32 %v2548, %v2569
        %v2622 = vadd.f32 %v2549, %v2570
        %v2623 = vadd.f32 %v2550, %v2571
        %v2624 = vadd.f32 %v2551, %v2572
        %v2625 = vadd.f32 %v2552, %v2569
        %v2626 = vadd.f32 %v2553, %v2570
        %v2627 = vadd.f32 %v2554, %v2571
        %v2628 = vadd.f32 %v2555, %v2572
        %v2629 = vadd.f32 %v2556, %v2569
        %v2630 = vadd.f32 %v2557, %v2570
        %v2631 = vadd.f32 %v2558, %v2571
        %v2632 = vadd.f32 %v2559, %v2572
        %v2633 = vadd.f32 %v2560, %v2569
        %v2634 = vadd.f32 %v2561, %v2570
        %v2635 = vadd.f32 %v2562, %v2571
        %v2636 = vadd.f32 %v2563, %v2572
        %v2637 = vadd.f32 %v2564, %v2569
        %v2638 = vadd.f32 %v2565, %v2570
        %v2639 = vadd.f32 %v2566, %v2571
        %v2640 = vadd.f32 %v2567, %v2572
        %v2641 = vmax.f32 %v2577, 0.0
        %v2642 = vmax.f32 %v2578, 0.0
        %v2643 = vmax.f32 %v2579, 0.0
        %v2644 = vmax.f32 %v2580, 0.0
        %v2645 = vmax.f32 %v2581, 0.0
        %v2646 = vmax.f32 %v2582, 0.0
        %v2647 = vmax.f32 %v2583, 0.0
        %v2648 = vmax.f32 %v2584, 0.0
        %v2649 = vmax.f32 %v2585, 0.0
        %v2650 = vmax.f32 %v2586, 0.0
        %v2651 = vmax.f32 %v2587, 0.0
        %v2652 = vmax.f32 %v2588, 0.0
        %v2653 = vmax.f32 %v2589, 0.0
        %v2654 = vmax.f32 %v2590, 0.0
        %v2655 = vmax.f32 %v2591, 0.0
        %v2656 = vmax.f32 %v2592, 0.0
        %v2657 = vmax.f32 %v2593, 0.0
        %v2658 = vmax.f32 %v2594, 0.0
        %v2659 = vmax.f32 %v2595, 0.0
        %v2660 = vmax.f32 %v2596, 0.0
        %v2661 = vmax.f32 %v2597, 0.0
        %v2662 = vmax.f32 %v2598, 0.0
        %v2663 = vmax.f32 %v2599, 0.0
        %v2664 = vmax.f32 %v2600, 0.0
        %v2665 = vmax.f32 %v2601, 0.0
        %v2666 = vmax.f32 %v2602, 0.0
        %v2667 = vmax.f32 %v2603, 0.0
        %v2668 = vmax.f32 %v2604, 0.0
        %v2669 = vmax.f32 %v2605, 0.0
        %v2670 = vmax.f32 %v2606, 0.0
        %v2671 = vmax.f32 %v2607, 0.0
        %v2672 = vmax.f32 %v2608, 0.0
        %v2673 = vmax.f32 %v2609, 0.0
        %v2674 = vmax.f32 %v2610, 0.0
        %v2675 = vmax.f32 %v2611, 0.0
        %v2676 = vmax.f32 %v2612, 0.0
        %v2677 = vmax.f32 %v2613, 0.0
        %v2678 = vmax.f32 %v2614, 0.0
        %v2679 = vmax.f32 %v2615, 0.0
        %v2680 = vmax.f32 %v2616, 0.0
        %v2681 = vmax.f32 %v2617, 0.0
        %v2682 = vmax.f32 %v2618, 0.0
        %v2683 = vmax.f32 %v2619, 0.0
        %v2684 = vmax.f32 %v2620, 0.0
        %v2685 = vmax.f32 %v2621, 0.0
        %v2686 = vmax.f32 %v2622, 0.0
        %v2687 = vmax.f32 %v2623, 0.0
        %v2688 = vmax.f32 %v2624, 0.0
        %v2689 = vmax.f32 %v2625, 0.0
        %v2690 = vmax.f32 %v2626, 0.0
        %v2691 = vmax.f32 %v2627, 0.0
        %v2692 = vmax.f32 %v2628, 0.0
        %v2693 = vmax.f32 %v2629, 0.0
        %v2694 = vmax.f32 %v2630, 0.0
        %v2695 = vmax.f32 %v2631, 0.0
        %v2696 = vmax.f32 %v2632, 0.0
        %v2697 = vmax.f32 %v2633, 0.0
        %v2698 = vmax.f32 %v2634, 0.0
        %v2699 = vmax.f32 %v2635, 0.0
        %v2700 = vmax.f32 %v2636, 0.0
        %v2701 = vmax.f32 %v2637, 0.0
        %v2702 = vmax.f32 %v2638, 0.0
        %v2703 = vmax.f32 %v2639, 0.0
        %v2704 = vmax.f32 %v2640, 0.0
        %v2705 = vpack.c.bf16 %v2645, %v2641
        %v2706 = vpack.c.bf16 %v2646, %v2642
        %v2707 = vpack.c.bf16 %v2647, %v2643
        %v2708 = vpack.c.bf16 %v2648, %v2644
        %v2709 = vpack.c.bf16 %v2653, %v2649
        %v2710 = vpack.c.bf16 %v2654, %v2650
        %v2711 = vpack.c.bf16 %v2655, %v2651
        %v2712 = vpack.c.bf16 %v2656, %v2652
        %v2713 = vpack.c.bf16 %v2661, %v2657
        %v2714 = vpack.c.bf16 %v2662, %v2658
        %v2715 = vpack.c.bf16 %v2663, %v2659
        %v2716 = vpack.c.bf16 %v2664, %v2660
        %v2717 = vpack.c.bf16 %v2669, %v2665
        %v2718 = vpack.c.bf16 %v2670, %v2666
        %v2719 = vpack.c.bf16 %v2671, %v2667
        %v2720 = vpack.c.bf16 %v2672, %v2668
        %v2721 = vpack.c.bf16 %v2677, %v2673
        %v2722 = vpack.c.bf16 %v2678, %v2674
        %v2723 = vpack.c.bf16 %v2679, %v2675
        %v2724 = vpack.c.bf16 %v2680, %v2676
        %v2725 = vpack.c.bf16 %v2685, %v2681
        %v2726 = vpack.c.bf16 %v2686, %v2682
        %v2727 = vpack.c.bf16 %v2687, %v2683
        %v2728 = vpack.c.bf16 %v2688, %v2684
        %v2729 = vpack.c.bf16 %v2693, %v2689
        %v2730 = vpack.c.bf16 %v2694, %v2690
        %v2731 = vpack.c.bf16 %v2695, %v2691
        %v2732 = vpack.c.bf16 %v2696, %v2692
        %v2733 = vpack.c.bf16 %v2701, %v2697
        %v2734 = vpack.c.bf16 %v2702, %v2698
        %v2735 = vpack.c.bf16 %v2703, %v2699
        %v2736 = vpack.c.bf16 %v2704, %v2700
        %v2737 = vld [vmem:[#allocation7] sm:$0xff]
        %v2738 = vld [vmem:[#allocation7 + $0x8] sm:$0xff]
        %v2739 = vld [vmem:[#allocation7 + $0x10] sm:$0xff]
        %v2740 = vld [vmem:[#allocation7 + $0x18] sm:$0xff]
        %v2741 = vld [vmem:[#allocation7 + $0x20] sm:$0xff]
        %v2742 = vld [vmem:[#allocation7 + $0x28] sm:$0xff]
        %v2743 = vld [vmem:[#allocation7 + $0x30] sm:$0xff]
        %v2744 = vld [vmem:[#allocation7 + $0x38] sm:$0xff]
        %v2745 = vld [vmem:[#allocation7 + $0x40] sm:$0xff]
        %v2746 = vld [vmem:[#allocation7 + $0x48] sm:$0xff]
        %v2747 = vld [vmem:[#allocation7 + $0x50] sm:$0xff]
        %v2748 = vld [vmem:[#allocation7 + $0x58] sm:$0xff]
        %v2749 = vld [vmem:[#allocation7 + $0x60] sm:$0xff]
        %v2750 = vld [vmem:[#allocation7 + $0x68] sm:$0xff]
        %v2751 = vld [vmem:[#allocation7 + $0x70] sm:$0xff]
        %v2752 = vld [vmem:[#allocation7 + $0x78] sm:$0xff]
        %v2753 = vld [vmem:[#allocation7 + $0x80] sm:$0xff]
        %v2754 = vld [vmem:[#allocation7 + $0x88] sm:$0xff]
        %v2755 = vld [vmem:[#allocation7 + $0x90] sm:$0xff]
        %v2756 = vld [vmem:[#allocation7 + $0x98] sm:$0xff]
        %v2757 = vld [vmem:[#allocation7 + $0xa0] sm:$0xff]
        %v2758 = vld [vmem:[#allocation7 + $0xa8] sm:$0xff]
        %v2759 = vld [vmem:[#allocation7 + $0xb0] sm:$0xff]
        %v2760 = vld [vmem:[#allocation7 + $0xb8] sm:$0xff]
        %v2761 = vld [vmem:[#allocation7 + $0xc0] sm:$0xff]
        %v2762 = vld [vmem:[#allocation7 + $0xc8] sm:$0xff]
        %v2763 = vld [vmem:[#allocation7 + $0xd0] sm:$0xff]
        %v2764 = vld [vmem:[#allocation7 + $0xd8] sm:$0xff]
        %v2765 = vld [vmem:[#allocation7 + $0xe0] sm:$0xff]
        %v2766 = vld [vmem:[#allocation7 + $0xe8] sm:$0xff]
        %v2767 = vld [vmem:[#allocation7 + $0xf0] sm:$0xff]
        %v2768 = vld [vmem:[#allocation7 + $0xf8] sm:$0xff]
        %v2769 = vld [vmem:[#allocation7 + $0x100] sm:$0xff]
        %v2770 = vld [vmem:[#allocation7 + $0x108] sm:$0xff]
        %v2771 = vld [vmem:[#allocation7 + $0x110] sm:$0xff]
        %v2772 = vld [vmem:[#allocation7 + $0x118] sm:$0xff]
        %v2773 = vld [vmem:[#allocation7 + $0x120] sm:$0xff]
        %v2774 = vld [vmem:[#allocation7 + $0x128] sm:$0xff]
        %v2775 = vld [vmem:[#allocation7 + $0x130] sm:$0xff]
        %v2776 = vld [vmem:[#allocation7 + $0x138] sm:$0xff]
        %v2777 = vld [vmem:[#allocation7 + $0x140] sm:$0xff]
        %v2778 = vld [vmem:[#allocation7 + $0x148] sm:$0xff]
        %v2779 = vld [vmem:[#allocation7 + $0x150] sm:$0xff]
        %v2780 = vld [vmem:[#allocation7 + $0x158] sm:$0xff]
        %v2781 = vld [vmem:[#allocation7 + $0x160] sm:$0xff]
        %v2782 = vld [vmem:[#allocation7 + $0x168] sm:$0xff]
        %v2783 = vld [vmem:[#allocation7 + $0x170] sm:$0xff]
        %v2784 = vld [vmem:[#allocation7 + $0x178] sm:$0xff]
        %v2785 = vld [vmem:[#allocation7 + $0x180] sm:$0xff]
        %v2786 = vld [vmem:[#allocation7 + $0x188] sm:$0xff]
        %v2787 = vld [vmem:[#allocation7 + $0x190] sm:$0xff]
        %v2788 = vld [vmem:[#allocation7 + $0x198] sm:$0xff]
        %v2789 = vld [vmem:[#allocation7 + $0x1a0] sm:$0xff]
        %v2790 = vld [vmem:[#allocation7 + $0x1a8] sm:$0xff]
        %v2791 = vld [vmem:[#allocation7 + $0x1b0] sm:$0xff]
        %v2792 = vld [vmem:[#allocation7 + $0x1b8] sm:$0xff]
        %v2793 = vld [vmem:[#allocation7 + $0x1c0] sm:$0xff]
        %v2794 = vld [vmem:[#allocation7 + $0x1c8] sm:$0xff]
        %v2795 = vld [vmem:[#allocation7 + $0x1d0] sm:$0xff]
        %v2796 = vld [vmem:[#allocation7 + $0x1d8] sm:$0xff]
        %v2797 = vld [vmem:[#allocation7 + $0x1e0] sm:$0xff]
        %v2798 = vld [vmem:[#allocation7 + $0x1e8] sm:$0xff]
        %v2799 = vld [vmem:[#allocation7 + $0x1f0] sm:$0xff]
        %v2800 = vld [vmem:[#allocation7 + $0x1f8] sm:$0xff]
        %v2801 = vld [vmem:[#allocation7 + $0x200] sm:$0xff]
        %v2802 = vld [vmem:[#allocation7 + $0x208] sm:$0xff]
        %v2803 = vld [vmem:[#allocation7 + $0x210] sm:$0xff]
        %v2804 = vld [vmem:[#allocation7 + $0x218] sm:$0xff]
        %v2805 = vld [vmem:[#allocation7 + $0x220] sm:$0xff]
        %v2806 = vld [vmem:[#allocation7 + $0x228] sm:$0xff]
        %v2807 = vld [vmem:[#allocation7 + $0x230] sm:$0xff]
        %v2808 = vld [vmem:[#allocation7 + $0x238] sm:$0xff]
        %v2809 = vld [vmem:[#allocation7 + $0x240] sm:$0xff]
        %v2810 = vld [vmem:[#allocation7 + $0x248] sm:$0xff]
        %v2811 = vld [vmem:[#allocation7 + $0x250] sm:$0xff]
        %v2812 = vld [vmem:[#allocation7 + $0x258] sm:$0xff]
        %v2813 = vld [vmem:[#allocation7 + $0x260] sm:$0xff]
        %v2814 = vld [vmem:[#allocation7 + $0x268] sm:$0xff]
        %v2815 = vld [vmem:[#allocation7 + $0x270] sm:$0xff]
        %v2816 = vld [vmem:[#allocation7 + $0x278] sm:$0xff]
        %v2817 = vld [vmem:[#allocation7 + $0x280] sm:$0xff]
        %v2818 = vld [vmem:[#allocation7 + $0x288] sm:$0xff]
        %v2819 = vld [vmem:[#allocation7 + $0x290] sm:$0xff]
        %v2820 = vld [vmem:[#allocation7 + $0x298] sm:$0xff]
        %v2821 = vld [vmem:[#allocation7 + $0x2a0] sm:$0xff]
        %v2822 = vld [vmem:[#allocation7 + $0x2a8] sm:$0xff]
        %v2823 = vld [vmem:[#allocation7 + $0x2b0] sm:$0xff]
        %v2824 = vld [vmem:[#allocation7 + $0x2b8] sm:$0xff]
        %v2825 = vld [vmem:[#allocation7 + $0x2c0] sm:$0xff]
        %v2826 = vld [vmem:[#allocation7 + $0x2c8] sm:$0xff]
        %v2827 = vld [vmem:[#allocation7 + $0x2d0] sm:$0xff]
        %v2828 = vld [vmem:[#allocation7 + $0x2d8] sm:$0xff]
        %v2829 = vld [vmem:[#allocation7 + $0x2e0] sm:$0xff]
        %v2830 = vld [vmem:[#allocation7 + $0x2e8] sm:$0xff]
        %v2831 = vld [vmem:[#allocation7 + $0x2f0] sm:$0xff]
        %v2832 = vld [vmem:[#allocation7 + $0x2f8] sm:$0xff]
        %v2833 = vld [vmem:[#allocation7 + $0x300] sm:$0xff]
        %v2834 = vld [vmem:[#allocation7 + $0x308] sm:$0xff]
        %v2835 = vld [vmem:[#allocation7 + $0x310] sm:$0xff]
        %v2836 = vld [vmem:[#allocation7 + $0x318] sm:$0xff]
        %v2837 = vld [vmem:[#allocation7 + $0x320] sm:$0xff]
        %v2838 = vld [vmem:[#allocation7 + $0x328] sm:$0xff]
        %v2839 = vld [vmem:[#allocation7 + $0x330] sm:$0xff]
        %v2840 = vld [vmem:[#allocation7 + $0x338] sm:$0xff]
        %v2841 = vld [vmem:[#allocation7 + $0x340] sm:$0xff]
        %v2842 = vld [vmem:[#allocation7 + $0x348] sm:$0xff]
        %v2843 = vld [vmem:[#allocation7 + $0x350] sm:$0xff]
        %v2844 = vld [vmem:[#allocation7 + $0x358] sm:$0xff]
        %v2845 = vld [vmem:[#allocation7 + $0x360] sm:$0xff]
        %v2846 = vld [vmem:[#allocation7 + $0x368] sm:$0xff]
        %v2847 = vld [vmem:[#allocation7 + $0x370] sm:$0xff]
        %v2848 = vld [vmem:[#allocation7 + $0x378] sm:$0xff]
        %v2849 = vld [vmem:[#allocation7 + $0x380] sm:$0xff]
        %v2850 = vld [vmem:[#allocation7 + $0x388] sm:$0xff]
        %v2851 = vld [vmem:[#allocation7 + $0x390] sm:$0xff]
        %v2852 = vld [vmem:[#allocation7 + $0x398] sm:$0xff]
        %v2853 = vld [vmem:[#allocation7 + $0x3a0] sm:$0xff]
        %v2854 = vld [vmem:[#allocation7 + $0x3a8] sm:$0xff]
        %v2855 = vld [vmem:[#allocation7 + $0x3b0] sm:$0xff]
        %v2856 = vld [vmem:[#allocation7 + $0x3b8] sm:$0xff]
        %v2857 = vld [vmem:[#allocation7 + $0x3c0] sm:$0xff]
        %v2858 = vld [vmem:[#allocation7 + $0x3c8] sm:$0xff]
        %v2859 = vld [vmem:[#allocation7 + $0x3d0] sm:$0xff]
        %v2860 = vld [vmem:[#allocation7 + $0x3d8] sm:$0xff]
        %v2861 = vld [vmem:[#allocation7 + $0x3e0] sm:$0xff]
        %v2862 = vld [vmem:[#allocation7 + $0x3e8] sm:$0xff]
        %v2863 = vld [vmem:[#allocation7 + $0x3f0] sm:$0xff]
        %v2864 = vld [vmem:[#allocation7 + $0x3f8] sm:$0xff]
        %v2993 = vunpack.c.l.b16 %v2737
        %v2994 = vunpack.c.h.b16 %v2737
        %v2995 = vunpack.c.l.b16 %v2738
        %v2996 = vunpack.c.h.b16 %v2738
        %v2997 = vunpack.c.l.b16 %v2739
        %v2998 = vunpack.c.h.b16 %v2739
        %v2999 = vunpack.c.l.b16 %v2740
        %v3000 = vunpack.c.h.b16 %v2740
        %v3001 = vunpack.c.l.b16 %v2741
        %v3002 = vunpack.c.h.b16 %v2741
        %v3003 = vunpack.c.l.b16 %v2742
        %v3004 = vunpack.c.h.b16 %v2742
        %v3005 = vunpack.c.l.b16 %v2743
        %v3006 = vunpack.c.h.b16 %v2743
        %v3007 = vunpack.c.l.b16 %v2744
        %v3008 = vunpack.c.h.b16 %v2744
        %v3009 = vunpack.c.l.b16 %v2745
        %v3010 = vunpack.c.h.b16 %v2745
        %v3011 = vunpack.c.l.b16 %v2746
        %v3012 = vunpack.c.h.b16 %v2746
        %v3013 = vunpack.c.l.b16 %v2747
        %v3014 = vunpack.c.h.b16 %v2747
        %v3015 = vunpack.c.l.b16 %v2748
        %v3016 = vunpack.c.h.b16 %v2748
        %v3017 = vunpack.c.l.b16 %v2749
        %v3018 = vunpack.c.h.b16 %v2749
        %v3019 = vunpack.c.l.b16 %v2750
        %v3020 = vunpack.c.h.b16 %v2750
        %v3021 = vunpack.c.l.b16 %v2751
        %v3022 = vunpack.c.h.b16 %v2751
        %v3023 = vunpack.c.l.b16 %v2752
        %v3024 = vunpack.c.h.b16 %v2752
        %v3025 = vunpack.c.l.b16 %v2753
        %v3026 = vunpack.c.h.b16 %v2753
        %v3027 = vunpack.c.l.b16 %v2754
        %v3028 = vunpack.c.h.b16 %v2754
        %v3029 = vunpack.c.l.b16 %v2755
        %v3030 = vunpack.c.h.b16 %v2755
        %v3031 = vunpack.c.l.b16 %v2756
        %v3032 = vunpack.c.h.b16 %v2756
        %v3033 = vunpack.c.l.b16 %v2757
        %v3034 = vunpack.c.h.b16 %v2757
        %v3035 = vunpack.c.l.b16 %v2758
        %v3036 = vunpack.c.h.b16 %v2758
        %v3037 = vunpack.c.l.b16 %v2759
        %v3038 = vunpack.c.h.b16 %v2759
        %v3039 = vunpack.c.l.b16 %v2760
        %v3040 = vunpack.c.h.b16 %v2760
        %v3041 = vunpack.c.l.b16 %v2761
        %v3042 = vunpack.c.h.b16 %v2761
        %v3043 = vunpack.c.l.b16 %v2762
        %v3044 = vunpack.c.h.b16 %v2762
        %v3045 = vunpack.c.l.b16 %v2763
        %v3046 = vunpack.c.h.b16 %v2763
        %v3047 = vunpack.c.l.b16 %v2764
        %v3048 = vunpack.c.h.b16 %v2764
        %v3049 = vunpack.c.l.b16 %v2765
        %v3050 = vunpack.c.h.b16 %v2765
        %v3051 = vunpack.c.l.b16 %v2766
        %v3052 = vunpack.c.h.b16 %v2766
        %v3053 = vunpack.c.l.b16 %v2767
        %v3054 = vunpack.c.h.b16 %v2767
        %v3055 = vunpack.c.l.b16 %v2768
        %v3056 = vunpack.c.h.b16 %v2768
        %v3057 = vunpack.c.l.b16 %v2769
        %v3058 = vunpack.c.h.b16 %v2769
        %v3059 = vunpack.c.l.b16 %v2770
        %v3060 = vunpack.c.h.b16 %v2770
        %v3061 = vunpack.c.l.b16 %v2771
        %v3062 = vunpack.c.h.b16 %v2771
        %v3063 = vunpack.c.l.b16 %v2772
        %v3064 = vunpack.c.h.b16 %v2772
        %v3065 = vunpack.c.l.b16 %v2773
        %v3066 = vunpack.c.h.b16 %v2773
        %v3067 = vunpack.c.l.b16 %v2774
        %v3068 = vunpack.c.h.b16 %v2774
        %v3069 = vunpack.c.l.b16 %v2775
        %v3070 = vunpack.c.h.b16 %v2775
        %v3071 = vunpack.c.l.b16 %v2776
        %v3072 = vunpack.c.h.b16 %v2776
        %v3073 = vunpack.c.l.b16 %v2777
        %v3074 = vunpack.c.h.b16 %v2777
        %v3075 = vunpack.c.l.b16 %v2778
        %v3076 = vunpack.c.h.b16 %v2778
        %v3077 = vunpack.c.l.b16 %v2779
        %v3078 = vunpack.c.h.b16 %v2779
        %v3079 = vunpack.c.l.b16 %v2780
        %v3080 = vunpack.c.h.b16 %v2780
        %v3081 = vunpack.c.l.b16 %v2781
        %v3082 = vunpack.c.h.b16 %v2781
        %v3083 = vunpack.c.l.b16 %v2782
        %v3084 = vunpack.c.h.b16 %v2782
        %v3085 = vunpack.c.l.b16 %v2783
        %v3086 = vunpack.c.h.b16 %v2783
        %v3087 = vunpack.c.l.b16 %v2784
        %v3088 = vunpack.c.h.b16 %v2784
        %v3089 = vunpack.c.l.b16 %v2785
        %v3090 = vunpack.c.h.b16 %v2785
        %v3091 = vunpack.c.l.b16 %v2786
        %v3092 = vunpack.c.h.b16 %v2786
        %v3093 = vunpack.c.l.b16 %v2787
        %v3094 = vunpack.c.h.b16 %v2787
        %v3095 = vunpack.c.l.b16 %v2788
        %v3096 = vunpack.c.h.b16 %v2788
        %v3097 = vunpack.c.l.b16 %v2789
        %v3098 = vunpack.c.h.b16 %v2789
        %v3099 = vunpack.c.l.b16 %v2790
        %v3100 = vunpack.c.h.b16 %v2790
        %v3101 = vunpack.c.l.b16 %v2791
        %v3102 = vunpack.c.h.b16 %v2791
        %v3103 = vunpack.c.l.b16 %v2792
        %v3104 = vunpack.c.h.b16 %v2792
        %v3105 = vunpack.c.l.b16 %v2793
        %v3106 = vunpack.c.h.b16 %v2793
        %v3107 = vunpack.c.l.b16 %v2794
        %v3108 = vunpack.c.h.b16 %v2794
        %v3109 = vunpack.c.l.b16 %v2795
        %v3110 = vunpack.c.h.b16 %v2795
        %v3111 = vunpack.c.l.b16 %v2796
        %v3112 = vunpack.c.h.b16 %v2796
        %v3113 = vunpack.c.l.b16 %v2797
        %v3114 = vunpack.c.h.b16 %v2797
        %v3115 = vunpack.c.l.b16 %v2798
        %v3116 = vunpack.c.h.b16 %v2798
        %v3117 = vunpack.c.l.b16 %v2799
        %v3118 = vunpack.c.h.b16 %v2799
        %v3119 = vunpack.c.l.b16 %v2800
        %v3120 = vunpack.c.h.b16 %v2800
        %v3121 = vunpack.c.l.b16 %v2801
        %v3122 = vunpack.c.h.b16 %v2801
        %v3123 = vunpack.c.l.b16 %v2802
        %v3124 = vunpack.c.h.b16 %v2802
        %v3125 = vunpack.c.l.b16 %v2803
        %v3126 = vunpack.c.h.b16 %v2803
        %v3127 = vunpack.c.l.b16 %v2804
        %v3128 = vunpack.c.h.b16 %v2804
        %v3129 = vunpack.c.l.b16 %v2805
        %v3130 = vunpack.c.h.b16 %v2805
        %v3131 = vunpack.c.l.b16 %v2806
        %v3132 = vunpack.c.h.b16 %v2806
        %v3133 = vunpack.c.l.b16 %v2807
        %v3134 = vunpack.c.h.b16 %v2807
        %v3135 = vunpack.c.l.b16 %v2808
        %v3136 = vunpack.c.h.b16 %v2808
        %v3137 = vunpack.c.l.b16 %v2809
        %v3138 = vunpack.c.h.b16 %v2809
        %v3139 = vunpack.c.l.b16 %v2810
        %v3140 = vunpack.c.h.b16 %v2810
        %v3141 = vunpack.c.l.b16 %v2811
        %v3142 = vunpack.c.h.b16 %v2811
        %v3143 = vunpack.c.l.b16 %v2812
        %v3144 = vunpack.c.h.b16 %v2812
        %v3145 = vunpack.c.l.b16 %v2813
        %v3146 = vunpack.c.h.b16 %v2813
        %v3147 = vunpack.c.l.b16 %v2814
        %v3148 = vunpack.c.h.b16 %v2814
        %v3149 = vunpack.c.l.b16 %v2815
        %v3150 = vunpack.c.h.b16 %v2815
        %v3151 = vunpack.c.l.b16 %v2816
        %v3152 = vunpack.c.h.b16 %v2816
        %v3153 = vunpack.c.l.b16 %v2817
        %v3154 = vunpack.c.h.b16 %v2817
        %v3155 = vunpack.c.l.b16 %v2818
        %v3156 = vunpack.c.h.b16 %v2818
        %v3157 = vunpack.c.l.b16 %v2819
        %v3158 = vunpack.c.h.b16 %v2819
        %v3159 = vunpack.c.l.b16 %v2820
        %v3160 = vunpack.c.h.b16 %v2820
        %v3161 = vunpack.c.l.b16 %v2821
        %v3162 = vunpack.c.h.b16 %v2821
        %v3163 = vunpack.c.l.b16 %v2822
        %v3164 = vunpack.c.h.b16 %v2822
        %v3165 = vunpack.c.l.b16 %v2823
        %v3166 = vunpack.c.h.b16 %v2823
        %v3167 = vunpack.c.l.b16 %v2824
        %v3168 = vunpack.c.h.b16 %v2824
        %v3169 = vunpack.c.l.b16 %v2825
        %v3170 = vunpack.c.h.b16 %v2825
        %v3171 = vunpack.c.l.b16 %v2826
        %v3172 = vunpack.c.h.b16 %v2826
        %v3173 = vunpack.c.l.b16 %v2827
        %v3174 = vunpack.c.h.b16 %v2827
        %v3175 = vunpack.c.l.b16 %v2828
        %v3176 = vunpack.c.h.b16 %v2828
        %v3177 = vunpack.c.l.b16 %v2829
        %v3178 = vunpack.c.h.b16 %v2829
        %v3179 = vunpack.c.l.b16 %v2830
        %v3180 = vunpack.c.h.b16 %v2830
        %v3181 = vunpack.c.l.b16 %v2831
        %v3182 = vunpack.c.h.b16 %v2831
        %v3183 = vunpack.c.l.b16 %v2832
        %v3184 = vunpack.c.h.b16 %v2832
        %v3185 = vunpack.c.l.b16 %v2833
        %v3186 = vunpack.c.h.b16 %v2833
        %v3187 = vunpack.c.l.b16 %v2834
        %v3188 = vunpack.c.h.b16 %v2834
        %v3189 = vunpack.c.l.b16 %v2835
        %v3190 = vunpack.c.h.b16 %v2835
        %v3191 = vunpack.c.l.b16 %v2836
        %v3192 = vunpack.c.h.b16 %v2836
        %v3193 = vunpack.c.l.b16 %v2837
        %v3194 = vunpack.c.h.b16 %v2837
        %v3195 = vunpack.c.l.b16 %v2838
        %v3196 = vunpack.c.h.b16 %v2838
        %v3197 = vunpack.c.l.b16 %v2839
        %v3198 = vunpack.c.h.b16 %v2839
        %v3199 = vunpack.c.l.b16 %v2840
        %v3200 = vunpack.c.h.b16 %v2840
        %v3201 = vunpack.c.l.b16 %v2841
        %v3202 = vunpack.c.h.b16 %v2841
        %v3203 = vunpack.c.l.b16 %v2842
        %v3204 = vunpack.c.h.b16 %v2842
        %v3205 = vunpack.c.l.b16 %v2843
        %v3206 = vunpack.c.h.b16 %v2843
        %v3207 = vunpack.c.l.b16 %v2844
        %v3208 = vunpack.c.h.b16 %v2844
        %v3209 = vunpack.c.l.b16 %v2845
        %v3210 = vunpack.c.h.b16 %v2845
        %v3211 = vunpack.c.l.b16 %v2846
        %v3212 = vunpack.c.h.b16 %v2846
        %v3213 = vunpack.c.l.b16 %v2847
        %v3214 = vunpack.c.h.b16 %v2847
        %v3215 = vunpack.c.l.b16 %v2848
        %v3216 = vunpack.c.h.b16 %v2848
        %v3217 = vunpack.c.l.b16 %v2849
        %v3218 = vunpack.c.h.b16 %v2849
        %v3219 = vunpack.c.l.b16 %v2850
        %v3220 = vunpack.c.h.b16 %v2850
        %v3221 = vunpack.c.l.b16 %v2851
        %v3222 = vunpack.c.h.b16 %v2851
        %v3223 = vunpack.c.l.b16 %v2852
        %v3224 = vunpack.c.h.b16 %v2852
        %v3225 = vunpack.c.l.b16 %v2853
        %v3226 = vunpack.c.h.b16 %v2853
        %v3227 = vunpack.c.l.b16 %v2854
        %v3228 = vunpack.c.h.b16 %v2854
        %v3229 = vunpack.c.l.b16 %v2855
        %v3230 = vunpack.c.h.b16 %v2855
        %v3231 = vunpack.c.l.b16 %v2856
        %v3232 = vunpack.c.h.b16 %v2856
        %v3233 = vunpack.c.l.b16 %v2857
        %v3234 = vunpack.c.h.b16 %v2857
        %v3235 = vunpack.c.l.b16 %v2858
        %v3236 = vunpack.c.h.b16 %v2858
        %v3237 = vunpack.c.l.b16 %v2859
        %v3238 = vunpack.c.h.b16 %v2859
        %v3239 = vunpack.c.l.b16 %v2860
        %v3240 = vunpack.c.h.b16 %v2860
        %v3241 = vunpack.c.l.b16 %v2861
        %v3242 = vunpack.c.h.b16 %v2861
        %v3243 = vunpack.c.l.b16 %v2862
        %v3244 = vunpack.c.h.b16 %v2862
        %v3245 = vunpack.c.l.b16 %v2863
        %v3246 = vunpack.c.h.b16 %v2863
        %v3247 = vunpack.c.l.b16 %v2864
        %v3248 = vunpack.c.h.b16 %v2864
        %v3249 = vpack.c.b16 %v2997, %v2993
        %v3250 = vpack.c.b16 %v2998, %v2994
        %v3251 = vpack.c.b16 %v2999, %v2995
        %v3252 = vpack.c.b16 %v3000, %v2996
        %v3253 = vpack.c.b16 %v3005, %v3001
        %v3254 = vpack.c.b16 %v3006, %v3002
        %v3255 = vpack.c.b16 %v3007, %v3003
        %v3256 = vpack.c.b16 %v3008, %v3004
        %v3257 = vpack.c.b16 %v3013, %v3009
        %v3258 = vpack.c.b16 %v3014, %v3010
        %v3259 = vpack.c.b16 %v3015, %v3011
        %v3260 = vpack.c.b16 %v3016, %v3012
        %v3261 = vpack.c.b16 %v3021, %v3017
        %v3262 = vpack.c.b16 %v3022, %v3018
        %v3263 = vpack.c.b16 %v3023, %v3019
        %v3264 = vpack.c.b16 %v3024, %v3020
        %v3265 = vpack.c.b16 %v3029, %v3025
        %v3266 = vpack.c.b16 %v3030, %v3026
        %v3267 = vpack.c.b16 %v3031, %v3027
        %v3268 = vpack.c.b16 %v3032, %v3028
        %v3269 = vpack.c.b16 %v3037, %v3033
        %v3270 = vpack.c.b16 %v3038, %v3034
        %v3271 = vpack.c.b16 %v3039, %v3035
        %v3272 = vpack.c.b16 %v3040, %v3036
        %v3273 = vpack.c.b16 %v3045, %v3041
        %v3274 = vpack.c.b16 %v3046, %v3042
        %v3275 = vpack.c.b16 %v3047, %v3043
        %v3276 = vpack.c.b16 %v3048, %v3044
        %v3277 = vpack.c.b16 %v3053, %v3049
        %v3278 = vpack.c.b16 %v3054, %v3050
        %v3279 = vpack.c.b16 %v3055, %v3051
        %v3280 = vpack.c.b16 %v3056, %v3052
        %v3281 = vpack.c.b16 %v3061, %v3057
        %v3282 = vpack.c.b16 %v3062, %v3058
        %v3283 = vpack.c.b16 %v3063, %v3059
        %v3284 = vpack.c.b16 %v3064, %v3060
        %v3285 = vpack.c.b16 %v3069, %v3065
        %v3286 = vpack.c.b16 %v3070, %v3066
        %v3287 = vpack.c.b16 %v3071, %v3067
        %v3288 = vpack.c.b16 %v3072, %v3068
        %v3289 = vpack.c.b16 %v3077, %v3073
        %v3290 = vpack.c.b16 %v3078, %v3074
        %v3291 = vpack.c.b16 %v3079, %v3075
        %v3292 = vpack.c.b16 %v3080, %v3076
        %v3293 = vpack.c.b16 %v3085, %v3081
        %v3294 = vpack.c.b16 %v3086, %v3082
        %v3295 = vpack.c.b16 %v3087, %v3083
        %v3296 = vpack.c.b16 %v3088, %v3084
        %v3297 = vpack.c.b16 %v3093, %v3089
        %v3298 = vpack.c.b16 %v3094, %v3090
        %v3299 = vpack.c.b16 %v3095, %v3091
        %v3300 = vpack.c.b16 %v3096, %v3092
        %v3301 = vpack.c.b16 %v3101, %v3097
        %v3302 = vpack.c.b16 %v3102, %v3098
        %v3303 = vpack.c.b16 %v3103, %v3099
        %v3304 = vpack.c.b16 %v3104, %v3100
        %v3305 = vpack.c.b16 %v3109, %v3105
        %v3306 = vpack.c.b16 %v3110, %v3106
        %v3307 = vpack.c.b16 %v3111, %v3107
        %v3308 = vpack.c.b16 %v3112, %v3108
        %v3309 = vpack.c.b16 %v3117, %v3113
        %v3310 = vpack.c.b16 %v3118, %v3114
        %v3311 = vpack.c.b16 %v3119, %v3115
        %v3312 = vpack.c.b16 %v3120, %v3116
        %v3313 = vpack.c.b16 %v3125, %v3121
        %v3314 = vpack.c.b16 %v3126, %v3122
        %v3315 = vpack.c.b16 %v3127, %v3123
        %v3316 = vpack.c.b16 %v3128, %v3124
        %v3317 = vpack.c.b16 %v3133, %v3129
        %v3318 = vpack.c.b16 %v3134, %v3130
        %v3319 = vpack.c.b16 %v3135, %v3131
        %v3320 = vpack.c.b16 %v3136, %v3132
        %v3321 = vpack.c.b16 %v3141, %v3137
        %v3322 = vpack.c.b16 %v3142, %v3138
        %v3323 = vpack.c.b16 %v3143, %v3139
        %v3324 = vpack.c.b16 %v3144, %v3140
        %v3325 = vpack.c.b16 %v3149, %v3145
        %v3326 = vpack.c.b16 %v3150, %v3146
        %v3327 = vpack.c.b16 %v3151, %v3147
        %v3328 = vpack.c.b16 %v3152, %v3148
        %v3329 = vpack.c.b16 %v3157, %v3153
        %v3330 = vpack.c.b16 %v3158, %v3154
        %v3331 = vpack.c.b16 %v3159, %v3155
        %v3332 = vpack.c.b16 %v3160, %v3156
        %v3333 = vpack.c.b16 %v3165, %v3161
        %v3334 = vpack.c.b16 %v3166, %v3162
        %v3335 = vpack.c.b16 %v3167, %v3163
        %v3336 = vpack.c.b16 %v3168, %v3164
        %v3337 = vpack.c.b16 %v3173, %v3169
        %v3338 = vpack.c.b16 %v3174, %v3170
        %v3339 = vpack.c.b16 %v3175, %v3171
        %v3340 = vpack.c.b16 %v3176, %v3172
        %v3341 = vpack.c.b16 %v3181, %v3177
        %v3342 = vpack.c.b16 %v3182, %v3178
        %v3343 = vpack.c.b16 %v3183, %v3179
        %v3344 = vpack.c.b16 %v3184, %v3180
        %v3345 = vpack.c.b16 %v3189, %v3185
        %v3346 = vpack.c.b16 %v3190, %v3186
        %v3347 = vpack.c.b16 %v3191, %v3187
        %v3348 = vpack.c.b16 %v3192, %v3188
        %v3349 = vpack.c.b16 %v3197, %v3193
        %v3350 = vpack.c.b16 %v3198, %v3194
        %v3351 = vpack.c.b16 %v3199, %v3195
        %v3352 = vpack.c.b16 %v3200, %v3196
        %v3353 = vpack.c.b16 %v3205, %v3201
        %v3354 = vpack.c.b16 %v3206, %v3202
        %v3355 = vpack.c.b16 %v3207, %v3203
        %v3356 = vpack.c.b16 %v3208, %v3204
        %v3357 = vpack.c.b16 %v3213, %v3209
        %v3358 = vpack.c.b16 %v3214, %v3210
        %v3359 = vpack.c.b16 %v3215, %v3211
        %v3360 = vpack.c.b16 %v3216, %v3212
        %v3361 = vpack.c.b16 %v3221, %v3217
        %v3362 = vpack.c.b16 %v3222, %v3218
        %v3363 = vpack.c.b16 %v3223, %v3219
        %v3364 = vpack.c.b16 %v3224, %v3220
        %v3365 = vpack.c.b16 %v3229, %v3225
        %v3366 = vpack.c.b16 %v3230, %v3226
        %v3367 = vpack.c.b16 %v3231, %v3227
        %v3368 = vpack.c.b16 %v3232, %v3228
        %v3369 = vpack.c.b16 %v3237, %v3233
        %v3370 = vpack.c.b16 %v3238, %v3234
        %v3371 = vpack.c.b16 %v3239, %v3235
        %v3372 = vpack.c.b16 %v3240, %v3236
        %v3373 = vpack.c.b16 %v3245, %v3241
        %v3374 = vpack.c.b16 %v3246, %v3242
        %v3375 = vpack.c.b16 %v3247, %v3243
        %v3376 = vpack.c.b16 %v3248, %v3244
        %3505 = vmatpush.bf16.msra.mxu0 %v3277
        %3506 = vmatpush.bf16.msra.mxu0 %v3273
        %3507 = vmatpush.bf16.msra.mxu0 %v3269
        %3508 = vmatpush.bf16.msra.mxu0 %v3265
        %3509 = vmatpush.bf16.msra.mxu0 %v3261
        %3510 = vmatpush.bf16.msra.mxu0 %v3257
        %3511 = vmatpush.bf16.msra.mxu0 %v3253
        %3512 = vmatpush.bf16.msra.mxu0 %v3249
        %3513 = vmatmul.bf16.gmra.mxu0 %v2705
        %v3514 = vpop.f32.mrf.mxu0
        %v3515 = vadd.f32 0.0, %v3514
        %v3516 = vpop.f32.mrf.mxu0
        %v3517 = vadd.f32 0.0, %v3516
        %3518 = vmatmul.bf16.gmra.mxu0 %v2709
        %v3519 = vpop.f32.mrf.mxu0
        %v3520 = vadd.f32 0.0, %v3519
        %v3521 = vpop.f32.mrf.mxu0
        %v3522 = vadd.f32 0.0, %v3521
        %3523 = vmatmul.bf16.gmra.mxu0 %v2713
        %v3524 = vpop.f32.mrf.mxu0
        %v3525 = vadd.f32 0.0, %v3524
        %v3526 = vpop.f32.mrf.mxu0
        %v3527 = vadd.f32 0.0, %v3526
        %3528 = vmatmul.bf16.gmra.mxu0 %v2717
        %v3529 = vpop.f32.mrf.mxu0
        %v3530 = vadd.f32 0.0, %v3529
        %v3531 = vpop.f32.mrf.mxu0
        %v3532 = vadd.f32 0.0, %v3531
        %3533 = vmatmul.bf16.gmra.mxu0 %v2721
        %v3534 = vpop.f32.mrf.mxu0
        %v3535 = vadd.f32 0.0, %v3534
        %v3536 = vpop.f32.mrf.mxu0
        %v3537 = vadd.f32 0.0, %v3536
        %3538 = vmatmul.bf16.gmra.mxu0 %v2725
        %v3539 = vpop.f32.mrf.mxu0
        %v3540 = vadd.f32 0.0, %v3539
        %v3541 = vpop.f32.mrf.mxu0
        %v3542 = vadd.f32 0.0, %v3541
        %3543 = vmatmul.bf16.gmra.mxu0 %v2729
        %v3544 = vpop.f32.mrf.mxu0
        %v3545 = vadd.f32 0.0, %v3544
        %v3546 = vpop.f32.mrf.mxu0
        %v3547 = vadd.f32 0.0, %v3546
        %3548 = vmatmul.bf16.gmra.mxu0 %v2733
        %v3549 = vpop.f32.mrf.mxu0
        %v3550 = vadd.f32 0.0, %v3549
        %v3551 = vpop.f32.mrf.mxu0
        %v3552 = vadd.f32 0.0, %v3551
        %3553 = vdwg.mxu0
        %3554 = vmatpush.bf16.msra.mxu0 %v3309
        %3555 = vmatpush.bf16.msra.mxu0 %v3305
        %3556 = vmatpush.bf16.msra.mxu0 %v3301
        %3557 = vmatpush.bf16.msra.mxu0 %v3297
        %3558 = vmatpush.bf16.msra.mxu0 %v3293
        %3559 = vmatpush.bf16.msra.mxu0 %v3289
        %3560 = vmatpush.bf16.msra.mxu0 %v3285
        %3561 = vmatpush.bf16.msra.mxu0 %v3281
        %3562 = vmatmul.bf16.gmra.mxu0 %v2706
        %v3563 = vpop.f32.mrf.mxu0
        %v3564 = vadd.f32 %v3515, %v3563
        %v3565 = vpop.f32.mrf.mxu0
        %v3566 = vadd.f32 %v3517, %v3565
        %3567 = vmatmul.bf16.gmra.mxu0 %v2710
        %v3568 = vpop.f32.mrf.mxu0
        %v3569 = vadd.f32 %v3520, %v3568
        %v3570 = vpop.f32.mrf.mxu0
        %v3571 = vadd.f32 %v3522, %v3570
        %3572 = vmatmul.bf16.gmra.mxu0 %v2714
        %v3573 = vpop.f32.mrf.mxu0
        %v3574 = vadd.f32 %v3525, %v3573
        %v3575 = vpop.f32.mrf.mxu0
        %v3576 = vadd.f32 %v3527, %v3575
        %3577 = vmatmul.bf16.gmra.mxu0 %v2718
        %v3578 = vpop.f32.mrf.mxu0
        %v3579 = vadd.f32 %v3530, %v3578
        %v3580 = vpop.f32.mrf.mxu0
        %v3581 = vadd.f32 %v3532, %v3580
        %3582 = vmatmul.bf16.gmra.mxu0 %v2722
        %v3583 = vpop.f32.mrf.mxu0
        %v3584 = vadd.f32 %v3535, %v3583
        %v3585 = vpop.f32.mrf.mxu0
        %v3586 = vadd.f32 %v3537, %v3585
        %3587 = vmatmul.bf16.gmra.mxu0 %v2726
        %v3588 = vpop.f32.mrf.mxu0
        %v3589 = vadd.f32 %v3540, %v3588
        %v3590 = vpop.f32.mrf.mxu0
        %v3591 = vadd.f32 %v3542, %v3590
        %3592 = vmatmul.bf16.gmra.mxu0 %v2730
        %v3593 = vpop.f32.mrf.mxu0
        %v3594 = vadd.f32 %v3545, %v3593
        %v3595 = vpop.f32.mrf.mxu0
        %v3596 = vadd.f32 %v3547, %v3595
        %3597 = vmatmul.bf16.gmra.mxu0 %v2734
        %v3598 = vpop.f32.mrf.mxu0
        %v3599 = vadd.f32 %v3550, %v3598
        %v3600 = vpop.f32.mrf.mxu0
        %v3601 = vadd.f32 %v3552, %v3600
        %3602 = vdwg.mxu0
        %3603 = vmatpush.bf16.msra.mxu0 %v3341
        %3604 = vmatpush.bf16.msra.mxu0 %v3337
        %3605 = vmatpush.bf16.msra.mxu0 %v3333
        %3606 = vmatpush.bf16.msra.mxu0 %v3329
        %3607 = vmatpush.bf16.msra.mxu0 %v3325
        %3608 = vmatpush.bf16.msra.mxu0 %v3321
        %3609 = vmatpush.bf16.msra.mxu0 %v3317
        %3610 = vmatpush.bf16.msra.mxu0 %v3313
        %3611 = vmatmul.bf16.gmra.mxu0 %v2707
        %v3612 = vpop.f32.mrf.mxu0
        %v3613 = vadd.f32 %v3564, %v3612
        %v3614 = vpop.f32.mrf.mxu0
        %v3615 = vadd.f32 %v3566, %v3614
        %3616 = vmatmul.bf16.gmra.mxu0 %v2711
        %v3617 = vpop.f32.mrf.mxu0
        %v3618 = vadd.f32 %v3569, %v3617
        %v3619 = vpop.f32.mrf.mxu0
        %v3620 = vadd.f32 %v3571, %v3619
        %3621 = vmatmul.bf16.gmra.mxu0 %v2715
        %v3622 = vpop.f32.mrf.mxu0
        %v3623 = vadd.f32 %v3574, %v3622
        %v3624 = vpop.f32.mrf.mxu0
        %v3625 = vadd.f32 %v3576, %v3624
        %3626 = vmatmul.bf16.gmra.mxu0 %v2719
        %v3627 = vpop.f32.mrf.mxu0
        %v3628 = vadd.f32 %v3579, %v3627
        %v3629 = vpop.f32.mrf.mxu0
        %v3630 = vadd.f32 %v3581, %v3629
        %3631 = vmatmul.bf16.gmra.mxu0 %v2723
        %v3632 = vpop.f32.mrf.mxu0
        %v3633 = vadd.f32 %v3584, %v3632
        %v3634 = vpop.f32.mrf.mxu0
        %v3635 = vadd.f32 %v3586, %v3634
        %3636 = vmatmul.bf16.gmra.mxu0 %v2727
        %v3637 = vpop.f32.mrf.mxu0
        %v3638 = vadd.f32 %v3589, %v3637
        %v3639 = vpop.f32.mrf.mxu0
        %v3640 = vadd.f32 %v3591, %v3639
        %3641 = vmatmul.bf16.gmra.mxu0 %v2731
        %v3642 = vpop.f32.mrf.mxu0
        %v3643 = vadd.f32 %v3594, %v3642
        %v3644 = vpop.f32.mrf.mxu0
        %v3645 = vadd.f32 %v3596, %v3644
        %3646 = vmatmul.bf16.gmra.mxu0 %v2735
        %v3647 = vpop.f32.mrf.mxu0
        %v3648 = vadd.f32 %v3599, %v3647
        %v3649 = vpop.f32.mrf.mxu0
        %v3650 = vadd.f32 %v3601, %v3649
        %3651 = vdwg.mxu0
        %3652 = vmatpush.bf16.msra.mxu0 %v3373
        %3653 = vmatpush.bf16.msra.mxu0 %v3369
        %3654 = vmatpush.bf16.msra.mxu0 %v3365
        %3655 = vmatpush.bf16.msra.mxu0 %v3361
        %3656 = vmatpush.bf16.msra.mxu0 %v3357
        %3657 = vmatpush.bf16.msra.mxu0 %v3353
        %3658 = vmatpush.bf16.msra.mxu0 %v3349
        %3659 = vmatpush.bf16.msra.mxu0 %v3345
        %3660 = vmatmul.bf16.gmra.mxu0 %v2708
        %v3661 = vpop.f32.mrf.mxu0
        %v3662 = vadd.f32 %v3613, %v3661
        %v3663 = vpop.f32.mrf.mxu0
        %v3664 = vadd.f32 %v3615, %v3663
        %3665 = vmatmul.bf16.gmra.mxu0 %v2712
        %v3666 = vpop.f32.mrf.mxu0
        %v3667 = vadd.f32 %v3618, %v3666
        %v3668 = vpop.f32.mrf.mxu0
        %v3669 = vadd.f32 %v3620, %v3668
        %3670 = vmatmul.bf16.gmra.mxu0 %v2716
        %v3671 = vpop.f32.mrf.mxu0
        %v3672 = vadd.f32 %v3623, %v3671
        %v3673 = vpop.f32.mrf.mxu0
        %v3674 = vadd.f32 %v3625, %v3673
        %3675 = vmatmul.bf16.gmra.mxu0 %v2720
        %v3676 = vpop.f32.mrf.mxu0
        %v3677 = vadd.f32 %v3628, %v3676
        %v3678 = vpop.f32.mrf.mxu0
        %v3679 = vadd.f32 %v3630, %v3678
        %3680 = vmatmul.bf16.gmra.mxu0 %v2724
        %v3681 = vpop.f32.mrf.mxu0
        %v3682 = vadd.f32 %v3633, %v3681
        %v3683 = vpop.f32.mrf.mxu0
        %v3684 = vadd.f32 %v3635, %v3683
        %3685 = vmatmul.bf16.gmra.mxu0 %v2728
        %v3686 = vpop.f32.mrf.mxu0
        %v3687 = vadd.f32 %v3638, %v3686
        %v3688 = vpop.f32.mrf.mxu0
        %v3689 = vadd.f32 %v3640, %v3688
        %3690 = vmatmul.bf16.gmra.mxu0 %v2732
        %v3691 = vpop.f32.mrf.mxu0
        %v3692 = vadd.f32 %v3643, %v3691
        %v3693 = vpop.f32.mrf.mxu0
        %v3694 = vadd.f32 %v3645, %v3693
        %3695 = vmatmul.bf16.gmra.mxu0 %v2736
        %v3696 = vpop.f32.mrf.mxu0
        %v3697 = vadd.f32 %v3648, %v3696
        %v3698 = vpop.f32.mrf.mxu0
        %v3699 = vadd.f32 %v3650, %v3698
        %3700 = vdwg.mxu0
        %3701 = vmatpush.bf16.msra.mxu0 %v3278
        %3702 = vmatpush.bf16.msra.mxu0 %v3274
        %3703 = vmatpush.bf16.msra.mxu0 %v3270
        %3704 = vmatpush.bf16.msra.mxu0 %v3266
        %3705 = vmatpush.bf16.msra.mxu0 %v3262
        %3706 = vmatpush.bf16.msra.mxu0 %v3258
        %3707 = vmatpush.bf16.msra.mxu0 %v3254
        %3708 = vmatpush.bf16.msra.mxu0 %v3250
        %3709 = vmatmul.bf16.gmra.mxu0 %v2705
        %v3710 = vpop.f32.mrf.mxu0
        %v3711 = vadd.f32 0.0, %v3710
        %v3712 = vpop.f32.mrf.mxu0
        %v3713 = vadd.f32 0.0, %v3712
        %3714 = vmatmul.bf16.gmra.mxu0 %v2709
        %v3715 = vpop.f32.mrf.mxu0
        %v3716 = vadd.f32 0.0, %v3715
        %v3717 = vpop.f32.mrf.mxu0
        %v3718 = vadd.f32 0.0, %v3717
        %3719 = vmatmul.bf16.gmra.mxu0 %v2713
        %v3720 = vpop.f32.mrf.mxu0
        %v3721 = vadd.f32 0.0, %v3720
        %v3722 = vpop.f32.mrf.mxu0
        %v3723 = vadd.f32 0.0, %v3722
        %3724 = vmatmul.bf16.gmra.mxu0 %v2717
        %v3725 = vpop.f32.mrf.mxu0
        %v3726 = vadd.f32 0.0, %v3725
        %v3727 = vpop.f32.mrf.mxu0
        %v3728 = vadd.f32 0.0, %v3727
        %3729 = vmatmul.bf16.gmra.mxu0 %v2721
        %v3730 = vpop.f32.mrf.mxu0
        %v3731 = vadd.f32 0.0, %v3730
        %v3732 = vpop.f32.mrf.mxu0
        %v3733 = vadd.f32 0.0, %v3732
        %3734 = vmatmul.bf16.gmra.mxu0 %v2725
        %v3735 = vpop.f32.mrf.mxu0
        %v3736 = vadd.f32 0.0, %v3735
        %v3737 = vpop.f32.mrf.mxu0
        %v3738 = vadd.f32 0.0, %v3737
        %3739 = vmatmul.bf16.gmra.mxu0 %v2729
        %v3740 = vpop.f32.mrf.mxu0
        %v3741 = vadd.f32 0.0, %v3740
        %v3742 = vpop.f32.mrf.mxu0
        %v3743 = vadd.f32 0.0, %v3742
        %3744 = vmatmul.bf16.gmra.mxu0 %v2733
        %v3745 = vpop.f32.mrf.mxu0
        %v3746 = vadd.f32 0.0, %v3745
        %v3747 = vpop.f32.mrf.mxu0
        %v3748 = vadd.f32 0.0, %v3747
        %3749 = vdwg.mxu0
        %3750 = vmatpush.bf16.msra.mxu0 %v3310
        %3751 = vmatpush.bf16.msra.mxu0 %v3306
        %3752 = vmatpush.bf16.msra.mxu0 %v3302
        %3753 = vmatpush.bf16.msra.mxu0 %v3298
        %3754 = vmatpush.bf16.msra.mxu0 %v3294
        %3755 = vmatpush.bf16.msra.mxu0 %v3290
        %3756 = vmatpush.bf16.msra.mxu0 %v3286
        %3757 = vmatpush.bf16.msra.mxu0 %v3282
        %3758 = vmatmul.bf16.gmra.mxu0 %v2706
        %v3759 = vpop.f32.mrf.mxu0
        %v3760 = vadd.f32 %v3711, %v3759
        %v3761 = vpop.f32.mrf.mxu0
        %v3762 = vadd.f32 %v3713, %v3761
        %3763 = vmatmul.bf16.gmra.mxu0 %v2710
        %v3764 = vpop.f32.mrf.mxu0
        %v3765 = vadd.f32 %v3716, %v3764
        %v3766 = vpop.f32.mrf.mxu0
        %v3767 = vadd.f32 %v3718, %v3766
        %3768 = vmatmul.bf16.gmra.mxu0 %v2714
        %v3769 = vpop.f32.mrf.mxu0
        %v3770 = vadd.f32 %v3721, %v3769
        %v3771 = vpop.f32.mrf.mxu0
        %v3772 = vadd.f32 %v3723, %v3771
        %3773 = vmatmul.bf16.gmra.mxu0 %v2718
        %v3774 = vpop.f32.mrf.mxu0
        %v3775 = vadd.f32 %v3726, %v3774
        %v3776 = vpop.f32.mrf.mxu0
        %v3777 = vadd.f32 %v3728, %v3776
        %3778 = vmatmul.bf16.gmra.mxu0 %v2722
        %v3779 = vpop.f32.mrf.mxu0
        %v3780 = vadd.f32 %v3731, %v3779
        %v3781 = vpop.f32.mrf.mxu0
        %v3782 = vadd.f32 %v3733, %v3781
        %3783 = vmatmul.bf16.gmra.mxu0 %v2726
        %v3784 = vpop.f32.mrf.mxu0
        %v3785 = vadd.f32 %v3736, %v3784
        %v3786 = vpop.f32.mrf.mxu0
        %v3787 = vadd.f32 %v3738, %v3786
        %3788 = vmatmul.bf16.gmra.mxu0 %v2730
        %v3789 = vpop.f32.mrf.mxu0
        %v3790 = vadd.f32 %v3741, %v3789
        %v3791 = vpop.f32.mrf.mxu0
        %v3792 = vadd.f32 %v3743, %v3791
        %3793 = vmatmul.bf16.gmra.mxu0 %v2734
        %v3794 = vpop.f32.mrf.mxu0
        %v3795 = vadd.f32 %v3746, %v3794
        %v3796 = vpop.f32.mrf.mxu0
        %v3797 = vadd.f32 %v3748, %v3796
        %3798 = vdwg.mxu0
        %3799 = vmatpush.bf16.msra.mxu0 %v3342
        %3800 = vmatpush.bf16.msra.mxu0 %v3338
        %3801 = vmatpush.bf16.msra.mxu0 %v3334
        %3802 = vmatpush.bf16.msra.mxu0 %v3330
        %3803 = vmatpush.bf16.msra.mxu0 %v3326
        %3804 = vmatpush.bf16.msra.mxu0 %v3322
        %3805 = vmatpush.bf16.msra.mxu0 %v3318
        %3806 = vmatpush.bf16.msra.mxu0 %v3314
        %3807 = vmatmul.bf16.gmra.mxu0 %v2707
        %v3808 = vpop.f32.mrf.mxu0
        %v3809 = vadd.f32 %v3760, %v3808
        %v3810 = vpop.f32.mrf.mxu0
        %v3811 = vadd.f32 %v3762, %v3810
        %3812 = vmatmul.bf16.gmra.mxu0 %v2711
        %v3813 = vpop.f32.mrf.mxu0
        %v3814 = vadd.f32 %v3765, %v3813
        %v3815 = vpop.f32.mrf.mxu0
        %v3816 = vadd.f32 %v3767, %v3815
        %3817 = vmatmul.bf16.gmra.mxu0 %v2715
        %v3818 = vpop.f32.mrf.mxu0
        %v3819 = vadd.f32 %v3770, %v3818
        %v3820 = vpop.f32.mrf.mxu0
        %v3821 = vadd.f32 %v3772, %v3820
        %3822 = vmatmul.bf16.gmra.mxu0 %v2719
        %v3823 = vpop.f32.mrf.mxu0
        %v3824 = vadd.f32 %v3775, %v3823
        %v3825 = vpop.f32.mrf.mxu0
        %v3826 = vadd.f32 %v3777, %v3825
        %3827 = vmatmul.bf16.gmra.mxu0 %v2723
        %v3828 = vpop.f32.mrf.mxu0
        %v3829 = vadd.f32 %v3780, %v3828
        %v3830 = vpop.f32.mrf.mxu0
        %v3831 = vadd.f32 %v3782, %v3830
        %3832 = vmatmul.bf16.gmra.mxu0 %v2727
        %v3833 = vpop.f32.mrf.mxu0
        %v3834 = vadd.f32 %v3785, %v3833
        %v3835 = vpop.f32.mrf.mxu0
        %v3836 = vadd.f32 %v3787, %v3835
        %3837 = vmatmul.bf16.gmra.mxu0 %v2731
        %v3838 = vpop.f32.mrf.mxu0
        %v3839 = vadd.f32 %v3790, %v3838
        %v3840 = vpop.f32.mrf.mxu0
        %v3841 = vadd.f32 %v3792, %v3840
        %3842 = vmatmul.bf16.gmra.mxu0 %v2735
        %v3843 = vpop.f32.mrf.mxu0
        %v3844 = vadd.f32 %v3795, %v3843
        %v3845 = vpop.f32.mrf.mxu0
        %v3846 = vadd.f32 %v3797, %v3845
        %3847 = vdwg.mxu0
        %3848 = vmatpush.bf16.msra.mxu0 %v3374
        %3849 = vmatpush.bf16.msra.mxu0 %v3370
        %3850 = vmatpush.bf16.msra.mxu0 %v3366
        %3851 = vmatpush.bf16.msra.mxu0 %v3362
        %3852 = vmatpush.bf16.msra.mxu0 %v3358
        %3853 = vmatpush.bf16.msra.mxu0 %v3354
        %3854 = vmatpush.bf16.msra.mxu0 %v3350
        %3855 = vmatpush.bf16.msra.mxu0 %v3346
        %3856 = vmatmul.bf16.gmra.mxu0 %v2708
        %v3857 = vpop.f32.mrf.mxu0
        %v3858 = vadd.f32 %v3809, %v3857
        %v3859 = vpop.f32.mrf.mxu0
        %v3860 = vadd.f32 %v3811, %v3859
        %3861 = vmatmul.bf16.gmra.mxu0 %v2712
        %v3862 = vpop.f32.mrf.mxu0
        %v3863 = vadd.f32 %v3814, %v3862
        %v3864 = vpop.f32.mrf.mxu0
        %v3865 = vadd.f32 %v3816, %v3864
        %3866 = vmatmul.bf16.gmra.mxu0 %v2716
        %v3867 = vpop.f32.mrf.mxu0
        %v3868 = vadd.f32 %v3819, %v3867
        %v3869 = vpop.f32.mrf.mxu0
        %v3870 = vadd.f32 %v3821, %v3869
        %3871 = vmatmul.bf16.gmra.mxu0 %v2720
        %v3872 = vpop.f32.mrf.mxu0
        %v3873 = vadd.f32 %v3824, %v3872
        %v3874 = vpop.f32.mrf.mxu0
        %v3875 = vadd.f32 %v3826, %v3874
        %3876 = vmatmul.bf16.gmra.mxu0 %v2724
        %v3877 = vpop.f32.mrf.mxu0
        %v3878 = vadd.f32 %v3829, %v3877
        %v3879 = vpop.f32.mrf.mxu0
        %v3880 = vadd.f32 %v3831, %v3879
        %3881 = vmatmul.bf16.gmra.mxu0 %v2728
        %v3882 = vpop.f32.mrf.mxu0
        %v3883 = vadd.f32 %v3834, %v3882
        %v3884 = vpop.f32.mrf.mxu0
        %v3885 = vadd.f32 %v3836, %v3884
        %3886 = vmatmul.bf16.gmra.mxu0 %v2732
        %v3887 = vpop.f32.mrf.mxu0
        %v3888 = vadd.f32 %v3839, %v3887
        %v3889 = vpop.f32.mrf.mxu0
        %v3890 = vadd.f32 %v3841, %v3889
        %3891 = vmatmul.bf16.gmra.mxu0 %v2736
        %v3892 = vpop.f32.mrf.mxu0
        %v3893 = vadd.f32 %v3844, %v3892
        %v3894 = vpop.f32.mrf.mxu0
        %v3895 = vadd.f32 %v3846, %v3894
        %3896 = vdwg.mxu0
        %3897 = vmatpush.bf16.msra.mxu0 %v3279
        %3898 = vmatpush.bf16.msra.mxu0 %v3275
        %3899 = vmatpush.bf16.msra.mxu0 %v3271
        %3900 = vmatpush.bf16.msra.mxu0 %v3267
        %3901 = vmatpush.bf16.msra.mxu0 %v3263
        %3902 = vmatpush.bf16.msra.mxu0 %v3259
        %3903 = vmatpush.bf16.msra.mxu0 %v3255
        %3904 = vmatpush.bf16.msra.mxu0 %v3251
        %3905 = vmatmul.bf16.gmra.mxu0 %v2705
        %v3906 = vpop.f32.mrf.mxu0
        %v3907 = vadd.f32 0.0, %v3906
        %v3908 = vpop.f32.mrf.mxu0
        %v3909 = vadd.f32 0.0, %v3908
        %3910 = vmatmul.bf16.gmra.mxu0 %v2709
        %v3911 = vpop.f32.mrf.mxu0
        %v3912 = vadd.f32 0.0, %v3911
        %v3913 = vpop.f32.mrf.mxu0
        %v3914 = vadd.f32 0.0, %v3913
        %3915 = vmatmul.bf16.gmra.mxu0 %v2713
        %v3916 = vpop.f32.mrf.mxu0
        %v3917 = vadd.f32 0.0, %v3916
        %v3918 = vpop.f32.mrf.mxu0
        %v3919 = vadd.f32 0.0, %v3918
        %3920 = vmatmul.bf16.gmra.mxu0 %v2717
        %v3921 = vpop.f32.mrf.mxu0
        %v3922 = vadd.f32 0.0, %v3921
        %v3923 = vpop.f32.mrf.mxu0
        %v3924 = vadd.f32 0.0, %v3923
        %3925 = vmatmul.bf16.gmra.mxu0 %v2721
        %v3926 = vpop.f32.mrf.mxu0
        %v3927 = vadd.f32 0.0, %v3926
        %v3928 = vpop.f32.mrf.mxu0
        %v3929 = vadd.f32 0.0, %v3928
        %3930 = vmatmul.bf16.gmra.mxu0 %v2725
        %v3931 = vpop.f32.mrf.mxu0
        %v3932 = vadd.f32 0.0, %v3931
        %v3933 = vpop.f32.mrf.mxu0
        %v3934 = vadd.f32 0.0, %v3933
        %3935 = vmatmul.bf16.gmra.mxu0 %v2729
        %v3936 = vpop.f32.mrf.mxu0
        %v3937 = vadd.f32 0.0, %v3936
        %v3938 = vpop.f32.mrf.mxu0
        %v3939 = vadd.f32 0.0, %v3938
        %3940 = vmatmul.bf16.gmra.mxu0 %v2733
        %v3941 = vpop.f32.mrf.mxu0
        %v3942 = vadd.f32 0.0, %v3941
        %v3943 = vpop.f32.mrf.mxu0
        %v3944 = vadd.f32 0.0, %v3943
        %3945 = vdwg.mxu0
        %3946 = vmatpush.bf16.msra.mxu0 %v3311
        %3947 = vmatpush.bf16.msra.mxu0 %v3307
        %3948 = vmatpush.bf16.msra.mxu0 %v3303
        %3949 = vmatpush.bf16.msra.mxu0 %v3299
        %3950 = vmatpush.bf16.msra.mxu0 %v3295
        %3951 = vmatpush.bf16.msra.mxu0 %v3291
        %3952 = vmatpush.bf16.msra.mxu0 %v3287
        %3953 = vmatpush.bf16.msra.mxu0 %v3283
        %3954 = vmatmul.bf16.gmra.mxu0 %v2706
        %v3955 = vpop.f32.mrf.mxu0
        %v3956 = vadd.f32 %v3907, %v3955
        %v3957 = vpop.f32.mrf.mxu0
        %v3958 = vadd.f32 %v3909, %v3957
        %3959 = vmatmul.bf16.gmra.mxu0 %v2710
        %v3960 = vpop.f32.mrf.mxu0
        %v3961 = vadd.f32 %v3912, %v3960
        %v3962 = vpop.f32.mrf.mxu0
        %v3963 = vadd.f32 %v3914, %v3962
        %3964 = vmatmul.bf16.gmra.mxu0 %v2714
        %v3965 = vpop.f32.mrf.mxu0
        %v3966 = vadd.f32 %v3917, %v3965
        %v3967 = vpop.f32.mrf.mxu0
        %v3968 = vadd.f32 %v3919, %v3967
        %3969 = vmatmul.bf16.gmra.mxu0 %v2718
        %v3970 = vpop.f32.mrf.mxu0
        %v3971 = vadd.f32 %v3922, %v3970
        %v3972 = vpop.f32.mrf.mxu0
        %v3973 = vadd.f32 %v3924, %v3972
        %3974 = vmatmul.bf16.gmra.mxu0 %v2722
        %v3975 = vpop.f32.mrf.mxu0
        %v3976 = vadd.f32 %v3927, %v3975
        %v3977 = vpop.f32.mrf.mxu0
        %v3978 = vadd.f32 %v3929, %v3977
        %3979 = vmatmul.bf16.gmra.mxu0 %v2726
        %v3980 = vpop.f32.mrf.mxu0
        %v3981 = vadd.f32 %v3932, %v3980
        %v3982 = vpop.f32.mrf.mxu0
        %v3983 = vadd.f32 %v3934, %v3982
        %3984 = vmatmul.bf16.gmra.mxu0 %v2730
        %v3985 = vpop.f32.mrf.mxu0
        %v3986 = vadd.f32 %v3937, %v3985
        %v3987 = vpop.f32.mrf.mxu0
        %v3988 = vadd.f32 %v3939, %v3987
        %3989 = vmatmul.bf16.gmra.mxu0 %v2734
        %v3990 = vpop.f32.mrf.mxu0
        %v3991 = vadd.f32 %v3942, %v3990
        %v3992 = vpop.f32.mrf.mxu0
        %v3993 = vadd.f32 %v3944, %v3992
        %3994 = vdwg.mxu0
        %3995 = vmatpush.bf16.msra.mxu0 %v3343
        %3996 = vmatpush.bf16.msra.mxu0 %v3339
        %3997 = vmatpush.bf16.msra.mxu0 %v3335
        %3998 = vmatpush.bf16.msra.mxu0 %v3331
        %3999 = vmatpush.bf16.msra.mxu0 %v3327
        %4000 = vmatpush.bf16.msra.mxu0 %v3323
        %4001 = vmatpush.bf16.msra.mxu0 %v3319
        %4002 = vmatpush.bf16.msra.mxu0 %v3315
        %4003 = vmatmul.bf16.gmra.mxu0 %v2707
        %v4004 = vpop.f32.mrf.mxu0
        %v4005 = vadd.f32 %v3956, %v4004
        %v4006 = vpop.f32.mrf.mxu0
        %v4007 = vadd.f32 %v3958, %v4006
        %4008 = vmatmul.bf16.gmra.mxu0 %v2711
        %v4009 = vpop.f32.mrf.mxu0
        %v4010 = vadd.f32 %v3961, %v4009
        %v4011 = vpop.f32.mrf.mxu0
        %v4012 = vadd.f32 %v3963, %v4011
        %4013 = vmatmul.bf16.gmra.mxu0 %v2715
        %v4014 = vpop.f32.mrf.mxu0
        %v4015 = vadd.f32 %v3966, %v4014
        %v4016 = vpop.f32.mrf.mxu0
        %v4017 = vadd.f32 %v3968, %v4016
        %4018 = vmatmul.bf16.gmra.mxu0 %v2719
        %v4019 = vpop.f32.mrf.mxu0
        %v4020 = vadd.f32 %v3971, %v4019
        %v4021 = vpop.f32.mrf.mxu0
        %v4022 = vadd.f32 %v3973, %v4021
        %4023 = vmatmul.bf16.gmra.mxu0 %v2723
        %v4024 = vpop.f32.mrf.mxu0
        %v4025 = vadd.f32 %v3976, %v4024
        %v4026 = vpop.f32.mrf.mxu0
        %v4027 = vadd.f32 %v3978, %v4026
        %4028 = vmatmul.bf16.gmra.mxu0 %v2727
        %v4029 = vpop.f32.mrf.mxu0
        %v4030 = vadd.f32 %v3981, %v4029
        %v4031 = vpop.f32.mrf.mxu0
        %v4032 = vadd.f32 %v3983, %v4031
        %4033 = vmatmul.bf16.gmra.mxu0 %v2731
        %v4034 = vpop.f32.mrf.mxu0
        %v4035 = vadd.f32 %v3986, %v4034
        %v4036 = vpop.f32.mrf.mxu0
        %v4037 = vadd.f32 %v3988, %v4036
        %4038 = vmatmul.bf16.gmra.mxu0 %v2735
        %v4039 = vpop.f32.mrf.mxu0
        %v4040 = vadd.f32 %v3991, %v4039
        %v4041 = vpop.f32.mrf.mxu0
        %v4042 = vadd.f32 %v3993, %v4041
        %4043 = vdwg.mxu0
        %4044 = vmatpush.bf16.msra.mxu0 %v3375
        %4045 = vmatpush.bf16.msra.mxu0 %v3371
        %4046 = vmatpush.bf16.msra.mxu0 %v3367
        %4047 = vmatpush.bf16.msra.mxu0 %v3363
        %4048 = vmatpush.bf16.msra.mxu0 %v3359
        %4049 = vmatpush.bf16.msra.mxu0 %v3355
        %4050 = vmatpush.bf16.msra.mxu0 %v3351
        %4051 = vmatpush.bf16.msra.mxu0 %v3347
        %4052 = vmatmul.bf16.gmra.mxu0 %v2708
        %v4053 = vpop.f32.mrf.mxu0
        %v4054 = vadd.f32 %v4005, %v4053
        %v4055 = vpop.f32.mrf.mxu0
        %v4056 = vadd.f32 %v4007, %v4055
        %4057 = vmatmul.bf16.gmra.mxu0 %v2712
        %v4058 = vpop.f32.mrf.mxu0
        %v4059 = vadd.f32 %v4010, %v4058
        %v4060 = vpop.f32.mrf.mxu0
        %v4061 = vadd.f32 %v4012, %v4060
        %4062 = vmatmul.bf16.gmra.mxu0 %v2716
        %v4063 = vpop.f32.mrf.mxu0
        %v4064 = vadd.f32 %v4015, %v4063
        %v4065 = vpop.f32.mrf.mxu0
        %v4066 = vadd.f32 %v4017, %v4065
        %4067 = vmatmul.bf16.gmra.mxu0 %v2720
        %v4068 = vpop.f32.mrf.mxu0
        %v4069 = vadd.f32 %v4020, %v4068
        %v4070 = vpop.f32.mrf.mxu0
        %v4071 = vadd.f32 %v4022, %v4070
        %4072 = vmatmul.bf16.gmra.mxu0 %v2724
        %v4073 = vpop.f32.mrf.mxu0
        %v4074 = vadd.f32 %v4025, %v4073
        %v4075 = vpop.f32.mrf.mxu0
        %v4076 = vadd.f32 %v4027, %v4075
        %4077 = vmatmul.bf16.gmra.mxu0 %v2728
        %v4078 = vpop.f32.mrf.mxu0
        %v4079 = vadd.f32 %v4030, %v4078
        %v4080 = vpop.f32.mrf.mxu0
        %v4081 = vadd.f32 %v4032, %v4080
        %4082 = vmatmul.bf16.gmra.mxu0 %v2732
        %v4083 = vpop.f32.mrf.mxu0
        %v4084 = vadd.f32 %v4035, %v4083
        %v4085 = vpop.f32.mrf.mxu0
        %v4086 = vadd.f32 %v4037, %v4085
        %4087 = vmatmul.bf16.gmra.mxu0 %v2736
        %v4088 = vpop.f32.mrf.mxu0
        %v4089 = vadd.f32 %v4040, %v4088
        %v4090 = vpop.f32.mrf.mxu0
        %v4091 = vadd.f32 %v4042, %v4090
        %4092 = vdwg.mxu0
        %4093 = vmatpush.bf16.msra.mxu0 %v3280
        %4094 = vmatpush.bf16.msra.mxu0 %v3276
        %4095 = vmatpush.bf16.msra.mxu0 %v3272
        %4096 = vmatpush.bf16.msra.mxu0 %v3268
        %4097 = vmatpush.bf16.msra.mxu0 %v3264
        %4098 = vmatpush.bf16.msra.mxu0 %v3260
        %4099 = vmatpush.bf16.msra.mxu0 %v3256
        %4100 = vmatpush.bf16.msra.mxu0 %v3252
        %4101 = vmatmul.bf16.gmra.mxu0 %v2705
        %v4102 = vpop.f32.mrf.mxu0
        %v4103 = vadd.f32 0.0, %v4102
        %v4104 = vpop.f32.mrf.mxu0
        %v4105 = vadd.f32 0.0, %v4104
        %4106 = vmatmul.bf16.gmra.mxu0 %v2709
        %v4107 = vpop.f32.mrf.mxu0
        %v4108 = vadd.f32 0.0, %v4107
        %v4109 = vpop.f32.mrf.mxu0
        %v4110 = vadd.f32 0.0, %v4109
        %4111 = vmatmul.bf16.gmra.mxu0 %v2713
        %v4112 = vpop.f32.mrf.mxu0
        %v4113 = vadd.f32 0.0, %v4112
        %v4114 = vpop.f32.mrf.mxu0
        %v4115 = vadd.f32 0.0, %v4114
        %4116 = vmatmul.bf16.gmra.mxu0 %v2717
        %v4117 = vpop.f32.mrf.mxu0
        %v4118 = vadd.f32 0.0, %v4117
        %v4119 = vpop.f32.mrf.mxu0
        %v4120 = vadd.f32 0.0, %v4119
        %4121 = vmatmul.bf16.gmra.mxu0 %v2721
        %v4122 = vpop.f32.mrf.mxu0
        %v4123 = vadd.f32 0.0, %v4122
        %v4124 = vpop.f32.mrf.mxu0
        %v4125 = vadd.f32 0.0, %v4124
        %4126 = vmatmul.bf16.gmra.mxu0 %v2725
        %v4127 = vpop.f32.mrf.mxu0
        %v4128 = vadd.f32 0.0, %v4127
        %v4129 = vpop.f32.mrf.mxu0
        %v4130 = vadd.f32 0.0, %v4129
        %4131 = vmatmul.bf16.gmra.mxu0 %v2729
        %v4132 = vpop.f32.mrf.mxu0
        %v4133 = vadd.f32 0.0, %v4132
        %v4134 = vpop.f32.mrf.mxu0
        %v4135 = vadd.f32 0.0, %v4134
        %4136 = vmatmul.bf16.gmra.mxu0 %v2733
        %v4137 = vpop.f32.mrf.mxu0
        %v4138 = vadd.f32 0.0, %v4137
        %v4139 = vpop.f32.mrf.mxu0
        %v4140 = vadd.f32 0.0, %v4139
        %4141 = vdwg.mxu0
        %4142 = vmatpush.bf16.msra.mxu0 %v3312
        %4143 = vmatpush.bf16.msra.mxu0 %v3308
        %4144 = vmatpush.bf16.msra.mxu0 %v3304
        %4145 = vmatpush.bf16.msra.mxu0 %v3300
        %4146 = vmatpush.bf16.msra.mxu0 %v3296
        %4147 = vmatpush.bf16.msra.mxu0 %v3292
        %4148 = vmatpush.bf16.msra.mxu0 %v3288
        %4149 = vmatpush.bf16.msra.mxu0 %v3284
        %4150 = vmatmul.bf16.gmra.mxu0 %v2706
        %v4151 = vpop.f32.mrf.mxu0
        %v4152 = vadd.f32 %v4103, %v4151
        %v4153 = vpop.f32.mrf.mxu0
        %v4154 = vadd.f32 %v4105, %v4153
        %4155 = vmatmul.bf16.gmra.mxu0 %v2710
        %v4156 = vpop.f32.mrf.mxu0
        %v4157 = vadd.f32 %v4108, %v4156
        %v4158 = vpop.f32.mrf.mxu0
        %v4159 = vadd.f32 %v4110, %v4158
        %4160 = vmatmul.bf16.gmra.mxu0 %v2714
        %v4161 = vpop.f32.mrf.mxu0
        %v4162 = vadd.f32 %v4113, %v4161
        %v4163 = vpop.f32.mrf.mxu0
        %v4164 = vadd.f32 %v4115, %v4163
        %4165 = vmatmul.bf16.gmra.mxu0 %v2718
        %v4166 = vpop.f32.mrf.mxu0
        %v4167 = vadd.f32 %v4118, %v4166
        %v4168 = vpop.f32.mrf.mxu0
        %v4169 = vadd.f32 %v4120, %v4168
        %4170 = vmatmul.bf16.gmra.mxu0 %v2722
        %v4171 = vpop.f32.mrf.mxu0
        %v4172 = vadd.f32 %v4123, %v4171
        %v4173 = vpop.f32.mrf.mxu0
        %v4174 = vadd.f32 %v4125, %v4173
        %4175 = vmatmul.bf16.gmra.mxu0 %v2726
        %v4176 = vpop.f32.mrf.mxu0
        %v4177 = vadd.f32 %v4128, %v4176
        %v4178 = vpop.f32.mrf.mxu0
        %v4179 = vadd.f32 %v4130, %v4178
        %4180 = vmatmul.bf16.gmra.mxu0 %v2730
        %v4181 = vpop.f32.mrf.mxu0
        %v4182 = vadd.f32 %v4133, %v4181
        %v4183 = vpop.f32.mrf.mxu0
        %v4184 = vadd.f32 %v4135, %v4183
        %4185 = vmatmul.bf16.gmra.mxu0 %v2734
        %v4186 = vpop.f32.mrf.mxu0
        %v4187 = vadd.f32 %v4138, %v4186
        %v4188 = vpop.f32.mrf.mxu0
        %v4189 = vadd.f32 %v4140, %v4188
        %4190 = vdwg.mxu0
        %4191 = vmatpush.bf16.msra.mxu0 %v3344
        %4192 = vmatpush.bf16.msra.mxu0 %v3340
        %4193 = vmatpush.bf16.msra.mxu0 %v3336
        %4194 = vmatpush.bf16.msra.mxu0 %v3332
        %4195 = vmatpush.bf16.msra.mxu0 %v3328
        %4196 = vmatpush.bf16.msra.mxu0 %v3324
        %4197 = vmatpush.bf16.msra.mxu0 %v3320
        %4198 = vmatpush.bf16.msra.mxu0 %v3316
        %4199 = vmatmul.bf16.gmra.mxu0 %v2707
        %v4200 = vpop.f32.mrf.mxu0
        %v4201 = vadd.f32 %v4152, %v4200
        %v4202 = vpop.f32.mrf.mxu0
        %v4203 = vadd.f32 %v4154, %v4202
        %4204 = vmatmul.bf16.gmra.mxu0 %v2711
        %v4205 = vpop.f32.mrf.mxu0
        %v4206 = vadd.f32 %v4157, %v4205
        %v4207 = vpop.f32.mrf.mxu0
        %v4208 = vadd.f32 %v4159, %v4207
        %4209 = vmatmul.bf16.gmra.mxu0 %v2715
        %v4210 = vpop.f32.mrf.mxu0
        %v4211 = vadd.f32 %v4162, %v4210
        %v4212 = vpop.f32.mrf.mxu0
        %v4213 = vadd.f32 %v4164, %v4212
        %4214 = vmatmul.bf16.gmra.mxu0 %v2719
        %v4215 = vpop.f32.mrf.mxu0
        %v4216 = vadd.f32 %v4167, %v4215
        %v4217 = vpop.f32.mrf.mxu0
        %v4218 = vadd.f32 %v4169, %v4217
        %4219 = vmatmul.bf16.gmra.mxu0 %v2723
        %v4220 = vpop.f32.mrf.mxu0
        %v4221 = vadd.f32 %v4172, %v4220
        %v4222 = vpop.f32.mrf.mxu0
        %v4223 = vadd.f32 %v4174, %v4222
        %4224 = vmatmul.bf16.gmra.mxu0 %v2727
        %v4225 = vpop.f32.mrf.mxu0
        %v4226 = vadd.f32 %v4177, %v4225
        %v4227 = vpop.f32.mrf.mxu0
        %v4228 = vadd.f32 %v4179, %v4227
        %4229 = vmatmul.bf16.gmra.mxu0 %v2731
        %v4230 = vpop.f32.mrf.mxu0
        %v4231 = vadd.f32 %v4182, %v4230
        %v4232 = vpop.f32.mrf.mxu0
        %v4233 = vadd.f32 %v4184, %v4232
        %4234 = vmatmul.bf16.gmra.mxu0 %v2735
        %v4235 = vpop.f32.mrf.mxu0
        %v4236 = vadd.f32 %v4187, %v4235
        %v4237 = vpop.f32.mrf.mxu0
        %v4238 = vadd.f32 %v4189, %v4237
        %4239 = vdwg.mxu0
        %4240 = vmatpush.bf16.msra.mxu0 %v3376
        %4241 = vmatpush.bf16.msra.mxu0 %v3372
        %4242 = vmatpush.bf16.msra.mxu0 %v3368
        %4243 = vmatpush.bf16.msra.mxu0 %v3364
        %4244 = vmatpush.bf16.msra.mxu0 %v3360
        %4245 = vmatpush.bf16.msra.mxu0 %v3356
        %4246 = vmatpush.bf16.msra.mxu0 %v3352
        %4247 = vmatpush.bf16.msra.mxu0 %v3348
        %4248 = vmatmul.bf16.gmra.mxu0 %v2708
        %v4249 = vpop.f32.mrf.mxu0
        %v4250 = vadd.f32 %v4201, %v4249
        %v4251 = vpop.f32.mrf.mxu0
        %v4252 = vadd.f32 %v4203, %v4251
        %4253 = vmatmul.bf16.gmra.mxu0 %v2712
        %v4254 = vpop.f32.mrf.mxu0
        %v4255 = vadd.f32 %v4206, %v4254
        %v4256 = vpop.f32.mrf.mxu0
        %v4257 = vadd.f32 %v4208, %v4256
        %4258 = vmatmul.bf16.gmra.mxu0 %v2716
        %v4259 = vpop.f32.mrf.mxu0
        %v4260 = vadd.f32 %v4211, %v4259
        %v4261 = vpop.f32.mrf.mxu0
        %v4262 = vadd.f32 %v4213, %v4261
        %4263 = vmatmul.bf16.gmra.mxu0 %v2720
        %v4264 = vpop.f32.mrf.mxu0
        %v4265 = vadd.f32 %v4216, %v4264
        %v4266 = vpop.f32.mrf.mxu0
        %v4267 = vadd.f32 %v4218, %v4266
        %4268 = vmatmul.bf16.gmra.mxu0 %v2724
        %v4269 = vpop.f32.mrf.mxu0
        %v4270 = vadd.f32 %v4221, %v4269
        %v4271 = vpop.f32.mrf.mxu0
        %v4272 = vadd.f32 %v4223, %v4271
        %4273 = vmatmul.bf16.gmra.mxu0 %v2728
        %v4274 = vpop.f32.mrf.mxu0
        %v4275 = vadd.f32 %v4226, %v4274
        %v4276 = vpop.f32.mrf.mxu0
        %v4277 = vadd.f32 %v4228, %v4276
        %4278 = vmatmul.bf16.gmra.mxu0 %v2732
        %v4279 = vpop.f32.mrf.mxu0
        %v4280 = vadd.f32 %v4231, %v4279
        %v4281 = vpop.f32.mrf.mxu0
        %v4282 = vadd.f32 %v4233, %v4281
        %4283 = vmatmul.bf16.gmra.mxu0 %v2736
        %v4284 = vpop.f32.mrf.mxu0
        %v4285 = vadd.f32 %v4236, %v4284
        %v4286 = vpop.f32.mrf.mxu0
        %v4287 = vadd.f32 %v4238, %v4286
        %4288 = vdwg.mxu0
        %4289 = vmatpush.msra.mxu0 %v3699
        %4290 = vmatpush.msra.mxu0 %v3697
        %4291 = vmatpush.msra.mxu0 %v3694
        %4292 = vmatpush.msra.mxu0 %v3692
        %4293 = vmatpush.msra.mxu0 %v3689
        %4294 = vmatpush.msra.mxu0 %v3687
        %4295 = vmatpush.msra.mxu0 %v3684
        %4296 = vmatpush.msra.mxu0 %v3682
        %4297 = vmatpush.msra.mxu0 %v3679
        %4298 = vmatpush.msra.mxu0 %v3677
        %4299 = vmatpush.msra.mxu0 %v3674
        %4300 = vmatpush.msra.mxu0 %v3672
        %4301 = vmatpush.msra.mxu0 %v3669
        %4302 = vmatpush.msra.mxu0 %v3667
        %4303 = vmatpush.msra.mxu0 %v3664
        %4304 = vmatpush.msra.mxu0 %v3662
        %4305 = vmatmul.f32.gmra.mxu0 %v498
        %v4306 = vpop.f32.mrf.mxu0
        %v4307 = vadd.f32 0.0, %v4306
        %4308 = vmatmul.f32.gmra.mxu0 %v499
        %v4309 = vpop.f32.mrf.mxu0
        %v4310 = vadd.f32 0.0, %v4309
        %4311 = vmatmul.f32.gmra.mxu0 %v500
        %v4312 = vpop.f32.mrf.mxu0
        %v4313 = vadd.f32 0.0, %v4312
        %4314 = vmatmul.f32.gmra.mxu0 %v501
        %v4315 = vpop.f32.mrf.mxu0
        %v4316 = vadd.f32 0.0, %v4315
        %4317 = vmatmul.f32.gmra.mxu0 %v502
        %v4318 = vpop.f32.mrf.mxu0
        %v4319 = vadd.f32 0.0, %v4318
        %4320 = vmatmul.f32.gmra.mxu0 %v503
        %v4321 = vpop.f32.mrf.mxu0
        %v4322 = vadd.f32 0.0, %v4321
        %4323 = vmatmul.f32.gmra.mxu0 %v504
        %v4324 = vpop.f32.mrf.mxu0
        %v4325 = vadd.f32 0.0, %v4324
        %4326 = vmatmul.f32.gmra.mxu0 %v505
        %v4327 = vpop.f32.mrf.mxu0
        %v4328 = vadd.f32 0.0, %v4327
        %4329 = vmatmul.f32.gmra.mxu0 %v506
        %v4330 = vpop.f32.mrf.mxu0
        %v4331 = vadd.f32 0.0, %v4330
        %4332 = vmatmul.f32.gmra.mxu0 %v507
        %v4333 = vpop.f32.mrf.mxu0
        %v4334 = vadd.f32 0.0, %v4333
        %4335 = vmatmul.f32.gmra.mxu0 %v508
        %v4336 = vpop.f32.mrf.mxu0
        %v4337 = vadd.f32 0.0, %v4336
        %4338 = vmatmul.f32.gmra.mxu0 %v509
        %v4339 = vpop.f32.mrf.mxu0
        %v4340 = vadd.f32 0.0, %v4339
        %4341 = vmatmul.f32.gmra.mxu0 %v510
        %v4342 = vpop.f32.mrf.mxu0
        %v4343 = vadd.f32 0.0, %v4342
        %4344 = vmatmul.f32.gmra.mxu0 %v511
        %v4345 = vpop.f32.mrf.mxu0
        %v4346 = vadd.f32 0.0, %v4345
        %4347 = vmatmul.f32.gmra.mxu0 %v512
        %v4348 = vpop.f32.mrf.mxu0
        %v4349 = vadd.f32 0.0, %v4348
        %4350 = vmatmul.f32.gmra.mxu0 %v513
        %v4351 = vpop.f32.mrf.mxu0
        %v4352 = vadd.f32 0.0, %v4351
        %4353 = vdwg.mxu0
        %4354 = vmatpush.msra.mxu0 %v3895
        %4355 = vmatpush.msra.mxu0 %v3893
        %4356 = vmatpush.msra.mxu0 %v3890
        %4357 = vmatpush.msra.mxu0 %v3888
        %4358 = vmatpush.msra.mxu0 %v3885
        %4359 = vmatpush.msra.mxu0 %v3883
        %4360 = vmatpush.msra.mxu0 %v3880
        %4361 = vmatpush.msra.mxu0 %v3878
        %4362 = vmatpush.msra.mxu0 %v3875
        %4363 = vmatpush.msra.mxu0 %v3873
        %4364 = vmatpush.msra.mxu0 %v3870
        %4365 = vmatpush.msra.mxu0 %v3868
        %4366 = vmatpush.msra.mxu0 %v3865
        %4367 = vmatpush.msra.mxu0 %v3863
        %4368 = vmatpush.msra.mxu0 %v3860
        %4369 = vmatpush.msra.mxu0 %v3858
        %4370 = vmatmul.f32.gmra.mxu0 %v498
        %v4371 = vpop.f32.mrf.mxu0
        %v4372 = vadd.f32 0.0, %v4371
        %4373 = vmatmul.f32.gmra.mxu0 %v499
        %v4374 = vpop.f32.mrf.mxu0
        %v4375 = vadd.f32 0.0, %v4374
        %4376 = vmatmul.f32.gmra.mxu0 %v500
        %v4377 = vpop.f32.mrf.mxu0
        %v4378 = vadd.f32 0.0, %v4377
        %4379 = vmatmul.f32.gmra.mxu0 %v501
        %v4380 = vpop.f32.mrf.mxu0
        %v4381 = vadd.f32 0.0, %v4380
        %4382 = vmatmul.f32.gmra.mxu0 %v502
        %v4383 = vpop.f32.mrf.mxu0
        %v4384 = vadd.f32 0.0, %v4383
        %4385 = vmatmul.f32.gmra.mxu0 %v503
        %v4386 = vpop.f32.mrf.mxu0
        %v4387 = vadd.f32 0.0, %v4386
        %4388 = vmatmul.f32.gmra.mxu0 %v504
        %v4389 = vpop.f32.mrf.mxu0
        %v4390 = vadd.f32 0.0, %v4389
        %4391 = vmatmul.f32.gmra.mxu0 %v505
        %v4392 = vpop.f32.mrf.mxu0
        %v4393 = vadd.f32 0.0, %v4392
        %4394 = vmatmul.f32.gmra.mxu0 %v506
        %v4395 = vpop.f32.mrf.mxu0
        %v4396 = vadd.f32 0.0, %v4395
        %4397 = vmatmul.f32.gmra.mxu0 %v507
        %v4398 = vpop.f32.mrf.mxu0
        %v4399 = vadd.f32 0.0, %v4398
        %4400 = vmatmul.f32.gmra.mxu0 %v508
        %v4401 = vpop.f32.mrf.mxu0
        %v4402 = vadd.f32 0.0, %v4401
        %4403 = vmatmul.f32.gmra.mxu0 %v509
        %v4404 = vpop.f32.mrf.mxu0
        %v4405 = vadd.f32 0.0, %v4404
        %4406 = vmatmul.f32.gmra.mxu0 %v510
        %v4407 = vpop.f32.mrf.mxu0
        %v4408 = vadd.f32 0.0, %v4407
        %4409 = vmatmul.f32.gmra.mxu0 %v511
        %v4410 = vpop.f32.mrf.mxu0
        %v4411 = vadd.f32 0.0, %v4410
        %4412 = vmatmul.f32.gmra.mxu0 %v512
        %v4413 = vpop.f32.mrf.mxu0
        %v4414 = vadd.f32 0.0, %v4413
        %4415 = vmatmul.f32.gmra.mxu0 %v513
        %v4416 = vpop.f32.mrf.mxu0
        %v4417 = vadd.f32 0.0, %v4416
        %4418 = vdwg.mxu0
        %4419 = vmatpush.msra.mxu0 %v4091
        %4420 = vmatpush.msra.mxu0 %v4089
        %4421 = vmatpush.msra.mxu0 %v4086
        %4422 = vmatpush.msra.mxu0 %v4084
        %4423 = vmatpush.msra.mxu0 %v4081
        %4424 = vmatpush.msra.mxu0 %v4079
        %4425 = vmatpush.msra.mxu0 %v4076
        %4426 = vmatpush.msra.mxu0 %v4074
        %4427 = vmatpush.msra.mxu0 %v4071
        %4428 = vmatpush.msra.mxu0 %v4069
        %4429 = vmatpush.msra.mxu0 %v4066
        %4430 = vmatpush.msra.mxu0 %v4064
        %4431 = vmatpush.msra.mxu0 %v4061
        %4432 = vmatpush.msra.mxu0 %v4059
        %4433 = vmatpush.msra.mxu0 %v4056
        %4434 = vmatpush.msra.mxu0 %v4054
        %4435 = vmatmul.f32.gmra.mxu0 %v498
        %v4436 = vpop.f32.mrf.mxu0
        %v4437 = vadd.f32 0.0, %v4436
        %4438 = vmatmul.f32.gmra.mxu0 %v499
        %v4439 = vpop.f32.mrf.mxu0
        %v4440 = vadd.f32 0.0, %v4439
        %4441 = vmatmul.f32.gmra.mxu0 %v500
        %v4442 = vpop.f32.mrf.mxu0
        %v4443 = vadd.f32 0.0, %v4442
        %4444 = vmatmul.f32.gmra.mxu0 %v501
        %v4445 = vpop.f32.mrf.mxu0
        %v4446 = vadd.f32 0.0, %v4445
        %4447 = vmatmul.f32.gmra.mxu0 %v502
        %v4448 = vpop.f32.mrf.mxu0
        %v4449 = vadd.f32 0.0, %v4448
        %4450 = vmatmul.f32.gmra.mxu0 %v503
        %v4451 = vpop.f32.mrf.mxu0
        %v4452 = vadd.f32 0.0, %v4451
        %4453 = vmatmul.f32.gmra.mxu0 %v504
        %v4454 = vpop.f32.mrf.mxu0
        %v4455 = vadd.f32 0.0, %v4454
        %4456 = vmatmul.f32.gmra.mxu0 %v505
        %v4457 = vpop.f32.mrf.mxu0
        %v4458 = vadd.f32 0.0, %v4457
        %4459 = vmatmul.f32.gmra.mxu0 %v506
        %v4460 = vpop.f32.mrf.mxu0
        %v4461 = vadd.f32 0.0, %v4460
        %4462 = vmatmul.f32.gmra.mxu0 %v507
        %v4463 = vpop.f32.mrf.mxu0
        %v4464 = vadd.f32 0.0, %v4463
        %4465 = vmatmul.f32.gmra.mxu0 %v508
        %v4466 = vpop.f32.mrf.mxu0
        %v4467 = vadd.f32 0.0, %v4466
        %4468 = vmatmul.f32.gmra.mxu0 %v509
        %v4469 = vpop.f32.mrf.mxu0
        %v4470 = vadd.f32 0.0, %v4469
        %4471 = vmatmul.f32.gmra.mxu0 %v510
        %v4472 = vpop.f32.mrf.mxu0
        %v4473 = vadd.f32 0.0, %v4472
        %4474 = vmatmul.f32.gmra.mxu0 %v511
        %v4475 = vpop.f32.mrf.mxu0
        %v4476 = vadd.f32 0.0, %v4475
        %4477 = vmatmul.f32.gmra.mxu0 %v512
        %v4478 = vpop.f32.mrf.mxu0
        %v4479 = vadd.f32 0.0, %v4478
        %4480 = vmatmul.f32.gmra.mxu0 %v513
        %v4481 = vpop.f32.mrf.mxu0
        %v4482 = vadd.f32 0.0, %v4481
        %4483 = vdwg.mxu0
        %4484 = vmatpush.msra.mxu0 %v4287
        %4485 = vmatpush.msra.mxu0 %v4285
        %4486 = vmatpush.msra.mxu0 %v4282
        %4487 = vmatpush.msra.mxu0 %v4280
        %4488 = vmatpush.msra.mxu0 %v4277
        %4489 = vmatpush.msra.mxu0 %v4275
        %4490 = vmatpush.msra.mxu0 %v4272
        %4491 = vmatpush.msra.mxu0 %v4270
        %4492 = vmatpush.msra.mxu0 %v4267
        %4493 = vmatpush.msra.mxu0 %v4265
        %4494 = vmatpush.msra.mxu0 %v4262
        %4495 = vmatpush.msra.mxu0 %v4260
        %4496 = vmatpush.msra.mxu0 %v4257
        %4497 = vmatpush.msra.mxu0 %v4255
        %4498 = vmatpush.msra.mxu0 %v4252
        %4499 = vmatpush.msra.mxu0 %v4250
        %4500 = vmatmul.f32.gmra.mxu0 %v498
        %v4501 = vpop.f32.mrf.mxu0
        %v4502 = vadd.f32 0.0, %v4501
        %4503 = vmatmul.f32.gmra.mxu0 %v499
        %v4504 = vpop.f32.mrf.mxu0
        %v4505 = vadd.f32 0.0, %v4504
        %4506 = vmatmul.f32.gmra.mxu0 %v500
        %v4507 = vpop.f32.mrf.mxu0
        %v4508 = vadd.f32 0.0, %v4507
        %4509 = vmatmul.f32.gmra.mxu0 %v501
        %v4510 = vpop.f32.mrf.mxu0
        %v4511 = vadd.f32 0.0, %v4510
        %4512 = vmatmul.f32.gmra.mxu0 %v502
        %v4513 = vpop.f32.mrf.mxu0
        %v4514 = vadd.f32 0.0, %v4513
        %4515 = vmatmul.f32.gmra.mxu0 %v503
        %v4516 = vpop.f32.mrf.mxu0
        %v4517 = vadd.f32 0.0, %v4516
        %4518 = vmatmul.f32.gmra.mxu0 %v504
        %v4519 = vpop.f32.mrf.mxu0
        %v4520 = vadd.f32 0.0, %v4519
        %4521 = vmatmul.f32.gmra.mxu0 %v505
        %v4522 = vpop.f32.mrf.mxu0
        %v4523 = vadd.f32 0.0, %v4522
        %4524 = vmatmul.f32.gmra.mxu0 %v506
        %v4525 = vpop.f32.mrf.mxu0
        %v4526 = vadd.f32 0.0, %v4525
        %4527 = vmatmul.f32.gmra.mxu0 %v507
        %v4528 = vpop.f32.mrf.mxu0
        %v4529 = vadd.f32 0.0, %v4528
        %4530 = vmatmul.f32.gmra.mxu0 %v508
        %v4531 = vpop.f32.mrf.mxu0
        %v4532 = vadd.f32 0.0, %v4531
        %4533 = vmatmul.f32.gmra.mxu0 %v509
        %v4534 = vpop.f32.mrf.mxu0
        %v4535 = vadd.f32 0.0, %v4534
        %4536 = vmatmul.f32.gmra.mxu0 %v510
        %v4537 = vpop.f32.mrf.mxu0
        %v4538 = vadd.f32 0.0, %v4537
        %4539 = vmatmul.f32.gmra.mxu0 %v511
        %v4540 = vpop.f32.mrf.mxu0
        %v4541 = vadd.f32 0.0, %v4540
        %4542 = vmatmul.f32.gmra.mxu0 %v512
        %v4543 = vpop.f32.mrf.mxu0
        %v4544 = vadd.f32 0.0, %v4543
        %4545 = vmatmul.f32.gmra.mxu0 %v513
        %v4546 = vpop.f32.mrf.mxu0
        %v4547 = vadd.f32 0.0, %v4546
        %4548 = vdwg.mxu0
        %v4549 = vadd.f32 %v4307, %v4310
        %v4550 = vadd.f32 %v4549, %v4313
        %v4551 = vadd.f32 %v4550, %v4316
        %v4552 = vadd.f32 %v4551, %v4319
        %v4553 = vadd.f32 %v4552, %v4322
        %v4554 = vadd.f32 %v4553, %v4325
        %v4555 = vadd.f32 %v4554, %v4328
        %v4556 = vadd.f32 %v4555, %v4331
        %v4557 = vadd.f32 %v4556, %v4334
        %v4558 = vadd.f32 %v4557, %v4337
        %v4559 = vadd.f32 %v4558, %v4340
        %v4560 = vadd.f32 %v4559, %v4343
        %v4561 = vadd.f32 %v4560, %v4346
        %v4562 = vadd.f32 %v4561, %v4349
        %v4563 = vadd.f32 %v4562, %v4352
        %v4564 = vrot.slane %v4563, 4
        %v4565 = vadd.f32 %v4563, %v4564
        %v4566 = vrot.slane %v4565, 2
        %v4567 = vadd.f32 %v4565, %v4566
        %v4568 = vrot.slane %v4567, 1
        %v4569 = vadd.f32 %v4567, %v4568
        %v4570 = vadd.f32 %v4372, %v4375
        %v4571 = vadd.f32 %v4570, %v4378
        %v4572 = vadd.f32 %v4571, %v4381
        %v4573 = vadd.f32 %v4572, %v4384
        %v4574 = vadd.f32 %v4573, %v4387
        %v4575 = vadd.f32 %v4574, %v4390
        %v4576 = vadd.f32 %v4575, %v4393
        %v4577 = vadd.f32 %v4576, %v4396
        %v4578 = vadd.f32 %v4577, %v4399
        %v4579 = vadd.f32 %v4578, %v4402
        %v4580 = vadd.f32 %v4579, %v4405
        %v4581 = vadd.f32 %v4580, %v4408
        %v4582 = vadd.f32 %v4581, %v4411
        %v4583 = vadd.f32 %v4582, %v4414
        %v4584 = vadd.f32 %v4583, %v4417
        %v4585 = vrot.slane %v4584, 4
        %v4586 = vadd.f32 %v4584, %v4585
        %v4587 = vrot.slane %v4586, 2
        %v4588 = vadd.f32 %v4586, %v4587
        %v4589 = vrot.slane %v4588, 1
        %v4590 = vadd.f32 %v4588, %v4589
        %v4591 = vadd.f32 %v4437, %v4440
        %v4592 = vadd.f32 %v4591, %v4443
        %v4593 = vadd.f32 %v4592, %v4446
        %v4594 = vadd.f32 %v4593, %v4449
        %v4595 = vadd.f32 %v4594, %v4452
        %v4596 = vadd.f32 %v4595, %v4455
        %v4597 = vadd.f32 %v4596, %v4458
        %v4598 = vadd.f32 %v4597, %v4461
        %v4599 = vadd.f32 %v4598, %v4464
        %v4600 = vadd.f32 %v4599, %v4467
        %v4601 = vadd.f32 %v4600, %v4470
        %v4602 = vadd.f32 %v4601, %v4473
        %v4603 = vadd.f32 %v4602, %v4476
        %v4604 = vadd.f32 %v4603, %v4479
        %v4605 = vadd.f32 %v4604, %v4482
        %v4606 = vrot.slane %v4605, 4
        %v4607 = vadd.f32 %v4605, %v4606
        %v4608 = vrot.slane %v4607, 2
        %v4609 = vadd.f32 %v4607, %v4608
        %v4610 = vrot.slane %v4609, 1
        %v4611 = vadd.f32 %v4609, %v4610
        %v4612 = vadd.f32 %v4502, %v4505
        %v4613 = vadd.f32 %v4612, %v4508
        %v4614 = vadd.f32 %v4613, %v4511
        %v4615 = vadd.f32 %v4614, %v4514
        %v4616 = vadd.f32 %v4615, %v4517
        %v4617 = vadd.f32 %v4616, %v4520
        %v4618 = vadd.f32 %v4617, %v4523
        %v4619 = vadd.f32 %v4618, %v4526
        %v4620 = vadd.f32 %v4619, %v4529
        %v4621 = vadd.f32 %v4620, %v4532
        %v4622 = vadd.f32 %v4621, %v4535
        %v4623 = vadd.f32 %v4622, %v4538
        %v4624 = vadd.f32 %v4623, %v4541
        %v4625 = vadd.f32 %v4624, %v4544
        %v4626 = vadd.f32 %v4625, %v4547
        %v4627 = vrot.slane %v4626, 4
        %v4628 = vadd.f32 %v4626, %v4627
        %v4629 = vrot.slane %v4628, 2
        %v4630 = vadd.f32 %v4628, %v4629
        %v4631 = vrot.slane %v4630, 1
        %v4632 = vadd.f32 %v4630, %v4631
        %v4633 = vmul.f32 %v4569, %v883
        %v4634 = vmul.f32 %v4590, %v883
        %v4635 = vmul.f32 %v4611, %v883
        %v4636 = vmul.f32 %v4632, %v883
        %v4637 = vmul.f32 %v4307, %v4307
        %v4638 = vmul.f32 %v4372, %v4372
        %v4639 = vmul.f32 %v4437, %v4437
        %v4640 = vmul.f32 %v4502, %v4502
        %v4641 = vmul.f32 %v4310, %v4310
        %v4642 = vmul.f32 %v4375, %v4375
        %v4643 = vmul.f32 %v4440, %v4440
        %v4644 = vmul.f32 %v4505, %v4505
        %v4645 = vmul.f32 %v4313, %v4313
        %v4646 = vmul.f32 %v4378, %v4378
        %v4647 = vmul.f32 %v4443, %v4443
        %v4648 = vmul.f32 %v4508, %v4508
        %v4649 = vmul.f32 %v4316, %v4316
        %v4650 = vmul.f32 %v4381, %v4381
        %v4651 = vmul.f32 %v4446, %v4446
        %v4652 = vmul.f32 %v4511, %v4511
        %v4653 = vmul.f32 %v4319, %v4319
        %v4654 = vmul.f32 %v4384, %v4384
        %v4655 = vmul.f32 %v4449, %v4449
        %v4656 = vmul.f32 %v4514, %v4514
        %v4657 = vmul.f32 %v4322, %v4322
        %v4658 = vmul.f32 %v4387, %v4387
        %v4659 = vmul.f32 %v4452, %v4452
        %v4660 = vmul.f32 %v4517, %v4517
        %v4661 = vmul.f32 %v4325, %v4325
        %v4662 = vmul.f32 %v4390, %v4390
        %v4663 = vmul.f32 %v4455, %v4455
        %v4664 = vmul.f32 %v4520, %v4520
        %v4665 = vmul.f32 %v4328, %v4328
        %v4666 = vmul.f32 %v4393, %v4393
        %v4667 = vmul.f32 %v4458, %v4458
        %v4668 = vmul.f32 %v4523, %v4523
        %v4669 = vmul.f32 %v4331, %v4331
        %v4670 = vmul.f32 %v4396, %v4396
        %v4671 = vmul.f32 %v4461, %v4461
        %v4672 = vmul.f32 %v4526, %v4526
        %v4673 = vmul.f32 %v4334, %v4334
        %v4674 = vmul.f32 %v4399, %v4399
        %v4675 = vmul.f32 %v4464, %v4464
        %v4676 = vmul.f32 %v4529, %v4529
        %v4677 = vmul.f32 %v4337, %v4337
        %v4678 = vmul.f32 %v4402, %v4402
        %v4679 = vmul.f32 %v4467, %v4467
        %v4680 = vmul.f32 %v4532, %v4532
        %v4681 = vmul.f32 %v4340, %v4340
        %v4682 = vmul.f32 %v4405, %v4405
        %v4683 = vmul.f32 %v4470, %v4470
        %v4684 = vmul.f32 %v4535, %v4535
        %v4685 = vmul.f32 %v4343, %v4343
        %v4686 = vmul.f32 %v4408, %v4408
        %v4687 = vmul.f32 %v4473, %v4473
        %v4688 = vmul.f32 %v4538, %v4538
        %v4689 = vmul.f32 %v4346, %v4346
        %v4690 = vmul.f32 %v4411, %v4411
        %v4691 = vmul.f32 %v4476, %v4476
        %v4692 = vmul.f32 %v4541, %v4541
        %v4693 = vmul.f32 %v4349, %v4349
        %v4694 = vmul.f32 %v4414, %v4414
        %v4695 = vmul.f32 %v4479, %v4479
        %v4696 = vmul.f32 %v4544, %v4544
        %v4697 = vmul.f32 %v4352, %v4352
        %v4698 = vmul.f32 %v4417, %v4417
        %v4699 = vmul.f32 %v4482, %v4482
        %v4700 = vmul.f32 %v4547, %v4547
        %v4701 = vadd.f32 %v4637, %v4641
        %v4702 = vadd.f32 %v4701, %v4645
        %v4703 = vadd.f32 %v4702, %v4649
        %v4704 = vadd.f32 %v4703, %v4653
        %v4705 = vadd.f32 %v4704, %v4657
        %v4706 = vadd.f32 %v4705, %v4661
        %v4707 = vadd.f32 %v4706, %v4665
        %v4708 = vadd.f32 %v4707, %v4669
        %v4709 = vadd.f32 %v4708, %v4673
        %v4710 = vadd.f32 %v4709, %v4677
        %v4711 = vadd.f32 %v4710, %v4681
        %v4712 = vadd.f32 %v4711, %v4685
        %v4713 = vadd.f32 %v4712, %v4689
        %v4714 = vadd.f32 %v4713, %v4693
        %v4715 = vadd.f32 %v4714, %v4697
        %v4716 = vrot.slane %v4715, 4
        %v4717 = vadd.f32 %v4715, %v4716
        %v4718 = vrot.slane %v4717, 2
        %v4719 = vadd.f32 %v4717, %v4718
        %v4720 = vrot.slane %v4719, 1
        %v4721 = vadd.f32 %v4719, %v4720
        %v4722 = vadd.f32 %v4638, %v4642
        %v4723 = vadd.f32 %v4722, %v4646
        %v4724 = vadd.f32 %v4723, %v4650
        %v4725 = vadd.f32 %v4724, %v4654
        %v4726 = vadd.f32 %v4725, %v4658
        %v4727 = vadd.f32 %v4726, %v4662
        %v4728 = vadd.f32 %v4727, %v4666
        %v4729 = vadd.f32 %v4728, %v4670
        %v4730 = vadd.f32 %v4729, %v4674
        %v4731 = vadd.f32 %v4730, %v4678
        %v4732 = vadd.f32 %v4731, %v4682
        %v4733 = vadd.f32 %v4732, %v4686
        %v4734 = vadd.f32 %v4733, %v4690
        %v4735 = vadd.f32 %v4734, %v4694
        %v4736 = vadd.f32 %v4735, %v4698
        %v4737 = vrot.slane %v4736, 4
        %v4738 = vadd.f32 %v4736, %v4737
        %v4739 = vrot.slane %v4738, 2
        %v4740 = vadd.f32 %v4738, %v4739
        %v4741 = vrot.slane %v4740, 1
        %v4742 = vadd.f32 %v4740, %v4741
        %v4743 = vadd.f32 %v4639, %v4643
        %v4744 = vadd.f32 %v4743, %v4647
        %v4745 = vadd.f32 %v4744, %v4651
        %v4746 = vadd.f32 %v4745, %v4655
        %v4747 = vadd.f32 %v4746, %v4659
        %v4748 = vadd.f32 %v4747, %v4663
        %v4749 = vadd.f32 %v4748, %v4667
        %v4750 = vadd.f32 %v4749, %v4671
        %v4751 = vadd.f32 %v4750, %v4675
        %v4752 = vadd.f32 %v4751, %v4679
        %v4753 = vadd.f32 %v4752, %v4683
        %v4754 = vadd.f32 %v4753, %v4687
        %v4755 = vadd.f32 %v4754, %v4691
        %v4756 = vadd.f32 %v4755, %v4695
        %v4757 = vadd.f32 %v4756, %v4699
        %v4758 = vrot.slane %v4757, 4
        %v4759 = vadd.f32 %v4757, %v4758
        %v4760 = vrot.slane %v4759, 2
        %v4761 = vadd.f32 %v4759, %v4760
        %v4762 = vrot.slane %v4761, 1
        %v4763 = vadd.f32 %v4761, %v4762
        %v4764 = vadd.f32 %v4640, %v4644
        %v4765 = vadd.f32 %v4764, %v4648
        %v4766 = vadd.f32 %v4765, %v4652
        %v4767 = vadd.f32 %v4766, %v4656
        %v4768 = vadd.f32 %v4767, %v4660
        %v4769 = vadd.f32 %v4768, %v4664
        %v4770 = vadd.f32 %v4769, %v4668
        %v4771 = vadd.f32 %v4770, %v4672
        %v4772 = vadd.f32 %v4771, %v4676
        %v4773 = vadd.f32 %v4772, %v4680
        %v4774 = vadd.f32 %v4773, %v4684
        %v4775 = vadd.f32 %v4774, %v4688
        %v4776 = vadd.f32 %v4775, %v4692
        %v4777 = vadd.f32 %v4776, %v4696
        %v4778 = vadd.f32 %v4777, %v4700
        %v4779 = vrot.slane %v4778, 4
        %v4780 = vadd.f32 %v4778, %v4779
        %v4781 = vrot.slane %v4780, 2
        %v4782 = vadd.f32 %v4780, %v4781
        %v4783 = vrot.slane %v4782, 1
        %v4784 = vadd.f32 %v4782, %v4783
        %v4785 = vmul.f32 %v4721, %v883
        %v4786 = vmul.f32 %v4742, %v883
        %v4787 = vmul.f32 %v4763, %v883
        %v4788 = vmul.f32 %v4784, %v883
        %v4789 = vmul.f32 %v4633, %v4633
        %v4790 = vmul.f32 %v4634, %v4634
        %v4791 = vmul.f32 %v4635, %v4635
        %v4792 = vmul.f32 %v4636, %v4636
        %v4793 = vsub.f32 %v4785, %v4789
        %v4794 = vsub.f32 %v4786, %v4790
        %v4795 = vsub.f32 %v4787, %v4791
        %v4796 = vsub.f32 %v4788, %v4792
        %v4797 = vmax.f32 %v4793, 0.0
        %v4798 = vmax.f32 %v4794, 0.0
        %v4799 = vmax.f32 %v4795, 0.0
        %v4800 = vmax.f32 %v4796, 0.0
        %v4801 = vld [vmem:[%s8] ss:$2 sm:$0xf]
        %s4802 = scalar_lea.vmem %s8, 1
        %v4803 = vld [vmem:[%s4802] ss:$2 sm:$0xf]
        %v4804 = vadd.f32 %v4797, 1e-05
        %v4805 = vadd.f32 %v4798, 1e-05
        %v4806 = vadd.f32 %v4799, 1e-05
        %v4807 = vadd.f32 %v4800, 1e-05
        %v4808 = vrsqrt.pop %v4804
        %v4809 = vmul.f32 %v4808, %v4804
        %v4810 = vmul.f32 %v4809, %v4808
        %v4811 = vmul.f32 0.5, %v4810
        %v4812 = vsub.f32 1.5, %v4811
        %v4813 = vmul.f32 %v4808, %v4812
        %vm4814 = vweird.f32 %v4804
        %vm4815 = vweird.f32 %v4808
        %vm4816 = vmor %vm4814, %vm4815
        %v4817 = vsel %vm4816, %v4808, %v4813
        %v4818 = vrsqrt.pop %v4805
        %v4819 = vmul.f32 %v4818, %v4805
        %v4820 = vmul.f32 %v4819, %v4818
        %v4821 = vmul.f32 0.5, %v4820
        %v4822 = vsub.f32 1.5, %v4821
        %v4823 = vmul.f32 %v4818, %v4822
        %vm4824 = vweird.f32 %v4805
        %vm4825 = vweird.f32 %v4818
        %vm4826 = vmor %vm4824, %vm4825
        %v4827 = vsel %vm4826, %v4818, %v4823
        %v4828 = vrsqrt.pop %v4806
        %v4829 = vmul.f32 %v4828, %v4806
        %v4830 = vmul.f32 %v4829, %v4828
        %v4831 = vmul.f32 0.5, %v4830
        %v4832 = vsub.f32 1.5, %v4831
        %v4833 = vmul.f32 %v4828, %v4832
        %vm4834 = vweird.f32 %v4806
        %vm4835 = vweird.f32 %v4828
        %vm4836 = vmor %vm4834, %vm4835
        %v4837 = vsel %vm4836, %v4828, %v4833
        %v4838 = vrsqrt.pop %v4807
        %v4839 = vmul.f32 %v4838, %v4807
        %v4840 = vmul.f32 %v4839, %v4838
        %v4841 = vmul.f32 0.5, %v4840
        %v4842 = vsub.f32 1.5, %v4841
        %v4843 = vmul.f32 %v4838, %v4842
        %vm4844 = vweird.f32 %v4807
        %vm4845 = vweird.f32 %v4838
        %vm4846 = vmor %vm4844, %vm4845
        %v4847 = vsel %vm4846, %v4838, %v4843
        %v4852 = vrot.slane %v4827, 7
        %v4853 = vrot.slane %v4837, 6
        %v4854 = vrot.slane %v4847, 5
        %v4855 = vsel %vm996, %v4817, %v4852
        %v4856 = vsel %vm2473, %v4853, %v4854
        %v4857 = vsel %vm2475, %v4855, %v4856
        %v4859 = vmul.f32 %v4801, %v4857
        %v4861 = vperm.slane %v4859, 0
        %v4862 = vperm.slane %v4859, 1
        %v4863 = vperm.slane %v4859, 2
        %v4864 = vperm.slane %v4859, 3
        %v4869 = vmul.f32 %v4633, %v4861
        %v4870 = vmul.f32 %v4634, %v4862
        %v4871 = vmul.f32 %v4635, %v4863
        %v4872 = vmul.f32 %v4636, %v4864
        %v4877 = vrot.slane %v4870, 7
        %v4878 = vrot.slane %v4871, 6
        %v4879 = vrot.slane %v4872, 5
        %v4880 = vsel %vm996, %v4869, %v4877
        %v4881 = vsel %vm2473, %v4878, %v4879
        %v4882 = vsel %vm2475, %v4880, %v4881
        %v4884 = vsub.f32 %v4803, %v4882
        %v4885 = vmul.f32 %v4307, %v4861
        %v4886 = vmul.f32 %v4372, %v4862
        %v4887 = vmul.f32 %v4437, %v4863
        %v4888 = vmul.f32 %v4502, %v4864
        %v4889 = vmul.f32 %v4310, %v4861
        %v4890 = vmul.f32 %v4375, %v4862
        %v4891 = vmul.f32 %v4440, %v4863
        %v4892 = vmul.f32 %v4505, %v4864
        %v4893 = vmul.f32 %v4313, %v4861
        %v4894 = vmul.f32 %v4378, %v4862
        %v4895 = vmul.f32 %v4443, %v4863
        %v4896 = vmul.f32 %v4508, %v4864
        %v4897 = vmul.f32 %v4316, %v4861
        %v4898 = vmul.f32 %v4381, %v4862
        %v4899 = vmul.f32 %v4446, %v4863
        %v4900 = vmul.f32 %v4511, %v4864
        %v4901 = vmul.f32 %v4319, %v4861
        %v4902 = vmul.f32 %v4384, %v4862
        %v4903 = vmul.f32 %v4449, %v4863
        %v4904 = vmul.f32 %v4514, %v4864
        %v4905 = vmul.f32 %v4322, %v4861
        %v4906 = vmul.f32 %v4387, %v4862
        %v4907 = vmul.f32 %v4452, %v4863
        %v4908 = vmul.f32 %v4517, %v4864
        %v4909 = vmul.f32 %v4325, %v4861
        %v4910 = vmul.f32 %v4390, %v4862
        %v4911 = vmul.f32 %v4455, %v4863
        %v4912 = vmul.f32 %v4520, %v4864
        %v4913 = vmul.f32 %v4328, %v4861
        %v4914 = vmul.f32 %v4393, %v4862
        %v4915 = vmul.f32 %v4458, %v4863
        %v4916 = vmul.f32 %v4523, %v4864
        %v4917 = vmul.f32 %v4331, %v4861
        %v4918 = vmul.f32 %v4396, %v4862
        %v4919 = vmul.f32 %v4461, %v4863
        %v4920 = vmul.f32 %v4526, %v4864
        %v4921 = vmul.f32 %v4334, %v4861
        %v4922 = vmul.f32 %v4399, %v4862
        %v4923 = vmul.f32 %v4464, %v4863
        %v4924 = vmul.f32 %v4529, %v4864
        %v4925 = vmul.f32 %v4337, %v4861
        %v4926 = vmul.f32 %v4402, %v4862
        %v4927 = vmul.f32 %v4467, %v4863
        %v4928 = vmul.f32 %v4532, %v4864
        %v4929 = vmul.f32 %v4340, %v4861
        %v4930 = vmul.f32 %v4405, %v4862
        %v4931 = vmul.f32 %v4470, %v4863
        %v4932 = vmul.f32 %v4535, %v4864
        %v4933 = vmul.f32 %v4343, %v4861
        %v4934 = vmul.f32 %v4408, %v4862
        %v4935 = vmul.f32 %v4473, %v4863
        %v4936 = vmul.f32 %v4538, %v4864
        %v4937 = vmul.f32 %v4346, %v4861
        %v4938 = vmul.f32 %v4411, %v4862
        %v4939 = vmul.f32 %v4476, %v4863
        %v4940 = vmul.f32 %v4541, %v4864
        %v4941 = vmul.f32 %v4349, %v4861
        %v4942 = vmul.f32 %v4414, %v4862
        %v4943 = vmul.f32 %v4479, %v4863
        %v4944 = vmul.f32 %v4544, %v4864
        %v4945 = vmul.f32 %v4352, %v4861
        %v4946 = vmul.f32 %v4417, %v4862
        %v4947 = vmul.f32 %v4482, %v4863
        %v4948 = vmul.f32 %v4547, %v4864
        %v4950 = vperm.slane %v4884, 0
        %v4951 = vperm.slane %v4884, 1
        %v4952 = vperm.slane %v4884, 2
        %v4953 = vperm.slane %v4884, 3
        %v4958 = vadd.f32 %v4885, %v4950
        %v4959 = vadd.f32 %v4886, %v4951
        %v4960 = vadd.f32 %v4887, %v4952
        %v4961 = vadd.f32 %v4888, %v4953
        %v4962 = vadd.f32 %v4889, %v4950
        %v4963 = vadd.f32 %v4890, %v4951
        %v4964 = vadd.f32 %v4891, %v4952
        %v4965 = vadd.f32 %v4892, %v4953
        %v4966 = vadd.f32 %v4893, %v4950
        %v4967 = vadd.f32 %v4894, %v4951
        %v4968 = vadd.f32 %v4895, %v4952
        %v4969 = vadd.f32 %v4896, %v4953
        %v4970 = vadd.f32 %v4897, %v4950
        %v4971 = vadd.f32 %v4898, %v4951
        %v4972 = vadd.f32 %v4899, %v4952
        %v4973 = vadd.f32 %v4900, %v4953
        %v4974 = vadd.f32 %v4901, %v4950
        %v4975 = vadd.f32 %v4902, %v4951
        %v4976 = vadd.f32 %v4903, %v4952
        %v4977 = vadd.f32 %v4904, %v4953
        %v4978 = vadd.f32 %v4905, %v4950
        %v4979 = vadd.f32 %v4906, %v4951
        %v4980 = vadd.f32 %v4907, %v4952
        %v4981 = vadd.f32 %v4908, %v4953
        %v4982 = vadd.f32 %v4909, %v4950
        %v4983 = vadd.f32 %v4910, %v4951
        %v4984 = vadd.f32 %v4911, %v4952
        %v4985 = vadd.f32 %v4912, %v4953
        %v4986 = vadd.f32 %v4913, %v4950
        %v4987 = vadd.f32 %v4914, %v4951
        %v4988 = vadd.f32 %v4915, %v4952
        %v4989 = vadd.f32 %v4916, %v4953
        %v4990 = vadd.f32 %v4917, %v4950
        %v4991 = vadd.f32 %v4918, %v4951
        %v4992 = vadd.f32 %v4919, %v4952
        %v4993 = vadd.f32 %v4920, %v4953
        %v4994 = vadd.f32 %v4921, %v4950
        %v4995 = vadd.f32 %v4922, %v4951
        %v4996 = vadd.f32 %v4923, %v4952
        %v4997 = vadd.f32 %v4924, %v4953
        %v4998 = vadd.f32 %v4925, %v4950
        %v4999 = vadd.f32 %v4926, %v4951
        %v5000 = vadd.f32 %v4927, %v4952
        %v5001 = vadd.f32 %v4928, %v4953
        %v5002 = vadd.f32 %v4929, %v4950
        %v5003 = vadd.f32 %v4930, %v4951
        %v5004 = vadd.f32 %v4931, %v4952
        %v5005 = vadd.f32 %v4932, %v4953
        %v5006 = vadd.f32 %v4933, %v4950
        %v5007 = vadd.f32 %v4934, %v4951
        %v5008 = vadd.f32 %v4935, %v4952
        %v5009 = vadd.f32 %v4936, %v4953
        %v5010 = vadd.f32 %v4937, %v4950
        %v5011 = vadd.f32 %v4938, %v4951
        %v5012 = vadd.f32 %v4939, %v4952
        %v5013 = vadd.f32 %v4940, %v4953
        %v5014 = vadd.f32 %v4941, %v4950
        %v5015 = vadd.f32 %v4942, %v4951
        %v5016 = vadd.f32 %v4943, %v4952
        %v5017 = vadd.f32 %v4944, %v4953
        %v5018 = vadd.f32 %v4945, %v4950
        %v5019 = vadd.f32 %v4946, %v4951
        %v5020 = vadd.f32 %v4947, %v4952
        %v5021 = vadd.f32 %v4948, %v4953
        %v5022 = vmax.f32 %v4958, 0.0
        %v5023 = vmax.f32 %v4959, 0.0
        %v5024 = vmax.f32 %v4960, 0.0
        %v5025 = vmax.f32 %v4961, 0.0
        %v5026 = vmax.f32 %v4962, 0.0
        %v5027 = vmax.f32 %v4963, 0.0
        %v5028 = vmax.f32 %v4964, 0.0
        %v5029 = vmax.f32 %v4965, 0.0
        %v5030 = vmax.f32 %v4966, 0.0
        %v5031 = vmax.f32 %v4967, 0.0
        %v5032 = vmax.f32 %v4968, 0.0
        %v5033 = vmax.f32 %v4969, 0.0
        %v5034 = vmax.f32 %v4970, 0.0
        %v5035 = vmax.f32 %v4971, 0.0
        %v5036 = vmax.f32 %v4972, 0.0
        %v5037 = vmax.f32 %v4973, 0.0
        %v5038 = vmax.f32 %v4974, 0.0
        %v5039 = vmax.f32 %v4975, 0.0
        %v5040 = vmax.f32 %v4976, 0.0
        %v5041 = vmax.f32 %v4977, 0.0
        %v5042 = vmax.f32 %v4978, 0.0
        %v5043 = vmax.f32 %v4979, 0.0
        %v5044 = vmax.f32 %v4980, 0.0
        %v5045 = vmax.f32 %v4981, 0.0
        %v5046 = vmax.f32 %v4982, 0.0
        %v5047 = vmax.f32 %v4983, 0.0
        %v5048 = vmax.f32 %v4984, 0.0
        %v5049 = vmax.f32 %v4985, 0.0
        %v5050 = vmax.f32 %v4986, 0.0
        %v5051 = vmax.f32 %v4987, 0.0
        %v5052 = vmax.f32 %v4988, 0.0
        %v5053 = vmax.f32 %v4989, 0.0
        %v5054 = vmax.f32 %v4990, 0.0
        %v5055 = vmax.f32 %v4991, 0.0
        %v5056 = vmax.f32 %v4992, 0.0
        %v5057 = vmax.f32 %v4993, 0.0
        %v5058 = vmax.f32 %v4994, 0.0
        %v5059 = vmax.f32 %v4995, 0.0
        %v5060 = vmax.f32 %v4996, 0.0
        %v5061 = vmax.f32 %v4997, 0.0
        %v5062 = vmax.f32 %v4998, 0.0
        %v5063 = vmax.f32 %v4999, 0.0
        %v5064 = vmax.f32 %v5000, 0.0
        %v5065 = vmax.f32 %v5001, 0.0
        %v5066 = vmax.f32 %v5002, 0.0
        %v5067 = vmax.f32 %v5003, 0.0
        %v5068 = vmax.f32 %v5004, 0.0
        %v5069 = vmax.f32 %v5005, 0.0
        %v5070 = vmax.f32 %v5006, 0.0
        %v5071 = vmax.f32 %v5007, 0.0
        %v5072 = vmax.f32 %v5008, 0.0
        %v5073 = vmax.f32 %v5009, 0.0
        %v5074 = vmax.f32 %v5010, 0.0
        %v5075 = vmax.f32 %v5011, 0.0
        %v5076 = vmax.f32 %v5012, 0.0
        %v5077 = vmax.f32 %v5013, 0.0
        %v5078 = vmax.f32 %v5014, 0.0
        %v5079 = vmax.f32 %v5015, 0.0
        %v5080 = vmax.f32 %v5016, 0.0
        %v5081 = vmax.f32 %v5017, 0.0
        %v5082 = vmax.f32 %v5018, 0.0
        %v5083 = vmax.f32 %v5019, 0.0
        %v5084 = vmax.f32 %v5020, 0.0
        %v5085 = vmax.f32 %v5021, 0.0
        %v5086 = vld [vmem:[%s496] sm:$0xff]
        %v5087 = vld [vmem:[%s496 + $0x8] sm:$0xff]
        %5088 = vmatpush.msra.mxu0 %v5082
        %5089 = vmatpush.msra.mxu0 %v5078
        %5090 = vmatpush.msra.mxu0 %v5074
        %5091 = vmatpush.msra.mxu0 %v5070
        %5092 = vmatpush.msra.mxu0 %v5066
        %5093 = vmatpush.msra.mxu0 %v5062
        %5094 = vmatpush.msra.mxu0 %v5058
        %5095 = vmatpush.msra.mxu0 %v5054
        %5096 = vmatpush.msra.mxu0 %v5050
        %5097 = vmatpush.msra.mxu0 %v5046
        %5098 = vmatpush.msra.mxu0 %v5042
        %5099 = vmatpush.msra.mxu0 %v5038
        %5100 = vmatpush.msra.mxu0 %v5034
        %5101 = vmatpush.msra.mxu0 %v5030
        %5102 = vmatpush.msra.mxu0 %v5026
        %5103 = vmatpush.msra.mxu0 %v5022
        %5104 = vmatmul.f32.gmra.mxu0 %v5086
        %v5105 = vpop.f32.mrf.mxu0
        %v5106 = vadd.f32 0.0, %v5105
        %5107 = vmatmul.f32.gmra.mxu0 %v5087
        %v5108 = vpop.f32.mrf.mxu0
        %v5109 = vadd.f32 0.0, %v5108
        %5110 = vdwg.mxu0
        %5111 = vmatpush.msra.mxu0 %v5083
        %5112 = vmatpush.msra.mxu0 %v5079
        %5113 = vmatpush.msra.mxu0 %v5075
        %5114 = vmatpush.msra.mxu0 %v5071
        %5115 = vmatpush.msra.mxu0 %v5067
        %5116 = vmatpush.msra.mxu0 %v5063
        %5117 = vmatpush.msra.mxu0 %v5059
        %5118 = vmatpush.msra.mxu0 %v5055
        %5119 = vmatpush.msra.mxu0 %v5051
        %5120 = vmatpush.msra.mxu0 %v5047
        %5121 = vmatpush.msra.mxu0 %v5043
        %5122 = vmatpush.msra.mxu0 %v5039
        %5123 = vmatpush.msra.mxu0 %v5035
        %5124 = vmatpush.msra.mxu0 %v5031
        %5125 = vmatpush.msra.mxu0 %v5027
        %5126 = vmatpush.msra.mxu0 %v5023
        %5127 = vmatmul.f32.gmra.mxu0 %v5086
        %v5128 = vpop.f32.mrf.mxu0
        %v5129 = vadd.f32 0.0, %v5128
        %5130 = vmatmul.f32.gmra.mxu0 %v5087
        %v5131 = vpop.f32.mrf.mxu0
        %v5132 = vadd.f32 0.0, %v5131
        %5133 = vdwg.mxu0
        %5134 = vmatpush.msra.mxu0 %v5084
        %5135 = vmatpush.msra.mxu0 %v5080
        %5136 = vmatpush.msra.mxu0 %v5076
        %5137 = vmatpush.msra.mxu0 %v5072
        %5138 = vmatpush.msra.mxu0 %v5068
        %5139 = vmatpush.msra.mxu0 %v5064
        %5140 = vmatpush.msra.mxu0 %v5060
        %5141 = vmatpush.msra.mxu0 %v5056
        %5142 = vmatpush.msra.mxu0 %v5052
        %5143 = vmatpush.msra.mxu0 %v5048
        %5144 = vmatpush.msra.mxu0 %v5044
        %5145 = vmatpush.msra.mxu0 %v5040
        %5146 = vmatpush.msra.mxu0 %v5036
        %5147 = vmatpush.msra.mxu0 %v5032
        %5148 = vmatpush.msra.mxu0 %v5028
        %5149 = vmatpush.msra.mxu0 %v5024
        %5150 = vmatmul.f32.gmra.mxu0 %v5086
        %v5151 = vpop.f32.mrf.mxu0
        %v5152 = vadd.f32 0.0, %v5151
        %5153 = vmatmul.f32.gmra.mxu0 %v5087
        %v5154 = vpop.f32.mrf.mxu0
        %v5155 = vadd.f32 0.0, %v5154
        %5156 = vdwg.mxu0
        %5157 = vmatpush.msra.mxu0 %v5085
        %5158 = vmatpush.msra.mxu0 %v5081
        %5159 = vmatpush.msra.mxu0 %v5077
        %5160 = vmatpush.msra.mxu0 %v5073
        %5161 = vmatpush.msra.mxu0 %v5069
        %5162 = vmatpush.msra.mxu0 %v5065
        %5163 = vmatpush.msra.mxu0 %v5061
        %5164 = vmatpush.msra.mxu0 %v5057
        %5165 = vmatpush.msra.mxu0 %v5053
        %5166 = vmatpush.msra.mxu0 %v5049
        %5167 = vmatpush.msra.mxu0 %v5045
        %5168 = vmatpush.msra.mxu0 %v5041
        %5169 = vmatpush.msra.mxu0 %v5037
        %5170 = vmatpush.msra.mxu0 %v5033
        %5171 = vmatpush.msra.mxu0 %v5029
        %5172 = vmatpush.msra.mxu0 %v5025
        %5173 = vmatmul.f32.gmra.mxu0 %v5086
        %v5174 = vpop.f32.mrf.mxu0
        %v5175 = vadd.f32 0.0, %v5174
        %5176 = vmatmul.f32.gmra.mxu0 %v5087
        %v5177 = vpop.f32.mrf.mxu0
        %v5178 = vadd.f32 0.0, %v5177
        %5179 = vdwg.mxu0
        %v5180 = vpack.c.bf16 %v5109, %v5106
        %v5181 = vpack.c.bf16 %v5132, %v5129
        %v5182 = vpack.c.bf16 %v5155, %v5152
        %v5183 = vpack.c.bf16 %v5178, %v5175
        %v5184 = vld [vmem:[#allocation8] sm:$0xff]
        %v5185 = vld [vmem:[#allocation8 + $0x8] sm:$0xff]
        %v5186 = vld [vmem:[#allocation8 + $0x10] sm:$0xf]
        %v5187 = vld [vmem:[#allocation8 + $0x14] sm:$0xff]
        %v5188 = vld [vmem:[#allocation8 + $0x1c] sm:$0xff]
        %v5189 = vld [vmem:[#allocation8 + $0x24] sm:$0xf]
        %v5190 = vld [vmem:[#allocation8 + $0x28] sm:$0xff]
        %v5191 = vld [vmem:[#allocation8 + $0x30] sm:$0xff]
        %v5192 = vld [vmem:[#allocation8 + $0x38] sm:$0xf]
        %v5193 = vld [vmem:[#allocation8 + $0x3c] sm:$0xff]
        %v5194 = vld [vmem:[#allocation8 + $0x44] sm:$0xff]
        %v5195 = vld [vmem:[#allocation8 + $0x4c] sm:$0xf]
        %v5196 = vld [vmem:[#allocation8 + $0x50] sm:$0xff]
        %v5197 = vld [vmem:[#allocation8 + $0x58] sm:$0xff]
        %v5198 = vld [vmem:[#allocation8 + $0x60] sm:$0xf]
        %v5199 = vld [vmem:[#allocation8 + $0x64] sm:$0xff]
        %v5200 = vld [vmem:[#allocation8 + $0x6c] sm:$0xff]
        %v5201 = vld [vmem:[#allocation8 + $0x74] sm:$0xf]
        %v5202 = vld [vmem:[#allocation8 + $0x78] sm:$0xff]
        %v5203 = vld [vmem:[#allocation8 + $0x80] sm:$0xff]
        %v5204 = vld [vmem:[#allocation8 + $0x88] sm:$0xf]
        %v5205 = vld [vmem:[#allocation8 + $0x8c] sm:$0xff]
        %v5206 = vld [vmem:[#allocation8 + $0x94] sm:$0xff]
        %v5207 = vld [vmem:[#allocation8 + $0x9c] sm:$0xf]
        %v5208 = vld [vmem:[#allocation8 + $0xa0] sm:$0xff]
        %v5209 = vld [vmem:[#allocation8 + $0xa8] sm:$0xff]
        %v5210 = vld [vmem:[#allocation8 + $0xb0] sm:$0xf]
        %v5211 = vld [vmem:[#allocation8 + $0xb4] sm:$0xff]
        %v5212 = vld [vmem:[#allocation8 + $0xbc] sm:$0xff]
        %v5213 = vld [vmem:[#allocation8 + $0xc4] sm:$0xf]
        %v5214 = vld [vmem:[#allocation8 + $0xc8] sm:$0xff]
        %v5215 = vld [vmem:[#allocation8 + $0xd0] sm:$0xff]
        %v5216 = vld [vmem:[#allocation8 + $0xd8] sm:$0xf]
        %v5217 = vld [vmem:[#allocation8 + $0xdc] sm:$0xff]
        %v5218 = vld [vmem:[#allocation8 + $0xe4] sm:$0xff]
        %v5219 = vld [vmem:[#allocation8 + $0xec] sm:$0xf]
        %v5220 = vld [vmem:[#allocation8 + $0xf0] sm:$0xff]
        %v5221 = vld [vmem:[#allocation8 + $0xf8] sm:$0xff]
        %v5222 = vld [vmem:[#allocation8 + $0x100] sm:$0xf]
        %v5223 = vld [vmem:[#allocation8 + $0x104] sm:$0xff]
        %v5224 = vld [vmem:[#allocation8 + $0x10c] sm:$0xff]
        %v5225 = vld [vmem:[#allocation8 + $0x114] sm:$0xf]
        %v5226 = vld [vmem:[#allocation8 + $0x118] sm:$0xff]
        %v5227 = vld [vmem:[#allocation8 + $0x120] sm:$0xff]
        %v5228 = vld [vmem:[#allocation8 + $0x128] sm:$0xf]
        %v5229 = vld [vmem:[#allocation8 + $0x12c] sm:$0xff]
        %v5230 = vld [vmem:[#allocation8 + $0x134] sm:$0xff]
        %v5231 = vld [vmem:[#allocation8 + $0x13c] sm:$0xf]
        %v5232 = vld [vmem:[#allocation8 + $0x140] sm:$0xff]
        %v5233 = vld [vmem:[#allocation8 + $0x148] sm:$0xff]
        %v5234 = vld [vmem:[#allocation8 + $0x150] sm:$0xf]
        %v5235 = vld [vmem:[#allocation8 + $0x154] sm:$0xff]
        %v5236 = vld [vmem:[#allocation8 + $0x15c] sm:$0xff]
        %v5237 = vld [vmem:[#allocation8 + $0x164] sm:$0xf]
        %v5238 = vld [vmem:[#allocation8 + $0x168] sm:$0xff]
        %v5239 = vld [vmem:[#allocation8 + $0x170] sm:$0xff]
        %v5240 = vld [vmem:[#allocation8 + $0x178] sm:$0xf]
        %v5241 = vld [vmem:[#allocation8 + $0x17c] sm:$0xff]
        %v5242 = vld [vmem:[#allocation8 + $0x184] sm:$0xff]
        %v5243 = vld [vmem:[#allocation8 + $0x18c] sm:$0xf]
        %v5244 = vld [vmem:[#allocation8 + $0x190] sm:$0xff]
        %v5245 = vld [vmem:[#allocation8 + $0x198] sm:$0xff]
        %v5246 = vld [vmem:[#allocation8 + $0x1a0] sm:$0xf]
        %v5247 = vld [vmem:[#allocation8 + $0x1a4] sm:$0xff]
        %v5248 = vld [vmem:[#allocation8 + $0x1ac] sm:$0xff]
        %v5249 = vld [vmem:[#allocation8 + $0x1b4] sm:$0xf]
        %v5250 = vld [vmem:[#allocation8 + $0x1b8] sm:$0xff]
        %v5251 = vld [vmem:[#allocation8 + $0x1c0] sm:$0xff]
        %v5252 = vld [vmem:[#allocation8 + $0x1c8] sm:$0xf]
        %v5253 = vld [vmem:[#allocation8 + $0x1cc] sm:$0xff]
        %v5254 = vld [vmem:[#allocation8 + $0x1d4] sm:$0xff]
        %v5255 = vld [vmem:[#allocation8 + $0x1dc] sm:$0xf]
        %v5256 = vld [vmem:[#allocation8 + $0x1e0] sm:$0xff]
        %v5257 = vld [vmem:[#allocation8 + $0x1e8] sm:$0xff]
        %v5258 = vld [vmem:[#allocation8 + $0x1f0] sm:$0xf]
        %v5259 = vld [vmem:[#allocation8 + $0x1f4] sm:$0xff]
        %v5260 = vld [vmem:[#allocation8 + $0x1fc] sm:$0xff]
        %v5261 = vld [vmem:[#allocation8 + $0x204] sm:$0xf]
        %v5262 = vld [vmem:[#allocation8 + $0x208] sm:$0xff]
        %v5263 = vld [vmem:[#allocation8 + $0x210] sm:$0xff]
        %v5264 = vld [vmem:[#allocation8 + $0x218] sm:$0xf]
        %v5265 = vld [vmem:[#allocation8 + $0x21c] sm:$0xff]
        %v5266 = vld [vmem:[#allocation8 + $0x224] sm:$0xff]
        %v5267 = vld [vmem:[#allocation8 + $0x22c] sm:$0xf]
        %v5268 = vld [vmem:[#allocation8 + $0x230] sm:$0xff]
        %v5269 = vld [vmem:[#allocation8 + $0x238] sm:$0xff]
        %v5270 = vld [vmem:[#allocation8 + $0x240] sm:$0xf]
        %v5271 = vld [vmem:[#allocation8 + $0x244] sm:$0xff]
        %v5272 = vld [vmem:[#allocation8 + $0x24c] sm:$0xff]
        %v5273 = vld [vmem:[#allocation8 + $0x254] sm:$0xf]
        %v5274 = vld [vmem:[#allocation8 + $0x258] sm:$0xff]
        %v5275 = vld [vmem:[#allocation8 + $0x260] sm:$0xff]
        %v5276 = vld [vmem:[#allocation8 + $0x268] sm:$0xf]
        %v5277 = vld [vmem:[#allocation8 + $0x26c] sm:$0xff]
        %v5278 = vld [vmem:[#allocation8 + $0x274] sm:$0xff]
        %v5279 = vld [vmem:[#allocation8 + $0x27c] sm:$0xf]
        %v5280 = vld [vmem:[#allocation8 + $0x280] sm:$0xff]
        %v5281 = vld [vmem:[#allocation8 + $0x288] sm:$0xff]
        %v5282 = vld [vmem:[#allocation8 + $0x290] sm:$0xf]
        %v5283 = vld [vmem:[#allocation8 + $0x294] sm:$0xff]
        %v5284 = vld [vmem:[#allocation8 + $0x29c] sm:$0xff]
        %v5285 = vld [vmem:[#allocation8 + $0x2a4] sm:$0xf]
        %v5286 = vld [vmem:[#allocation8 + $0x2a8] sm:$0xff]
        %v5287 = vld [vmem:[#allocation8 + $0x2b0] sm:$0xff]
        %v5288 = vld [vmem:[#allocation8 + $0x2b8] sm:$0xf]
        %v5289 = vld [vmem:[#allocation8 + $0x2bc] sm:$0xff]
        %v5290 = vld [vmem:[#allocation8 + $0x2c4] sm:$0xff]
        %v5291 = vld [vmem:[#allocation8 + $0x2cc] sm:$0xf]
        %v5292 = vld [vmem:[#allocation8 + $0x2d0] sm:$0xff]
        %v5293 = vld [vmem:[#allocation8 + $0x2d8] sm:$0xff]
        %v5294 = vld [vmem:[#allocation8 + $0x2e0] sm:$0xf]
        %v5295 = vld [vmem:[#allocation8 + $0x2e4] sm:$0xff]
        %v5296 = vld [vmem:[#allocation8 + $0x2ec] sm:$0xff]
        %v5297 = vld [vmem:[#allocation8 + $0x2f4] sm:$0xf]
        %v5298 = vld [vmem:[#allocation8 + $0x2f8] sm:$0xff]
        %v5299 = vld [vmem:[#allocation8 + $0x300] sm:$0xff]
        %v5300 = vld [vmem:[#allocation8 + $0x308] sm:$0xf]
        %v5301 = vld [vmem:[#allocation8 + $0x30c] sm:$0xff]
        %v5302 = vld [vmem:[#allocation8 + $0x314] sm:$0xff]
        %v5303 = vld [vmem:[#allocation8 + $0x31c] sm:$0xf]
        %v5304 = vld [vmem:[#allocation8 + $0x320] sm:$0xff]
        %v5305 = vld [vmem:[#allocation8 + $0x328] sm:$0xff]
        %v5306 = vld [vmem:[#allocation8 + $0x330] sm:$0xf]
        %v5307 = vld [vmem:[#allocation8 + $0x334] sm:$0xff]
        %v5308 = vld [vmem:[#allocation8 + $0x33c] sm:$0xff]
        %v5309 = vld [vmem:[#allocation8 + $0x344] sm:$0xf]
        %v5310 = vld [vmem:[#allocation8 + $0x348] sm:$0xff]
        %v5311 = vld [vmem:[#allocation8 + $0x350] sm:$0xff]
        %v5312 = vld [vmem:[#allocation8 + $0x358] sm:$0xf]
        %v5313 = vld [vmem:[#allocation8 + $0x35c] sm:$0xff]
        %v5314 = vld [vmem:[#allocation8 + $0x364] sm:$0xff]
        %v5315 = vld [vmem:[#allocation8 + $0x36c] sm:$0xf]
        %v5316 = vld [vmem:[#allocation8 + $0x370] sm:$0xff]
        %v5317 = vld [vmem:[#allocation8 + $0x378] sm:$0xff]
        %v5318 = vld [vmem:[#allocation8 + $0x380] sm:$0xf]
        %v5319 = vld [vmem:[#allocation8 + $0x384] sm:$0xff]
        %v5320 = vld [vmem:[#allocation8 + $0x38c] sm:$0xff]
        %v5321 = vld [vmem:[#allocation8 + $0x394] sm:$0xf]
        %v5322 = vld [vmem:[#allocation8 + $0x398] sm:$0xff]
        %v5323 = vld [vmem:[#allocation8 + $0x3a0] sm:$0xff]
        %v5324 = vld [vmem:[#allocation8 + $0x3a8] sm:$0xf]
        %v5325 = vld [vmem:[#allocation8 + $0x3ac] sm:$0xff]
        %v5326 = vld [vmem:[#allocation8 + $0x3b4] sm:$0xff]
        %v5327 = vld [vmem:[#allocation8 + $0x3bc] sm:$0xf]
        %v5328 = vld [vmem:[#allocation8 + $0x3c0] sm:$0xff]
        %v5329 = vld [vmem:[#allocation8 + $0x3c8] sm:$0xff]
        %v5330 = vld [vmem:[#allocation8 + $0x3d0] sm:$0xf]
        %v5331 = vld [vmem:[#allocation8 + $0x3d4] sm:$0xff]
        %v5332 = vld [vmem:[#allocation8 + $0x3dc] sm:$0xff]
        %v5333 = vld [vmem:[#allocation8 + $0x3e4] sm:$0xf]
        %v5334 = vld [vmem:[#allocation8 + $0x3e8] sm:$0xff]
        %v5335 = vld [vmem:[#allocation8 + $0x3f0] sm:$0xff]
        %v5336 = vld [vmem:[#allocation8 + $0x3f8] sm:$0xf]
        %v5337 = vld [vmem:[#allocation8 + $0x3fc] sm:$0xff]
        %v5338 = vld [vmem:[#allocation8 + $0x404] sm:$0xff]
        %v5339 = vld [vmem:[#allocation8 + $0x40c] sm:$0xf]
        %v5340 = vld [vmem:[#allocation8 + $0x410] sm:$0xff]
        %v5341 = vld [vmem:[#allocation8 + $0x418] sm:$0xff]
        %v5342 = vld [vmem:[#allocation8 + $0x420] sm:$0xf]
        %v5343 = vld [vmem:[#allocation8 + $0x424] sm:$0xff]
        %v5344 = vld [vmem:[#allocation8 + $0x42c] sm:$0xff]
        %v5345 = vld [vmem:[#allocation8 + $0x434] sm:$0xf]
        %v5346 = vld [vmem:[#allocation8 + $0x438] sm:$0xff]
        %v5347 = vld [vmem:[#allocation8 + $0x440] sm:$0xff]
        %v5348 = vld [vmem:[#allocation8 + $0x448] sm:$0xf]
        %v5349 = vld [vmem:[#allocation8 + $0x44c] sm:$0xff]
        %v5350 = vld [vmem:[#allocation8 + $0x454] sm:$0xff]
        %v5351 = vld [vmem:[#allocation8 + $0x45c] sm:$0xf]
        %v5352 = vld [vmem:[#allocation8 + $0x460] sm:$0xff]
        %v5353 = vld [vmem:[#allocation8 + $0x468] sm:$0xff]
        %v5354 = vld [vmem:[#allocation8 + $0x470] sm:$0xf]
        %v5355 = vld [vmem:[#allocation8 + $0x474] sm:$0xff]
        %v5356 = vld [vmem:[#allocation8 + $0x47c] sm:$0xff]
        %v5357 = vld [vmem:[#allocation8 + $0x484] sm:$0xf]
        %v5358 = vld [vmem:[#allocation8 + $0x488] sm:$0xff]
        %v5359 = vld [vmem:[#allocation8 + $0x490] sm:$0xff]
        %v5360 = vld [vmem:[#allocation8 + $0x498] sm:$0xf]
        %v5361 = vld [vmem:[#allocation8 + $0x49c] sm:$0xff]
        %v5362 = vld [vmem:[#allocation8 + $0x4a4] sm:$0xff]
        %v5363 = vld [vmem:[#allocation8 + $0x4ac] sm:$0xf]
        %v5364 = vld [vmem:[#allocation8 + $0x4b0] sm:$0xff]
        %v5365 = vld [vmem:[#allocation8 + $0x4b8] sm:$0xff]
        %v5366 = vld [vmem:[#allocation8 + $0x4c0] sm:$0xf]
        %v5367 = vld [vmem:[#allocation8 + $0x4c4] sm:$0xff]
        %v5368 = vld [vmem:[#allocation8 + $0x4cc] sm:$0xff]
        %v5369 = vld [vmem:[#allocation8 + $0x4d4] sm:$0xf]
        %v5370 = vld [vmem:[#allocation8 + $0x4d8] sm:$0xff]
        %v5371 = vld [vmem:[#allocation8 + $0x4e0] sm:$0xff]
        %v5372 = vld [vmem:[#allocation8 + $0x4e8] sm:$0xf]
        %v5373 = vld [vmem:[#allocation8 + $0x4ec] sm:$0xff]
        %v5374 = vld [vmem:[#allocation8 + $0x4f4] sm:$0xff]
        %v5375 = vld [vmem:[#allocation8 + $0x4fc] sm:$0xf]
        %v5376 = vld [vmem:[%s10] sm:$0x1f]
        %v5378 = vperm.slane %v5376, 0
        %v5379 = vperm.slane %v5376, 1
        %v5380 = vperm.slane %v5376, 2
        %v5381 = vperm.slane %v5376, 3
        %v5382 = vperm.slane %v5376, 4
        %v5580 = vunpack.c.l.b16 %v5184
        %v5581 = vunpack.c.h.b16 %v5184
        %v5582 = vunpack.c.l.b16 %v5185
        %v5583 = vunpack.c.h.b16 %v5185
        %v5584 = vunpack.c.l.b16 %v5186
        %v5585 = vunpack.c.l.b16 %v5187
        %v5586 = vunpack.c.h.b16 %v5187
        %v5587 = vunpack.c.l.b16 %v5188
        %v5588 = vunpack.c.h.b16 %v5188
        %v5589 = vunpack.c.l.b16 %v5189
        %v5590 = vunpack.c.l.b16 %v5190
        %v5591 = vunpack.c.h.b16 %v5190
        %v5592 = vunpack.c.l.b16 %v5191
        %v5593 = vunpack.c.h.b16 %v5191
        %v5594 = vunpack.c.l.b16 %v5192
        %v5595 = vunpack.c.l.b16 %v5193
        %v5596 = vunpack.c.h.b16 %v5193
        %v5597 = vunpack.c.l.b16 %v5194
        %v5598 = vunpack.c.h.b16 %v5194
        %v5599 = vunpack.c.l.b16 %v5195
        %v5600 = vunpack.c.l.b16 %v5196
        %v5601 = vunpack.c.h.b16 %v5196
        %v5602 = vunpack.c.l.b16 %v5197
        %v5603 = vunpack.c.h.b16 %v5197
        %v5604 = vunpack.c.l.b16 %v5198
        %v5605 = vunpack.c.l.b16 %v5199
        %v5606 = vunpack.c.h.b16 %v5199
        %v5607 = vunpack.c.l.b16 %v5200
        %v5608 = vunpack.c.h.b16 %v5200
        %v5609 = vunpack.c.l.b16 %v5201
        %v5610 = vunpack.c.l.b16 %v5202
        %v5611 = vunpack.c.h.b16 %v5202
        %v5612 = vunpack.c.l.b16 %v5203
        %v5613 = vunpack.c.h.b16 %v5203
        %v5614 = vunpack.c.l.b16 %v5204
        %v5615 = vunpack.c.l.b16 %v5205
        %v5616 = vunpack.c.h.b16 %v5205
        %v5617 = vunpack.c.l.b16 %v5206
        %v5618 = vunpack.c.h.b16 %v5206
        %v5619 = vunpack.c.l.b16 %v5207
        %v5620 = vunpack.c.l.b16 %v5208
        %v5621 = vunpack.c.h.b16 %v5208
        %v5622 = vunpack.c.l.b16 %v5209
        %v5623 = vunpack.c.h.b16 %v5209
        %v5624 = vunpack.c.l.b16 %v5210
        %v5625 = vunpack.c.l.b16 %v5211
        %v5626 = vunpack.c.h.b16 %v5211
        %v5627 = vunpack.c.l.b16 %v5212
        %v5628 = vunpack.c.h.b16 %v5212
        %v5629 = vunpack.c.l.b16 %v5213
        %v5630 = vunpack.c.l.b16 %v5214
        %v5631 = vunpack.c.h.b16 %v5214
        %v5632 = vunpack.c.l.b16 %v5215
        %v5633 = vunpack.c.h.b16 %v5215
        %v5634 = vunpack.c.l.b16 %v5216
        %v5635 = vunpack.c.l.b16 %v5217
        %v5636 = vunpack.c.h.b16 %v5217
        %v5637 = vunpack.c.l.b16 %v5218
        %v5638 = vunpack.c.h.b16 %v5218
        %v5639 = vunpack.c.l.b16 %v5219
        %v5640 = vunpack.c.l.b16 %v5220
        %v5641 = vunpack.c.h.b16 %v5220
        %v5642 = vunpack.c.l.b16 %v5221
        %v5643 = vunpack.c.h.b16 %v5221
        %v5644 = vunpack.c.l.b16 %v5222
        %v5645 = vunpack.c.l.b16 %v5223
        %v5646 = vunpack.c.h.b16 %v5223
        %v5647 = vunpack.c.l.b16 %v5224
        %v5648 = vunpack.c.h.b16 %v5224
        %v5649 = vunpack.c.l.b16 %v5225
        %v5650 = vunpack.c.l.b16 %v5226
        %v5651 = vunpack.c.h.b16 %v5226
        %v5652 = vunpack.c.l.b16 %v5227
        %v5653 = vunpack.c.h.b16 %v5227
        %v5654 = vunpack.c.l.b16 %v5228
        %v5655 = vunpack.c.l.b16 %v5229
        %v5656 = vunpack.c.h.b16 %v5229
        %v5657 = vunpack.c.l.b16 %v5230
        %v5658 = vunpack.c.h.b16 %v5230
        %v5659 = vunpack.c.l.b16 %v5231
        %v5660 = vunpack.c.l.b16 %v5232
        %v5661 = vunpack.c.h.b16 %v5232
        %v5662 = vunpack.c.l.b16 %v5233
        %v5663 = vunpack.c.h.b16 %v5233
        %v5664 = vunpack.c.l.b16 %v5234
        %v5665 = vunpack.c.l.b16 %v5235
        %v5666 = vunpack.c.h.b16 %v5235
        %v5667 = vunpack.c.l.b16 %v5236
        %v5668 = vunpack.c.h.b16 %v5236
        %v5669 = vunpack.c.l.b16 %v5237
        %v5670 = vunpack.c.l.b16 %v5238
        %v5671 = vunpack.c.h.b16 %v5238
        %v5672 = vunpack.c.l.b16 %v5239
        %v5673 = vunpack.c.h.b16 %v5239
        %v5674 = vunpack.c.l.b16 %v5240
        %v5675 = vunpack.c.l.b16 %v5241
        %v5676 = vunpack.c.h.b16 %v5241
        %v5677 = vunpack.c.l.b16 %v5242
        %v5678 = vunpack.c.h.b16 %v5242
        %v5679 = vunpack.c.l.b16 %v5243
        %v5680 = vunpack.c.l.b16 %v5244
        %v5681 = vunpack.c.h.b16 %v5244
        %v5682 = vunpack.c.l.b16 %v5245
        %v5683 = vunpack.c.h.b16 %v5245
        %v5684 = vunpack.c.l.b16 %v5246
        %v5685 = vunpack.c.l.b16 %v5247
        %v5686 = vunpack.c.h.b16 %v5247
        %v5687 = vunpack.c.l.b16 %v5248
        %v5688 = vunpack.c.h.b16 %v5248
        %v5689 = vunpack.c.l.b16 %v5249
        %v5690 = vunpack.c.l.b16 %v5250
        %v5691 = vunpack.c.h.b16 %v5250
        %v5692 = vunpack.c.l.b16 %v5251
        %v5693 = vunpack.c.h.b16 %v5251
        %v5694 = vunpack.c.l.b16 %v5252
        %v5695 = vunpack.c.l.b16 %v5253
        %v5696 = vunpack.c.h.b16 %v5253
        %v5697 = vunpack.c.l.b16 %v5254
        %v5698 = vunpack.c.h.b16 %v5254
        %v5699 = vunpack.c.l.b16 %v5255
        %v5700 = vunpack.c.l.b16 %v5256
        %v5701 = vunpack.c.h.b16 %v5256
        %v5702 = vunpack.c.l.b16 %v5257
        %v5703 = vunpack.c.h.b16 %v5257
        %v5704 = vunpack.c.l.b16 %v5258
        %v5705 = vunpack.c.l.b16 %v5259
        %v5706 = vunpack.c.h.b16 %v5259
        %v5707 = vunpack.c.l.b16 %v5260
        %v5708 = vunpack.c.h.b16 %v5260
        %v5709 = vunpack.c.l.b16 %v5261
        %v5710 = vunpack.c.l.b16 %v5262
        %v5711 = vunpack.c.h.b16 %v5262
        %v5712 = vunpack.c.l.b16 %v5263
        %v5713 = vunpack.c.h.b16 %v5263
        %v5714 = vunpack.c.l.b16 %v5264
        %v5715 = vunpack.c.l.b16 %v5265
        %v5716 = vunpack.c.h.b16 %v5265
        %v5717 = vunpack.c.l.b16 %v5266
        %v5718 = vunpack.c.h.b16 %v5266
        %v5719 = vunpack.c.l.b16 %v5267
        %v5720 = vunpack.c.l.b16 %v5268
        %v5721 = vunpack.c.h.b16 %v5268
        %v5722 = vunpack.c.l.b16 %v5269
        %v5723 = vunpack.c.h.b16 %v5269
        %v5724 = vunpack.c.l.b16 %v5270
        %v5725 = vunpack.c.l.b16 %v5271
        %v5726 = vunpack.c.h.b16 %v5271
        %v5727 = vunpack.c.l.b16 %v5272
        %v5728 = vunpack.c.h.b16 %v5272
        %v5729 = vunpack.c.l.b16 %v5273
        %v5730 = vunpack.c.l.b16 %v5274
        %v5731 = vunpack.c.h.b16 %v5274
        %v5732 = vunpack.c.l.b16 %v5275
        %v5733 = vunpack.c.h.b16 %v5275
        %v5734 = vunpack.c.l.b16 %v5276
        %v5735 = vunpack.c.l.b16 %v5277
        %v5736 = vunpack.c.h.b16 %v5277
        %v5737 = vunpack.c.l.b16 %v5278
        %v5738 = vunpack.c.h.b16 %v5278
        %v5739 = vunpack.c.l.b16 %v5279
        %v5740 = vunpack.c.l.b16 %v5280
        %v5741 = vunpack.c.h.b16 %v5280
        %v5742 = vunpack.c.l.b16 %v5281
        %v5743 = vunpack.c.h.b16 %v5281
        %v5744 = vunpack.c.l.b16 %v5282
        %v5745 = vunpack.c.l.b16 %v5283
        %v5746 = vunpack.c.h.b16 %v5283
        %v5747 = vunpack.c.l.b16 %v5284
        %v5748 = vunpack.c.h.b16 %v5284
        %v5749 = vunpack.c.l.b16 %v5285
        %v5750 = vunpack.c.l.b16 %v5286
        %v5751 = vunpack.c.h.b16 %v5286
        %v5752 = vunpack.c.l.b16 %v5287
        %v5753 = vunpack.c.h.b16 %v5287
        %v5754 = vunpack.c.l.b16 %v5288
        %v5755 = vunpack.c.l.b16 %v5289
        %v5756 = vunpack.c.h.b16 %v5289
        %v5757 = vunpack.c.l.b16 %v5290
        %v5758 = vunpack.c.h.b16 %v5290
        %v5759 = vunpack.c.l.b16 %v5291
        %v5760 = vunpack.c.l.b16 %v5292
        %v5761 = vunpack.c.h.b16 %v5292
        %v5762 = vunpack.c.l.b16 %v5293
        %v5763 = vunpack.c.h.b16 %v5293
        %v5764 = vunpack.c.l.b16 %v5294
        %v5765 = vunpack.c.l.b16 %v5295
        %v5766 = vunpack.c.h.b16 %v5295
        %v5767 = vunpack.c.l.b16 %v5296
        %v5768 = vunpack.c.h.b16 %v5296
        %v5769 = vunpack.c.l.b16 %v5297
        %v5770 = vunpack.c.l.b16 %v5298
        %v5771 = vunpack.c.h.b16 %v5298
        %v5772 = vunpack.c.l.b16 %v5299
        %v5773 = vunpack.c.h.b16 %v5299
        %v5774 = vunpack.c.l.b16 %v5300
        %v5775 = vunpack.c.l.b16 %v5301
        %v5776 = vunpack.c.h.b16 %v5301
        %v5777 = vunpack.c.l.b16 %v5302
        %v5778 = vunpack.c.h.b16 %v5302
        %v5779 = vunpack.c.l.b16 %v5303
        %v5780 = vunpack.c.l.b16 %v5304
        %v5781 = vunpack.c.h.b16 %v5304
        %v5782 = vunpack.c.l.b16 %v5305
        %v5783 = vunpack.c.h.b16 %v5305
        %v5784 = vunpack.c.l.b16 %v5306
        %v5785 = vunpack.c.l.b16 %v5307
        %v5786 = vunpack.c.h.b16 %v5307
        %v5787 = vunpack.c.l.b16 %v5308
        %v5788 = vunpack.c.h.b16 %v5308
        %v5789 = vunpack.c.l.b16 %v5309
        %v5790 = vunpack.c.l.b16 %v5310
        %v5791 = vunpack.c.h.b16 %v5310
        %v5792 = vunpack.c.l.b16 %v5311
        %v5793 = vunpack.c.h.b16 %v5311
        %v5794 = vunpack.c.l.b16 %v5312
        %v5795 = vunpack.c.l.b16 %v5313
        %v5796 = vunpack.c.h.b16 %v5313
        %v5797 = vunpack.c.l.b16 %v5314
        %v5798 = vunpack.c.h.b16 %v5314
        %v5799 = vunpack.c.l.b16 %v5315
        %v5800 = vunpack.c.l.b16 %v5316
        %v5801 = vunpack.c.h.b16 %v5316
        %v5802 = vunpack.c.l.b16 %v5317
        %v5803 = vunpack.c.h.b16 %v5317
        %v5804 = vunpack.c.l.b16 %v5318
        %v5805 = vunpack.c.l.b16 %v5319
        %v5806 = vunpack.c.h.b16 %v5319
        %v5807 = vunpack.c.l.b16 %v5320
        %v5808 = vunpack.c.h.b16 %v5320
        %v5809 = vunpack.c.l.b16 %v5321
        %v5810 = vunpack.c.l.b16 %v5322
        %v5811 = vunpack.c.h.b16 %v5322
        %v5812 = vunpack.c.l.b16 %v5323
        %v5813 = vunpack.c.h.b16 %v5323
        %v5814 = vunpack.c.l.b16 %v5324
        %v5815 = vunpack.c.l.b16 %v5325
        %v5816 = vunpack.c.h.b16 %v5325
        %v5817 = vunpack.c.l.b16 %v5326
        %v5818 = vunpack.c.h.b16 %v5326
        %v5819 = vunpack.c.l.b16 %v5327
        %v5820 = vunpack.c.l.b16 %v5328
        %v5821 = vunpack.c.h.b16 %v5328
        %v5822 = vunpack.c.l.b16 %v5329
        %v5823 = vunpack.c.h.b16 %v5329
        %v5824 = vunpack.c.l.b16 %v5330
        %v5825 = vunpack.c.l.b16 %v5331
        %v5826 = vunpack.c.h.b16 %v5331
        %v5827 = vunpack.c.l.b16 %v5332
        %v5828 = vunpack.c.h.b16 %v5332
        %v5829 = vunpack.c.l.b16 %v5333
        %v5830 = vunpack.c.l.b16 %v5334
        %v5831 = vunpack.c.h.b16 %v5334
        %v5832 = vunpack.c.l.b16 %v5335
        %v5833 = vunpack.c.h.b16 %v5335
        %v5834 = vunpack.c.l.b16 %v5336
        %v5835 = vunpack.c.l.b16 %v5337
        %v5836 = vunpack.c.h.b16 %v5337
        %v5837 = vunpack.c.l.b16 %v5338
        %v5838 = vunpack.c.h.b16 %v5338
        %v5839 = vunpack.c.l.b16 %v5339
        %v5840 = vunpack.c.l.b16 %v5340
        %v5841 = vunpack.c.h.b16 %v5340
        %v5842 = vunpack.c.l.b16 %v5341
        %v5843 = vunpack.c.h.b16 %v5341
        %v5844 = vunpack.c.l.b16 %v5342
        %v5845 = vunpack.c.l.b16 %v5343
        %v5846 = vunpack.c.h.b16 %v5343
        %v5847 = vunpack.c.l.b16 %v5344
        %v5848 = vunpack.c.h.b16 %v5344
        %v5849 = vunpack.c.l.b16 %v5345
        %v5850 = vunpack.c.l.b16 %v5346
        %v5851 = vunpack.c.h.b16 %v5346
        %v5852 = vunpack.c.l.b16 %v5347
        %v5853 = vunpack.c.h.b16 %v5347
        %v5854 = vunpack.c.l.b16 %v5348
        %v5855 = vunpack.c.l.b16 %v5349
        %v5856 = vunpack.c.h.b16 %v5349
        %v5857 = vunpack.c.l.b16 %v5350
        %v5858 = vunpack.c.h.b16 %v5350
        %v5859 = vunpack.c.l.b16 %v5351
        %v5860 = vunpack.c.l.b16 %v5352
        %v5861 = vunpack.c.h.b16 %v5352
        %v5862 = vunpack.c.l.b16 %v5353
        %v5863 = vunpack.c.h.b16 %v5353
        %v5864 = vunpack.c.l.b16 %v5354
        %v5865 = vunpack.c.l.b16 %v5355
        %v5866 = vunpack.c.h.b16 %v5355
        %v5867 = vunpack.c.l.b16 %v5356
        %v5868 = vunpack.c.h.b16 %v5356
        %v5869 = vunpack.c.l.b16 %v5357
        %v5870 = vunpack.c.l.b16 %v5358
        %v5871 = vunpack.c.h.b16 %v5358
        %v5872 = vunpack.c.l.b16 %v5359
        %v5873 = vunpack.c.h.b16 %v5359
        %v5874 = vunpack.c.l.b16 %v5360
        %v5875 = vunpack.c.l.b16 %v5361
        %v5876 = vunpack.c.h.b16 %v5361
        %v5877 = vunpack.c.l.b16 %v5362
        %v5878 = vunpack.c.h.b16 %v5362
        %v5879 = vunpack.c.l.b16 %v5363
        %v5880 = vunpack.c.l.b16 %v5364
        %v5881 = vunpack.c.h.b16 %v5364
        %v5882 = vunpack.c.l.b16 %v5365
        %v5883 = vunpack.c.h.b16 %v5365
        %v5884 = vunpack.c.l.b16 %v5366
        %v5885 = vunpack.c.l.b16 %v5367
        %v5886 = vunpack.c.h.b16 %v5367
        %v5887 = vunpack.c.l.b16 %v5368
        %v5888 = vunpack.c.h.b16 %v5368
        %v5889 = vunpack.c.l.b16 %v5369
        %v5890 = vunpack.c.l.b16 %v5370
        %v5891 = vunpack.c.h.b16 %v5370
        %v5892 = vunpack.c.l.b16 %v5371
        %v5893 = vunpack.c.h.b16 %v5371
        %v5894 = vunpack.c.l.b16 %v5372
        %v5895 = vunpack.c.l.b16 %v5373
        %v5896 = vunpack.c.h.b16 %v5373
        %v5897 = vunpack.c.l.b16 %v5374
        %v5898 = vunpack.c.h.b16 %v5374
        %v5899 = vunpack.c.l.b16 %v5375
        %v5900 = vpack.c.b16 %v5585, %v5580
        %v5901 = vpack.c.b16 %v5586, %v5581
        %v5902 = vpack.c.b16 %v5587, %v5582
        %v5903 = vpack.c.b16 %v5588, %v5583
        %v5904 = vpack.c.b16 %v5589, %v5584
        %v5905 = vpack.c.b16 %v5595, %v5590
        %v5906 = vpack.c.b16 %v5596, %v5591
        %v5907 = vpack.c.b16 %v5597, %v5592
        %v5908 = vpack.c.b16 %v5598, %v5593
        %v5909 = vpack.c.b16 %v5599, %v5594
        %v5910 = vpack.c.b16 %v5605, %v5600
        %v5911 = vpack.c.b16 %v5606, %v5601
        %v5912 = vpack.c.b16 %v5607, %v5602
        %v5913 = vpack.c.b16 %v5608, %v5603
        %v5914 = vpack.c.b16 %v5609, %v5604
        %v5915 = vpack.c.b16 %v5615, %v5610
        %v5916 = vpack.c.b16 %v5616, %v5611
        %v5917 = vpack.c.b16 %v5617, %v5612
        %v5918 = vpack.c.b16 %v5618, %v5613
        %v5919 = vpack.c.b16 %v5619, %v5614
        %v5920 = vpack.c.b16 %v5625, %v5620
        %v5921 = vpack.c.b16 %v5626, %v5621
        %v5922 = vpack.c.b16 %v5627, %v5622
        %v5923 = vpack.c.b16 %v5628, %v5623
        %v5924 = vpack.c.b16 %v5629, %v5624
        %v5925 = vpack.c.b16 %v5635, %v5630
        %v5926 = vpack.c.b16 %v5636, %v5631
        %v5927 = vpack.c.b16 %v5637, %v5632
        %v5928 = vpack.c.b16 %v5638, %v5633
        %v5929 = vpack.c.b16 %v5639, %v5634
        %v5930 = vpack.c.b16 %v5645, %v5640
        %v5931 = vpack.c.b16 %v5646, %v5641
        %v5932 = vpack.c.b16 %v5647, %v5642
        %v5933 = vpack.c.b16 %v5648, %v5643
        %v5934 = vpack.c.b16 %v5649, %v5644
        %v5935 = vpack.c.b16 %v5655, %v5650
        %v5936 = vpack.c.b16 %v5656, %v5651
        %v5937 = vpack.c.b16 %v5657, %v5652
        %v5938 = vpack.c.b16 %v5658, %v5653
        %v5939 = vpack.c.b16 %v5659, %v5654
        %v5940 = vpack.c.b16 %v5665, %v5660
        %v5941 = vpack.c.b16 %v5666, %v5661
        %v5942 = vpack.c.b16 %v5667, %v5662
        %v5943 = vpack.c.b16 %v5668, %v5663
        %v5944 = vpack.c.b16 %v5669, %v5664
        %v5945 = vpack.c.b16 %v5675, %v5670
        %v5946 = vpack.c.b16 %v5676, %v5671
        %v5947 = vpack.c.b16 %v5677, %v5672
        %v5948 = vpack.c.b16 %v5678, %v5673
        %v5949 = vpack.c.b16 %v5679, %v5674
        %v5950 = vpack.c.b16 %v5685, %v5680
        %v5951 = vpack.c.b16 %v5686, %v5681
        %v5952 = vpack.c.b16 %v5687, %v5682
        %v5953 = vpack.c.b16 %v5688, %v5683
        %v5954 = vpack.c.b16 %v5689, %v5684
        %v5955 = vpack.c.b16 %v5695, %v5690
        %v5956 = vpack.c.b16 %v5696, %v5691
        %v5957 = vpack.c.b16 %v5697, %v5692
        %v5958 = vpack.c.b16 %v5698, %v5693
        %v5959 = vpack.c.b16 %v5699, %v5694
        %v5960 = vpack.c.b16 %v5705, %v5700
        %v5961 = vpack.c.b16 %v5706, %v5701
        %v5962 = vpack.c.b16 %v5707, %v5702
        %v5963 = vpack.c.b16 %v5708, %v5703
        %v5964 = vpack.c.b16 %v5709, %v5704
        %v5965 = vpack.c.b16 %v5715, %v5710
        %v5966 = vpack.c.b16 %v5716, %v5711
        %v5967 = vpack.c.b16 %v5717, %v5712
        %v5968 = vpack.c.b16 %v5718, %v5713
        %v5969 = vpack.c.b16 %v5719, %v5714
        %v5970 = vpack.c.b16 %v5725, %v5720
        %v5971 = vpack.c.b16 %v5726, %v5721
        %v5972 = vpack.c.b16 %v5727, %v5722
        %v5973 = vpack.c.b16 %v5728, %v5723
        %v5974 = vpack.c.b16 %v5729, %v5724
        %v5975 = vpack.c.b16 %v5735, %v5730
        %v5976 = vpack.c.b16 %v5736, %v5731
        %v5977 = vpack.c.b16 %v5737, %v5732
        %v5978 = vpack.c.b16 %v5738, %v5733
        %v5979 = vpack.c.b16 %v5739, %v5734
        %v5980 = vpack.c.b16 %v5745, %v5740
        %v5981 = vpack.c.b16 %v5746, %v5741
        %v5982 = vpack.c.b16 %v5747, %v5742
        %v5983 = vpack.c.b16 %v5748, %v5743
        %v5984 = vpack.c.b16 %v5749, %v5744
        %v5985 = vpack.c.b16 %v5755, %v5750
        %v5986 = vpack.c.b16 %v5756, %v5751
        %v5987 = vpack.c.b16 %v5757, %v5752
        %v5988 = vpack.c.b16 %v5758, %v5753
        %v5989 = vpack.c.b16 %v5759, %v5754
        %v5990 = vpack.c.b16 %v5765, %v5760
        %v5991 = vpack.c.b16 %v5766, %v5761
        %v5992 = vpack.c.b16 %v5767, %v5762
        %v5993 = vpack.c.b16 %v5768, %v5763
        %v5994 = vpack.c.b16 %v5769, %v5764
        %v5995 = vpack.c.b16 %v5775, %v5770
        %v5996 = vpack.c.b16 %v5776, %v5771
        %v5997 = vpack.c.b16 %v5777, %v5772
        %v5998 = vpack.c.b16 %v5778, %v5773
        %v5999 = vpack.c.b16 %v5779, %v5774
        %v6000 = vpack.c.b16 %v5785, %v5780
        %v6001 = vpack.c.b16 %v5786, %v5781
        %v6002 = vpack.c.b16 %v5787, %v5782
        %v6003 = vpack.c.b16 %v5788, %v5783
        %v6004 = vpack.c.b16 %v5789, %v5784
        %v6005 = vpack.c.b16 %v5795, %v5790
        %v6006 = vpack.c.b16 %v5796, %v5791
        %v6007 = vpack.c.b16 %v5797, %v5792
        %v6008 = vpack.c.b16 %v5798, %v5793
        %v6009 = vpack.c.b16 %v5799, %v5794
        %v6010 = vpack.c.b16 %v5805, %v5800
        %v6011 = vpack.c.b16 %v5806, %v5801
        %v6012 = vpack.c.b16 %v5807, %v5802
        %v6013 = vpack.c.b16 %v5808, %v5803
        %v6014 = vpack.c.b16 %v5809, %v5804
        %v6015 = vpack.c.b16 %v5815, %v5810
        %v6016 = vpack.c.b16 %v5816, %v5811
        %v6017 = vpack.c.b16 %v5817, %v5812
        %v6018 = vpack.c.b16 %v5818, %v5813
        %v6019 = vpack.c.b16 %v5819, %v5814
        %v6020 = vpack.c.b16 %v5825, %v5820
        %v6021 = vpack.c.b16 %v5826, %v5821
        %v6022 = vpack.c.b16 %v5827, %v5822
        %v6023 = vpack.c.b16 %v5828, %v5823
        %v6024 = vpack.c.b16 %v5829, %v5824
        %v6025 = vpack.c.b16 %v5835, %v5830
        %v6026 = vpack.c.b16 %v5836, %v5831
        %v6027 = vpack.c.b16 %v5837, %v5832
        %v6028 = vpack.c.b16 %v5838, %v5833
        %v6029 = vpack.c.b16 %v5839, %v5834
        %v6030 = vpack.c.b16 %v5845, %v5840
        %v6031 = vpack.c.b16 %v5846, %v5841
        %v6032 = vpack.c.b16 %v5847, %v5842
        %v6033 = vpack.c.b16 %v5848, %v5843
        %v6034 = vpack.c.b16 %v5849, %v5844
        %v6035 = vpack.c.b16 %v5855, %v5850
        %v6036 = vpack.c.b16 %v5856, %v5851
        %v6037 = vpack.c.b16 %v5857, %v5852
        %v6038 = vpack.c.b16 %v5858, %v5853
        %v6039 = vpack.c.b16 %v5859, %v5854
        %v6040 = vpack.c.b16 %v5865, %v5860
        %v6041 = vpack.c.b16 %v5866, %v5861
        %v6042 = vpack.c.b16 %v5867, %v5862
        %v6043 = vpack.c.b16 %v5868, %v5863
        %v6044 = vpack.c.b16 %v5869, %v5864
        %v6045 = vpack.c.b16 %v5875, %v5870
        %v6046 = vpack.c.b16 %v5876, %v5871
        %v6047 = vpack.c.b16 %v5877, %v5872
        %v6048 = vpack.c.b16 %v5878, %v5873
        %v6049 = vpack.c.b16 %v5879, %v5874
        %v6050 = vpack.c.b16 %v5885, %v5880
        %v6051 = vpack.c.b16 %v5886, %v5881
        %v6052 = vpack.c.b16 %v5887, %v5882
        %v6053 = vpack.c.b16 %v5888, %v5883
        %v6054 = vpack.c.b16 %v5889, %v5884
        %v6055 = vpack.c.b16 %v5895, %v5890
        %v6056 = vpack.c.b16 %v5896, %v5891
        %v6057 = vpack.c.b16 %v5897, %v5892
        %v6058 = vpack.c.b16 %v5898, %v5893
        %v6059 = vpack.c.b16 %v5899, %v5894
        %6220 = vmatpush.bf16.msra.mxu0 %v5935
        %6221 = vmatpush.bf16.msra.mxu0 %v5930
        %6222 = vmatpush.bf16.msra.mxu0 %v5925
        %6223 = vmatpush.bf16.msra.mxu0 %v5920
        %6224 = vmatpush.bf16.msra.mxu0 %v5915
        %6225 = vmatpush.bf16.msra.mxu0 %v5910
        %6226 = vmatpush.bf16.msra.mxu0 %v5905
        %6227 = vmatpush.bf16.msra.mxu0 %v5900
        %6228 = vmatmul.bf16.gmra.mxu0 %v5180
        %v6229 = vpop.f32.mrf.mxu0
        %v6230 = vadd.f32 %v5378, %v6229
        %v6231 = vpop.f32.mrf.mxu0
        %v6232 = vadd.f32 %v5378, %v6231
        %6233 = vdwg.mxu0
        %6234 = vmatpush.bf16.msra.mxu0 %v5975
        %6235 = vmatpush.bf16.msra.mxu0 %v5970
        %6236 = vmatpush.bf16.msra.mxu0 %v5965
        %6237 = vmatpush.bf16.msra.mxu0 %v5960
        %6238 = vmatpush.bf16.msra.mxu0 %v5955
        %6239 = vmatpush.bf16.msra.mxu0 %v5950
        %6240 = vmatpush.bf16.msra.mxu0 %v5945
        %6241 = vmatpush.bf16.msra.mxu0 %v5940
        %6242 = vmatmul.bf16.gmra.mxu0 %v5181
        %v6243 = vpop.f32.mrf.mxu0
        %v6244 = vadd.f32 %v6230, %v6243
        %v6245 = vpop.f32.mrf.mxu0
        %v6246 = vadd.f32 %v6232, %v6245
        %6247 = vdwg.mxu0
        %6248 = vmatpush.bf16.msra.mxu0 %v6015
        %6249 = vmatpush.bf16.msra.mxu0 %v6010
        %6250 = vmatpush.bf16.msra.mxu0 %v6005
        %6251 = vmatpush.bf16.msra.mxu0 %v6000
        %6252 = vmatpush.bf16.msra.mxu0 %v5995
        %6253 = vmatpush.bf16.msra.mxu0 %v5990
        %6254 = vmatpush.bf16.msra.mxu0 %v5985
        %6255 = vmatpush.bf16.msra.mxu0 %v5980
        %6256 = vmatmul.bf16.gmra.mxu0 %v5182
        %v6257 = vpop.f32.mrf.mxu0
        %v6258 = vadd.f32 %v6244, %v6257
        %v6259 = vpop.f32.mrf.mxu0
        %v6260 = vadd.f32 %v6246, %v6259
        %6261 = vdwg.mxu0
        %6262 = vmatpush.bf16.msra.mxu0 %v6055
        %6263 = vmatpush.bf16.msra.mxu0 %v6050
        %6264 = vmatpush.bf16.msra.mxu0 %v6045
        %6265 = vmatpush.bf16.msra.mxu0 %v6040
        %6266 = vmatpush.bf16.msra.mxu0 %v6035
        %6267 = vmatpush.bf16.msra.mxu0 %v6030
        %6268 = vmatpush.bf16.msra.mxu0 %v6025
        %6269 = vmatpush.bf16.msra.mxu0 %v6020
        %6270 = vmatmul.bf16.gmra.mxu0 %v5183
        %v6271 = vpop.f32.mrf.mxu0
        %v6272 = vadd.f32 %v6258, %v6271
        %v6273 = vpop.f32.mrf.mxu0
        %v6274 = vadd.f32 %v6260, %v6273
        %6275 = vdwg.mxu0
        %6276 = vmatpush.bf16.msra.mxu0 %v5936
        %6277 = vmatpush.bf16.msra.mxu0 %v5931
        %6278 = vmatpush.bf16.msra.mxu0 %v5926
        %6279 = vmatpush.bf16.msra.mxu0 %v5921
        %6280 = vmatpush.bf16.msra.mxu0 %v5916
        %6281 = vmatpush.bf16.msra.mxu0 %v5911
        %6282 = vmatpush.bf16.msra.mxu0 %v5906
        %6283 = vmatpush.bf16.msra.mxu0 %v5901
        %6284 = vmatmul.bf16.gmra.mxu0 %v5180
        %v6285 = vpop.f32.mrf.mxu0
        %v6286 = vadd.f32 %v5379, %v6285
        %v6287 = vpop.f32.mrf.mxu0
        %v6288 = vadd.f32 %v5379, %v6287
        %6289 = vdwg.mxu0
        %6290 = vmatpush.bf16.msra.mxu0 %v5976
        %6291 = vmatpush.bf16.msra.mxu0 %v5971
        %6292 = vmatpush.bf16.msra.mxu0 %v5966
        %6293 = vmatpush.bf16.msra.mxu0 %v5961
        %6294 = vmatpush.bf16.msra.mxu0 %v5956
        %6295 = vmatpush.bf16.msra.mxu0 %v5951
        %6296 = vmatpush.bf16.msra.mxu0 %v5946
        %6297 = vmatpush.bf16.msra.mxu0 %v5941
        %6298 = vmatmul.bf16.gmra.mxu0 %v5181
        %v6299 = vpop.f32.mrf.mxu0
        %v6300 = vadd.f32 %v6286, %v6299
        %v6301 = vpop.f32.mrf.mxu0
        %v6302 = vadd.f32 %v6288, %v6301
        %6303 = vdwg.mxu0
        %6304 = vmatpush.bf16.msra.mxu0 %v6016
        %6305 = vmatpush.bf16.msra.mxu0 %v6011
        %6306 = vmatpush.bf16.msra.mxu0 %v6006
        %6307 = vmatpush.bf16.msra.mxu0 %v6001
        %6308 = vmatpush.bf16.msra.mxu0 %v5996
        %6309 = vmatpush.bf16.msra.mxu0 %v5991
        %6310 = vmatpush.bf16.msra.mxu0 %v5986
        %6311 = vmatpush.bf16.msra.mxu0 %v5981
        %6312 = vmatmul.bf16.gmra.mxu0 %v5182
        %v6313 = vpop.f32.mrf.mxu0
        %v6314 = vadd.f32 %v6300, %v6313
        %v6315 = vpop.f32.mrf.mxu0
        %v6316 = vadd.f32 %v6302, %v6315
        %6317 = vdwg.mxu0
        %6318 = vmatpush.bf16.msra.mxu0 %v6056
        %6319 = vmatpush.bf16.msra.mxu0 %v6051
        %6320 = vmatpush.bf16.msra.mxu0 %v6046
        %6321 = vmatpush.bf16.msra.mxu0 %v6041
        %6322 = vmatpush.bf16.msra.mxu0 %v6036
        %6323 = vmatpush.bf16.msra.mxu0 %v6031
        %6324 = vmatpush.bf16.msra.mxu0 %v6026
        %6325 = vmatpush.bf16.msra.mxu0 %v6021
        %6326 = vmatmul.bf16.gmra.mxu0 %v5183
        %v6327 = vpop.f32.mrf.mxu0
        %v6328 = vadd.f32 %v6314, %v6327
        %v6329 = vpop.f32.mrf.mxu0
        %v6330 = vadd.f32 %v6316, %v6329
        %6331 = vdwg.mxu0
        %6332 = vmatpush.bf16.msra.mxu0 %v5937
        %6333 = vmatpush.bf16.msra.mxu0 %v5932
        %6334 = vmatpush.bf16.msra.mxu0 %v5927
        %6335 = vmatpush.bf16.msra.mxu0 %v5922
        %6336 = vmatpush.bf16.msra.mxu0 %v5917
        %6337 = vmatpush.bf16.msra.mxu0 %v5912
        %6338 = vmatpush.bf16.msra.mxu0 %v5907
        %6339 = vmatpush.bf16.msra.mxu0 %v5902
        %6340 = vmatmul.bf16.gmra.mxu0 %v5180
        %v6341 = vpop.f32.mrf.mxu0
        %v6342 = vadd.f32 %v5380, %v6341
        %v6343 = vpop.f32.mrf.mxu0
        %v6344 = vadd.f32 %v5380, %v6343
        %6345 = vdwg.mxu0
        %6346 = vmatpush.bf16.msra.mxu0 %v5977
        %6347 = vmatpush.bf16.msra.mxu0 %v5972
        %6348 = vmatpush.bf16.msra.mxu0 %v5967
        %6349 = vmatpush.bf16.msra.mxu0 %v5962
        %6350 = vmatpush.bf16.msra.mxu0 %v5957
        %6351 = vmatpush.bf16.msra.mxu0 %v5952
        %6352 = vmatpush.bf16.msra.mxu0 %v5947
        %6353 = vmatpush.bf16.msra.mxu0 %v5942
        %6354 = vmatmul.bf16.gmra.mxu0 %v5181
        %v6355 = vpop.f32.mrf.mxu0
        %v6356 = vadd.f32 %v6342, %v6355
        %v6357 = vpop.f32.mrf.mxu0
        %v6358 = vadd.f32 %v6344, %v6357
        %6359 = vdwg.mxu0
        %6360 = vmatpush.bf16.msra.mxu0 %v6017
        %6361 = vmatpush.bf16.msra.mxu0 %v6012
        %6362 = vmatpush.bf16.msra.mxu0 %v6007
        %6363 = vmatpush.bf16.msra.mxu0 %v6002
        %6364 = vmatpush.bf16.msra.mxu0 %v5997
        %6365 = vmatpush.bf16.msra.mxu0 %v5992
        %6366 = vmatpush.bf16.msra.mxu0 %v5987
        %6367 = vmatpush.bf16.msra.mxu0 %v5982
        %6368 = vmatmul.bf16.gmra.mxu0 %v5182
        %v6369 = vpop.f32.mrf.mxu0
        %v6370 = vadd.f32 %v6356, %v6369
        %v6371 = vpop.f32.mrf.mxu0
        %v6372 = vadd.f32 %v6358, %v6371
        %6373 = vdwg.mxu0
        %6374 = vmatpush.bf16.msra.mxu0 %v6057
        %6375 = vmatpush.bf16.msra.mxu0 %v6052
        %6376 = vmatpush.bf16.msra.mxu0 %v6047
        %6377 = vmatpush.bf16.msra.mxu0 %v6042
        %6378 = vmatpush.bf16.msra.mxu0 %v6037
        %6379 = vmatpush.bf16.msra.mxu0 %v6032
        %6380 = vmatpush.bf16.msra.mxu0 %v6027
        %6381 = vmatpush.bf16.msra.mxu0 %v6022
        %6382 = vmatmul.bf16.gmra.mxu0 %v5183
        %v6383 = vpop.f32.mrf.mxu0
        %v6384 = vadd.f32 %v6370, %v6383
        %v6385 = vpop.f32.mrf.mxu0
        %v6386 = vadd.f32 %v6372, %v6385
        %6387 = vdwg.mxu0
        %6388 = vmatpush.bf16.msra.mxu0 %v5938
        %6389 = vmatpush.bf16.msra.mxu0 %v5933
        %6390 = vmatpush.bf16.msra.mxu0 %v5928
        %6391 = vmatpush.bf16.msra.mxu0 %v5923
        %6392 = vmatpush.bf16.msra.mxu0 %v5918
        %6393 = vmatpush.bf16.msra.mxu0 %v5913
        %6394 = vmatpush.bf16.msra.mxu0 %v5908
        %6395 = vmatpush.bf16.msra.mxu0 %v5903
        %6396 = vmatmul.bf16.gmra.mxu0 %v5180
        %v6397 = vpop.f32.mrf.mxu0
        %v6398 = vadd.f32 %v5381, %v6397
        %v6399 = vpop.f32.mrf.mxu0
        %v6400 = vadd.f32 %v5381, %v6399
        %6401 = vdwg.mxu0
        %6402 = vmatpush.bf16.msra.mxu0 %v5978
        %6403 = vmatpush.bf16.msra.mxu0 %v5973
        %6404 = vmatpush.bf16.msra.mxu0 %v5968
        %6405 = vmatpush.bf16.msra.mxu0 %v5963
        %6406 = vmatpush.bf16.msra.mxu0 %v5958
        %6407 = vmatpush.bf16.msra.mxu0 %v5953
        %6408 = vmatpush.bf16.msra.mxu0 %v5948
        %6409 = vmatpush.bf16.msra.mxu0 %v5943
        %6410 = vmatmul.bf16.gmra.mxu0 %v5181
        %v6411 = vpop.f32.mrf.mxu0
        %v6412 = vadd.f32 %v6398, %v6411
        %v6413 = vpop.f32.mrf.mxu0
        %v6414 = vadd.f32 %v6400, %v6413
        %6415 = vdwg.mxu0
        %6416 = vmatpush.bf16.msra.mxu0 %v6018
        %6417 = vmatpush.bf16.msra.mxu0 %v6013
        %6418 = vmatpush.bf16.msra.mxu0 %v6008
        %6419 = vmatpush.bf16.msra.mxu0 %v6003
        %6420 = vmatpush.bf16.msra.mxu0 %v5998
        %6421 = vmatpush.bf16.msra.mxu0 %v5993
        %6422 = vmatpush.bf16.msra.mxu0 %v5988
        %6423 = vmatpush.bf16.msra.mxu0 %v5983
        %6424 = vmatmul.bf16.gmra.mxu0 %v5182
        %v6425 = vpop.f32.mrf.mxu0
        %v6426 = vadd.f32 %v6412, %v6425
        %v6427 = vpop.f32.mrf.mxu0
        %v6428 = vadd.f32 %v6414, %v6427
        %6429 = vdwg.mxu0
        %6430 = vmatpush.bf16.msra.mxu0 %v6058
        %6431 = vmatpush.bf16.msra.mxu0 %v6053
        %6432 = vmatpush.bf16.msra.mxu0 %v6048
        %6433 = vmatpush.bf16.msra.mxu0 %v6043
        %6434 = vmatpush.bf16.msra.mxu0 %v6038
        %6435 = vmatpush.bf16.msra.mxu0 %v6033
        %6436 = vmatpush.bf16.msra.mxu0 %v6028
        %6437 = vmatpush.bf16.msra.mxu0 %v6023
        %6438 = vmatmul.bf16.gmra.mxu0 %v5183
        %v6439 = vpop.f32.mrf.mxu0
        %v6440 = vadd.f32 %v6426, %v6439
        %v6441 = vpop.f32.mrf.mxu0
        %v6442 = vadd.f32 %v6428, %v6441
        %6443 = vdwg.mxu0
        %6444 = vmatpush.bf16.msra.mxu0 %v5939
        %6445 = vmatpush.bf16.msra.mxu0 %v5934
        %6446 = vmatpush.bf16.msra.mxu0 %v5929
        %6447 = vmatpush.bf16.msra.mxu0 %v5924
        %6448 = vmatpush.bf16.msra.mxu0 %v5919
        %6449 = vmatpush.bf16.msra.mxu0 %v5914
        %6450 = vmatpush.bf16.msra.mxu0 %v5909
        %6451 = vmatpush.bf16.msra.mxu0 %v5904
        %6452 = vmatmul.bf16.gmra.mxu0 %v5180
        %v6453 = vpop.f32.mrf.mxu0
        %v6454 = vadd.f32 %v5382, %v6453
        %v6455 = vpop.f32.mrf.mxu0
        %v6456 = vadd.f32 %v5382, %v6455
        %6457 = vdwg.mxu0
        %6458 = vmatpush.bf16.msra.mxu0 %v5979
        %6459 = vmatpush.bf16.msra.mxu0 %v5974
        %6460 = vmatpush.bf16.msra.mxu0 %v5969
        %6461 = vmatpush.bf16.msra.mxu0 %v5964
        %6462 = vmatpush.bf16.msra.mxu0 %v5959
        %6463 = vmatpush.bf16.msra.mxu0 %v5954
        %6464 = vmatpush.bf16.msra.mxu0 %v5949
        %6465 = vmatpush.bf16.msra.mxu0 %v5944
        %6466 = vmatmul.bf16.gmra.mxu0 %v5181
        %v6467 = vpop.f32.mrf.mxu0
        %v6468 = vadd.f32 %v6454, %v6467
        %v6469 = vpop.f32.mrf.mxu0
        %v6470 = vadd.f32 %v6456, %v6469
        %6471 = vdwg.mxu0
        %6472 = vmatpush.bf16.msra.mxu0 %v6019
        %6473 = vmatpush.bf16.msra.mxu0 %v6014
        %6474 = vmatpush.bf16.msra.mxu0 %v6009
        %6475 = vmatpush.bf16.msra.mxu0 %v6004
        %6476 = vmatpush.bf16.msra.mxu0 %v5999
        %6477 = vmatpush.bf16.msra.mxu0 %v5994
        %6478 = vmatpush.bf16.msra.mxu0 %v5989
        %6479 = vmatpush.bf16.msra.mxu0 %v5984
        %6480 = vmatmul.bf16.gmra.mxu0 %v5182
        %v6481 = vpop.f32.mrf.mxu0
        %v6482 = vadd.f32 %v6468, %v6481
        %v6483 = vpop.f32.mrf.mxu0
        %v6484 = vadd.f32 %v6470, %v6483
        %6485 = vdwg.mxu0
        %6486 = vmatpush.bf16.msra.mxu0 %v6059
        %6487 = vmatpush.bf16.msra.mxu0 %v6054
        %6488 = vmatpush.bf16.msra.mxu0 %v6049
        %6489 = vmatpush.bf16.msra.mxu0 %v6044
        %6490 = vmatpush.bf16.msra.mxu0 %v6039
        %6491 = vmatpush.bf16.msra.mxu0 %v6034
        %6492 = vmatpush.bf16.msra.mxu0 %v6029
        %6493 = vmatpush.bf16.msra.mxu0 %v6024
        %6494 = vmatmul.bf16.gmra.mxu0 %v5183
        %v6495 = vpop.f32.mrf.mxu0
        %v6496 = vadd.f32 %v6482, %v6495
        %v6497 = vpop.f32.mrf.mxu0
        %v6498 = vadd.f32 %v6484, %v6497
        %6499 = vdwg.mxu0
        %v6500 = vmax.f32 %v6272, 0.0
        %v6501 = vmax.f32 %v6328, 0.0
        %v6502 = vmax.f32 %v6384, 0.0
        %v6503 = vmax.f32 %v6440, 0.0
        %v6504 = vmax.f32 %v6496, 0.0
        %v6505 = vmax.f32 %v6274, 0.0
        %v6506 = vmax.f32 %v6330, 0.0
        %v6507 = vmax.f32 %v6386, 0.0
        %v6508 = vmax.f32 %v6442, 0.0
        %v6509 = vmax.f32 %v6498, 0.0
        %6510 = vst [vmem:[%s486] sm:$0xff] %v6500
        %6511 = vst [vmem:[%s486 + $0x8] sm:$0xff] %v6501
        %6512 = vst [vmem:[%s486 + $0x10] sm:$0xff] %v6502
        %6513 = vst [vmem:[%s486 + $0x18] sm:$0xff] %v6503
        %6514 = vst [vmem:[%s486 + $0x20] sm:$0xff] %v6504
        %6515 = vst [vmem:[%s486 + $0x28] sm:$0xff] %v6505
        %6516 = vst [vmem:[%s486 + $0x30] sm:$0xff] %v6506
        %6517 = vst [vmem:[%s486 + $0x38] sm:$0xff] %v6507
        %6518 = vst [vmem:[%s486 + $0x40] sm:$0xff] %v6508
        %6519 = vst [vmem:[%s486 + $0x48] sm:$0xff] %v6509
        %s6520 = sand.u32 %s284, 1
        %s6521 = scalar_lea.sflag [#allocation4], %s6520
        %s6522 = sand.u32 %s284, 1
        %s6523 = smul.addr %s6522, 80
        %s6524 = scalar_lea.vmem [#allocation10], %s6523
        // Predicated region
        $region81: #{tpu_custom_call.1} parent=63 // pred_check
          %p6525 = pneg %p294
        $region82: #{tpu_custom_call.1} parent=63 // pred_check_branch
          %6527 = sbr.rel (%p6525) target = $region84
        $region83: #{tpu_custom_call.1} parent=63 // pred_region
          %6529 = vsyncadd %s6521, 0
          %s6530 = smul.addr %s30, 10
          %s6531 = smul.addr %s6530, 8
          %s6532 = scalar_lea.hbm %s11, %s6531
          %s6533 = sshll.u32 %s6524, 4
          %s6534 = int_to_ptr.vmem [resolvable:$true] %s6533
          %s6535 = sshll.u32 %s6532, 4
          %s6536 = int_to_ptr.hbm [resolvable:$true] %s6535
          %6541 = dma.vmem_to_hbm [thread:$0]  %s6534, 1280, %s6536, %s6521, 640, 640, 40
        $region84: #{tpu_custom_call.1} parent=63 // pred_fallthru
          _
      $region64: #{tpu_custom_call.1} parent=5 // pred_fallthru
        _
      %p6542 = scmp.le.s32.totalorder 2, %s25
      // Predicated region
      $region85: #{tpu_custom_call.1} parent=5 // pred_check
        %p6543 = pneg %p6542
      $region86: #{tpu_custom_call.1} parent=5 // pred_check_branch
        %6545 = sbr.rel (%p6543) target = $region88
      $region87: #{tpu_custom_call.1} parent=5 // pred_region
        %s6546 = ssub.s32 %s25, 2
        // Predicated region
        $region89: #{tpu_custom_call.1} parent=87 // pred_check
          %p6547 = pneg %p300
        $region90: #{tpu_custom_call.1} parent=87 // pred_check_branch
          %6549 = sbr.rel (%p6547) target = $region92
        $region91: #{tpu_custom_call.1} parent=87 // pred_region
          %s6550 = sand.u32 %s285, 1
          %s6551 = scalar_lea.sflag [#allocation4], %s6550
          %s6552 = sand.u32 %s285, 1
          %s6553 = smul.addr %s6552, 80
          %s6554 = scalar_lea.vmem [#allocation10], %s6553
          %6556 = dma.done %s6551, 1280
        $region92: #{tpu_custom_call.1} parent=87 // pred_fallthru
          _
      $region88: #{tpu_custom_call.1} parent=5 // pred_fallthru
        _
    $region6: #{tpu_custom_call.1} parent=1 // loop_footer
      %s29 = sadd.s32 1, %s25
    $region7: #{tpu_custom_call.1} parent=1 // loop_footer_branch
      %24 = sbr.rel target = $region3
    $region8: #{tpu_custom_call.1} parent=1 // loop_exit
      _
    %6557 = vsyncpa [#allocation3], 1
    %s6558 = scalar_lea.sflag [#allocation3], 1
    %6559 = vsyncpa %s6558, 1
    %6560 = vsyncpa [#allocation6], 1
    %6561 = vsyncpa [#allocation9], 1
    %6562 = vsyncpa [#allocation4], 1
    %s6563 = scalar_lea.sflag [#allocation4], 1
    %6564 = vsyncpa %s6563, 1

</llo_original>
